<compile_context>
chip_gen: v5e
topology: v5e:2x2
jax: 0.10.0
libtpu: 0.0.40
codegen_flags: <defaults>
</compile_context>

<pallas_src>
import math
import numpy as np
import jax
import jax.numpy as jnp
from jax.experimental import pallas as pl
from jax.experimental.pallas import tpu as pltpu

D_MODEL = 50
HEADS = 2
N_LAYERS = 6
D_FF = 2048
D_K = D_MODEL // HEADS
EPS = 1e-6
NEG_INF = -1000000000.0


def _norm(x, alpha, bias):
    # torch Norm: alpha * (x - mean) / (std + eps) + bias  with UNBIASED std (n-1)
    mean = jnp.mean(x, axis=-1, keepdims=True)
    var = jnp.sum((x - mean) ** 2, axis=-1, keepdims=True) / (x.shape[-1] - 1)
    std = jnp.sqrt(var)
    return alpha * (x - mean) / (std + EPS) + bias


def fused_encoder_kernel(x0_ref, mask_ref,
                         n1a_ref, n1b_ref,
                         wq_ref, bq_ref, wk_ref, bk_ref, wv_ref, bv_ref,
                         wo_ref, bo_ref,
                         n2a_ref, n2b_ref,
                         w1_ref, b1_ref, w2_ref, b2_ref,
                         fa_ref, fb_ref,
                         out_ref,
                         x_sc):
    """One grid step == one encoder layer; x_sc carries (B*S, D) activations."""
    l = pl.program_id(0)
    B, S, D = x0_ref.shape
    NROWS = B * S

    # Load the (PE-applied) input into the resident scratch at layer 0.
    @pl.when(l == 0)
    def _():
        x_sc[...] = x0_ref[...].reshape(NROWS, D)

    x = x_sc[...]                     # (B*S, D)
    add_mask = mask_ref[...]          # (B, S, S) additive mask: 0 keep / -1e9 masked

    # ---- sublayer 1: x = x + attn(norm_1(x)) ----
    x2 = _norm(x, n1a_ref[0], n1b_ref[0])
    scale = 1.0 / math.sqrt(D_K)
    attn = jnp.zeros((NROWS, D), jnp.float32)
    for h in range(HEADS):            # static loop; weights pre-split per head
        qh = (jnp.dot(x2, wq_ref[0, h], preferred_element_type=jnp.float32)
              + bq_ref[0, h]).reshape(B, S, D_K)
        kh = (jnp.dot(x2, wk_ref[0, h], preferred_element_type=jnp.float32)
              + bk_ref[0, h]).reshape(B, S, D_K)
        vh = (jnp.dot(x2, wv_ref[0, h], preferred_element_type=jnp.float32)
              + bv_ref[0, h]).reshape(B, S, D_K)
        scores = jnp.einsum('bqd,bkd->bqk', qh, kh,
                            preferred_element_type=jnp.float32) * scale + add_mask
        m = jnp.max(scores, axis=-1, keepdims=True)
        e = jnp.exp(scores - m)
        p = e * pl.reciprocal(jnp.sum(e, axis=-1, keepdims=True), approx=True)
        ho = jnp.einsum('bqk,bkd->bqd', p, vh,
                        preferred_element_type=jnp.float32).reshape(NROWS, D_K)
        # output projection: sum_h head_h @ wo_h  ==  concat(heads) @ wo
        attn = attn + jnp.dot(ho, wo_ref[0, h], preferred_element_type=jnp.float32)
    x = x + attn + bo_ref[0]          # dropout_1 == identity (eval)

    # ---- sublayer 2: x = x + ff(norm_2(x)) ----
    x2 = _norm(x, n2a_ref[0], n2b_ref[0])
    h1 = jnp.maximum(
        jnp.dot(x2, w1_ref[0], preferred_element_type=jnp.float32) + b1_ref[0], 0.0)
    x = x + jnp.dot(h1, w2_ref[0], preferred_element_type=jnp.float32) + b2_ref[0]
    # dropout_2 == identity (eval)

    x_sc[...] = x

    # ---- epilogue at last layer: final Norm + torch.sum(e_outputs, dim=0) ----
    @pl.when(l == pl.num_programs(0) - 1)
    def _():
        normed = _norm(x, fa_ref[...], fb_ref[...])
        out_ref[...] = jnp.sum(normed.reshape(B, S, D), axis=0)


def _layer_spec(arr):
    """BlockSpec streaming one layer's slab per grid step (leading L axis)."""
    block = (1,) + tuple(arr.shape[1:])
    nrest = arr.ndim - 1
    return pl.BlockSpec(block, lambda l, _n=nrest: (l,) + (0,) * _n)


def _const_spec(arr):
    """Full-array block, constant across the layer axis."""
    nd = arr.ndim
    return pl.BlockSpec(tuple(arr.shape), lambda l, _n=nd: (0,) * _n)


def transformer_forward(src, src_mask, params):
    B, S, D = src.shape
    # PositionalEncoder (elementwise glue, host side): x = src*sqrt(d_model) + pe[:S]
    x0 = (src * math.sqrt(D_MODEL) + params["pe"][:S][None, :, :]).astype(jnp.float32)
    # Additive mask, computed once and reused by all heads / layers.
    add_mask = jnp.broadcast_to(
        jnp.where(src_mask == 0.0, NEG_INF, 0.0).astype(jnp.float32), (B, S, S))

    st = params["stacked"]
    layer_args = [st[k] for k in ("n1a", "n1b", "wq", "bq", "wk", "bk", "wv", "bv",
                                  "wo", "bo", "n2a", "n2b", "w1", "b1", "w2", "b2")]
    in_specs = ([_const_spec(x0), _const_spec(add_mask)]
                + [_layer_spec(a) for a in layer_args]
                + [_const_spec(params["final_alpha"]), _const_spec(params["final_bias"])])

    return pl.pallas_call(
        fused_encoder_kernel,
        out_shape=jax.ShapeDtypeStruct((S, D), jnp.float32),
        grid_spec=pltpu.PrefetchScalarGridSpec(
            num_scalar_prefetch=0,
            grid=(N_LAYERS,),
            in_specs=in_specs,
            out_specs=pl.BlockSpec((S, D), lambda l: (0, 0)),
            scratch_shapes=[pltpu.VMEM((B * S, D), jnp.float32)],
        ),
        # Layer axis carries the activation -> must stay sequential ("arbitrary").
        compiler_params=pltpu.CompilerParams(dimension_semantics=("arbitrary",)),
    )(x0, add_mask, *layer_args, params["final_alpha"], params["final_bias"])


def make_positional_encoding(max_seq_len=80, d_model=D_MODEL):
    # Matches the reference PE formula exactly (10000 ** (i / d_model) for both terms).
    pe = np.zeros((max_seq_len, d_model), dtype=np.float32)
    for pos in range(max_seq_len):
        for i in range(0, d_model, 2):
            pe[pos, i] = math.sin(pos / 10000 ** (i / d_model))
            pe[pos, i + 1] = math.cos(pos / 10000 ** (i / d_model))
    return jnp.asarray(pe)


def init_params(key):
    params = {"pe": make_positional_encoding()}
    keys = jax.random.split(key, N_LAYERS * 10)

    def nrm(k, shape, scale=0.05):
        return (scale * jax.random.normal(k, shape)).astype(jnp.float32)

    acc = {name: [] for name in ("n1a", "n1b", "wq", "bq", "wk", "bk", "wv", "bv",
                                 "wo", "bo", "n2a", "n2b", "w1", "b1", "w2", "b2")}
    ki = 0
    for _ in range(N_LAYERS):
        acc["n1a"].append(jnp.ones((1, D_MODEL), jnp.float32))
        acc["n1b"].append(jnp.zeros((1, D_MODEL), jnp.float32))
        acc["n2a"].append(jnp.ones((1, D_MODEL), jnp.float32))
        acc["n2b"].append(jnp.zeros((1, D_MODEL), jnp.float32))

        wq_f = nrm(keys[ki + 0], (D_MODEL, D_MODEL)); bq_f = nrm(keys[ki + 1], (D_MODEL,))
        wk_f = nrm(keys[ki + 2], (D_MODEL, D_MODEL)); bk_f = nrm(keys[ki + 3], (D_MODEL,))
        wv_f = nrm(keys[ki + 4], (D_MODEL, D_MODEL)); bv_f = nrm(keys[ki + 5], (D_MODEL,))
        wo_f = nrm(keys[ki + 6], (D_MODEL, D_MODEL)); bo_f = nrm(keys[ki + 7], (D_MODEL,))

        # Pre-split per head on the host so the kernel never slices at the
        # unaligned D_K=25 lane offset.  Head h == columns [h*D_K:(h+1)*D_K]
        # of the projection output (matches torch .view(bs,-1,h,d_k)).
        acc["wq"].append(jnp.stack([wq_f[:, h * D_K:(h + 1) * D_K] for h in range(HEADS)]))
        acc["bq"].append(jnp.stack([bq_f[h * D_K:(h + 1) * D_K][None, :] for h in range(HEADS)]))
        acc["wk"].append(jnp.stack([wk_f[:, h * D_K:(h + 1) * D_K] for h in range(HEADS)]))
        acc["bk"].append(jnp.stack([bk_f[h * D_K:(h + 1) * D_K][None, :] for h in range(HEADS)]))
        acc["wv"].append(jnp.stack([wv_f[:, h * D_K:(h + 1) * D_K] for h in range(HEADS)]))
        acc["bv"].append(jnp.stack([bv_f[h * D_K:(h + 1) * D_K][None, :] for h in range(HEADS)]))
        # Output projection split over its input rows: concat @ wo == sum_h head_h @ wo_h
        acc["wo"].append(jnp.stack([wo_f[h * D_K:(h + 1) * D_K, :] for h in range(HEADS)]))
        acc["bo"].append(bo_f[None, :])

        acc["w1"].append(nrm(keys[ki + 8], (D_MODEL, D_FF), 0.02))
        acc["b1"].append(jnp.zeros((1, D_FF), jnp.float32))
        acc["w2"].append(nrm(keys[ki + 9], (D_FF, D_MODEL), 0.02))
        acc["b2"].append(jnp.zeros((1, D_MODEL), jnp.float32))
        ki += 10

    params["stacked"] = {k: jnp.stack(v) for k, v in acc.items()}
    params["final_alpha"] = jnp.ones((1, D_MODEL), jnp.float32)
    params["final_bias"] = jnp.zeros((1, D_MODEL), jnp.float32)
    return params


if __name__ == "__main__":
    # TODO(synk): dropout is stochastic (train mode in the reference); modeled as identity (eval).
    key = jax.random.PRNGKey(0)
    k_src, k_par = jax.random.split(key)

    B, S = 2, 8
    src = jax.random.normal(k_src, (B, S, D_MODEL), dtype=jnp.float32)
    mask_np = np.ones((B, 1, S), dtype=np.float32)
    mask_np[1, 0, 6:] = 0.0        # mask last two positions of second sequence
    src_mask = jnp.asarray(mask_np)

    params = init_params(k_par)
    out = transformer_forward(src, src_mask, params)
    out = jax.block_until_ready(out)
    assert out.shape == (S, D_MODEL) and out.dtype == jnp.float32
    assert bool(jnp.all(jnp.isfinite(out)))
    print("KERNEL_OK")
</pallas_src>

<mosaic_0001>
module attributes {stable_mosaic.version = 11 : i64} {
  func.func @fused_encoder_kernel(%arg0: i32, %arg1: memref<2x8x50xf32, #tpu.memory_space<vmem>>, %arg2: memref<2x8x8xf32, #tpu.memory_space<vmem>>, %arg3: memref<1x1x50xf32, #tpu.memory_space<vmem>>, %arg4: memref<1x1x50xf32, #tpu.memory_space<vmem>>, %arg5: memref<1x2x50x25xf32, #tpu.memory_space<vmem>>, %arg6: memref<1x2x1x25xf32, #tpu.memory_space<vmem>>, %arg7: memref<1x2x50x25xf32, #tpu.memory_space<vmem>>, %arg8: memref<1x2x1x25xf32, #tpu.memory_space<vmem>>, %arg9: memref<1x2x50x25xf32, #tpu.memory_space<vmem>>, %arg10: memref<1x2x1x25xf32, #tpu.memory_space<vmem>>, %arg11: memref<1x2x25x50xf32, #tpu.memory_space<vmem>>, %arg12: memref<1x1x50xf32, #tpu.memory_space<vmem>>, %arg13: memref<1x1x50xf32, #tpu.memory_space<vmem>>, %arg14: memref<1x1x50xf32, #tpu.memory_space<vmem>>, %arg15: memref<1x50x2048xf32, #tpu.memory_space<vmem>>, %arg16: memref<1x1x2048xf32, #tpu.memory_space<vmem>>, %arg17: memref<1x2048x50xf32, #tpu.memory_space<vmem>>, %arg18: memref<1x1x50xf32, #tpu.memory_space<vmem>>, %arg19: memref<1x50xf32, #tpu.memory_space<vmem>>, %arg20: memref<1x50xf32, #tpu.memory_space<vmem>>, %arg21: memref<8x50xf32, #tpu.memory_space<vmem>>, %arg22: memref<16x50xf32, #tpu.memory_space<vmem>>) attributes {dimension_semantics = [#tpu.dimension_semantics<arbitrary>], iteration_bounds = array<i64: 6>, scalar_prefetch = 0 : i64, scratch_operands = 1 : i64, tpu.core_type = #tpu.core_type<tc>, window_params = [{pipeline_mode = #tpu.pipeline_mode<synchronous>, transform_indices = @transform_0, window_bounds = array<i64: 2, 8, 50>}, {pipeline_mode = #tpu.pipeline_mode<synchronous>, transform_indices = @transform_1, window_bounds = array<i64: 2, 8, 8>}, {transform_indices = @transform_2, window_bounds = array<i64: 1, 1, 50>}, {transform_indices = @transform_3, window_bounds = array<i64: 1, 1, 50>}, {transform_indices = @transform_4, window_bounds = array<i64: 1, 2, 50, 25>}, {transform_indices = @transform_5, window_bounds = array<i64: 1, 2, 1, 25>}, {transform_indices = @transform_6, window_bounds = array<i64: 1, 2, 50, 25>}, {transform_indices = @transform_7, window_bounds = array<i64: 1, 2, 1, 25>}, {transform_indices = @transform_8, window_bounds = array<i64: 1, 2, 50, 25>}, {transform_indices = @transform_9, window_bounds = array<i64: 1, 2, 1, 25>}, {transform_indices = @transform_10, window_bounds = array<i64: 1, 2, 25, 50>}, {transform_indices = @transform_11, window_bounds = array<i64: 1, 1, 50>}, {transform_indices = @transform_12, window_bounds = array<i64: 1, 1, 50>}, {transform_indices = @transform_13, window_bounds = array<i64: 1, 1, 50>}, {transform_indices = @transform_14, window_bounds = array<i64: 1, 50, 2048>}, {transform_indices = @transform_15, window_bounds = array<i64: 1, 1, 2048>}, {transform_indices = @transform_16, window_bounds = array<i64: 1, 2048, 50>}, {transform_indices = @transform_17, window_bounds = array<i64: 1, 1, 50>}, {pipeline_mode = #tpu.pipeline_mode<synchronous>, transform_indices = @transform_18, window_bounds = array<i64: 1, 50>}, {pipeline_mode = #tpu.pipeline_mode<synchronous>, transform_indices = @transform_19, window_bounds = array<i64: 1, 50>}, {pipeline_mode = #tpu.pipeline_mode<synchronous>, transform_indices = @transform_20, window_bounds = array<i64: 8, 50>}]} {
    %c0_i32 = arith.constant 0 : i32
    %0 = arith.cmpi eq, %arg0, %c0_i32 : i32
    %1 = arith.extui %0 : i1 to i32
    %c0_i32_0 = arith.constant 0 : i32
    %2 = arith.cmpi ne, %1, %c0_i32_0 : i32
    scf.if %2 {
      %c0_121 = arith.constant 0 : index
      %c0_122 = arith.constant 0 : index
      %c0_123 = arith.constant 0 : index
      %172 = vector.load %arg1[%c0_121, %c0_122, %c0_123] : memref<2x8x50xf32, #tpu.memory_space<vmem>>, vector<2x8x50xf32>
      %173 = vector.shape_cast %172 : vector<2x8x50xf32> to vector<16x50xf32>
      %c0_124 = arith.constant 0 : index
      %c0_125 = arith.constant 0 : index
      %174 = vector.load %arg22[%c0_124, %c0_125] : memref<16x50xf32, #tpu.memory_space<vmem>>, vector<16x50xf32>
      tpu.vector_store %arg22[%c0_124, %c0_125], %173 {strides = array<i32>} : memref<16x50xf32, #tpu.memory_space<vmem>>, vector<16x50xf32>,
    } else {
    }
    %c0 = arith.constant 0 : index
    %c0_1 = arith.constant 0 : index
    %3 = vector.load %arg22[%c0, %c0_1] : memref<16x50xf32, #tpu.memory_space<vmem>>, vector<16x50xf32>
    %c0_2 = arith.constant 0 : index
    %c0_3 = arith.constant 0 : index
    %c0_4 = arith.constant 0 : index
    %4 = vector.load %arg2[%c0_2, %c0_3, %c0_4] : memref<2x8x8xf32, #tpu.memory_space<vmem>>, vector<2x8x8xf32>
    %c0_5 = arith.constant 0 : index
    %c0_6 = arith.constant 0 : index
    %c0_7 = arith.constant 0 : index
    %5 = vector.load %arg3[%c0_5, %c0_6, %c0_7] : memref<1x1x50xf32, #tpu.memory_space<vmem>>, vector<1x1x50xf32>
    %6 = vector.shape_cast %5 : vector<1x1x50xf32> to vector<1x50xf32>
    %c0_8 = arith.constant 0 : index
    %c0_9 = arith.constant 0 : index
    %c0_10 = arith.constant 0 : index
    %7 = vector.load %arg4[%c0_8, %c0_9, %c0_10] : memref<1x1x50xf32, #tpu.memory_space<vmem>>, vector<1x1x50xf32>
    %8 = vector.shape_cast %7 : vector<1x1x50xf32> to vector<1x50xf32>
    %cst = arith.constant dense<0.000000e+00> : vector<16xf32>
    %9 = vector.multi_reduction <add>, %3, %cst [1] : vector<16x50xf32> to vector<16xf32>
    %10 = vector.shape_cast %9 : vector<16xf32> to vector<16x1xf32>
    %cst_11 = arith.constant 5.000000e+01 : f32
    %11 = vector.broadcast %cst_11 : f32 to vector<16x1xf32>
    %12 = arith.divf %10, %11 : vector<16x1xf32>
    %13 = vector.broadcast %12 : vector<16x1xf32> to vector<16x50xf32>
    %14 = arith.subf %3, %13 : vector<16x50xf32>
    %15 = arith.mulf %14, %14 : vector<16x50xf32>
    %cst_12 = arith.constant dense<0.000000e+00> : vector<16xf32>
    %16 = vector.multi_reduction <add>, %15, %cst_12 [1] : vector<16x50xf32> to vector<16xf32>
    %17 = vector.shape_cast %16 : vector<16xf32> to vector<16x1xf32>
    %cst_13 = arith.constant 4.900000e+01 : f32
    %18 = vector.broadcast %cst_13 : f32 to vector<16x1xf32>
    %19 = arith.divf %17, %18 : vector<16x1xf32>
    %20 = math.sqrt %19 : vector<16x1xf32>
    %21 = vector.broadcast %12 : vector<16x1xf32> to vector<16x50xf32>
    %22 = arith.subf %3, %21 : vector<16x50xf32>
    %23 = vector.broadcast %6 : vector<1x50xf32> to vector<16x50xf32>
    %24 = arith.mulf %23, %22 : vector<16x50xf32>
    %cst_14 = arith.constant 9.99999997E-7 : f32
    %25 = vector.broadcast %cst_14 : f32 to vector<16x1xf32>
    %26 = arith.addf %20, %25 : vector<16x1xf32>
    %27 = vector.broadcast %26 : vector<16x1xf32> to vector<16x50xf32>
    %28 = arith.divf %24, %27 : vector<16x50xf32>
    %29 = vector.broadcast %8 : vector<1x50xf32> to vector<16x50xf32>
    %30 = arith.addf %28, %29 : vector<16x50xf32>
    %cst_15 = arith.constant 0.000000e+00 : f32
    %31 = vector.broadcast %cst_15 : f32 to vector<16x50xf32>
    %c0_16 = arith.constant 0 : index
    %c0_17 = arith.constant 0 : index
    %c0_18 = arith.constant 0 : index
    %c0_19 = arith.constant 0 : index
    %32 = vector.load %arg5[%c0_16, %c0_17, %c0_18, %c0_19] : memref<1x2x50x25xf32, #tpu.memory_space<vmem>>, vector<1x1x50x25xf32>
    %33 = vector.shape_cast %32 : vector<1x1x50x25xf32> to vector<50x25xf32>
    %cst_20 = arith.constant dense<0.000000e+00> : vector<16x25xf32>
    %34 = tpu.matmul %30, %33, %cst_20 {dimension_numbers = #tpu.dot_dimension_numbers<[1], [0], [0], [1], [0, 0, 1, 1], [], []>} : vector<16x50xf32>, vector<50x25xf32>, vector<16x25xf32> -> vector<16x25xf32>
    %c0_21 = arith.constant 0 : index
    %c0_22 = arith.constant 0 : index
    %c0_23 = arith.constant 0 : index
    %c0_24 = arith.constant 0 : index
    %35 = vector.load %arg6[%c0_21, %c0_22, %c0_23, %c0_24] : memref<1x2x1x25xf32, #tpu.memory_space<vmem>>, vector<1x1x1x25xf32>
    %36 = vector.shape_cast %35 : vector<1x1x1x25xf32> to vector<1x25xf32>
    %37 = vector.broadcast %36 : vector<1x25xf32> to vector<16x25xf32>
    %38 = arith.addf %34, %37 : vector<16x25xf32>
    %39 = vector.shape_cast %38 : vector<16x25xf32> to vector<2x8x25xf32>
    %c0_25 = arith.constant 0 : index
    %c0_26 = arith.constant 0 : index
    %c0_27 = arith.constant 0 : index
    %c0_28 = arith.constant 0 : index
    %40 = vector.load %arg7[%c0_25, %c0_26, %c0_27, %c0_28] : memref<1x2x50x25xf32, #tpu.memory_space<vmem>>, vector<1x1x50x25xf32>
    %41 = vector.shape_cast %40 : vector<1x1x50x25xf32> to vector<50x25xf32>
    %cst_29 = arith.constant dense<0.000000e+00> : vector<16x25xf32>
    %42 = tpu.matmul %30, %41, %cst_29 {dimension_numbers = #tpu.dot_dimension_numbers<[1], [0], [0], [1], [0, 0, 1, 1], [], []>} : vector<16x50xf32>, vector<50x25xf32>, vector<16x25xf32> -> vector<16x25xf32>
    %c0_30 = arith.constant 0 : index
    %c0_31 = arith.constant 0 : index
    %c0_32 = arith.constant 0 : index
    %c0_33 = arith.constant 0 : index
    %43 = vector.load %arg8[%c0_30, %c0_31, %c0_32, %c0_33] : memref<1x2x1x25xf32, #tpu.memory_space<vmem>>, vector<1x1x1x25xf32>
    %44 = vector.shape_cast %43 : vector<1x1x1x25xf32> to vector<1x25xf32>
    %45 = vector.broadcast %44 : vector<1x25xf32> to vector<16x25xf32>
    %46 = arith.addf %42, %45 : vector<16x25xf32>
    %47 = vector.shape_cast %46 : vector<16x25xf32> to vector<2x8x25xf32>
    %c0_34 = arith.constant 0 : index
    %c0_35 = arith.constant 0 : index
    %c0_36 = arith.constant 0 : index
    %c0_37 = arith.constant 0 : index
    %48 = vector.load %arg9[%c0_34, %c0_35, %c0_36, %c0_37] : memref<1x2x50x25xf32, #tpu.memory_space<vmem>>, vector<1x1x50x25xf32>
    %49 = vector.shape_cast %48 : vector<1x1x50x25xf32> to vector<50x25xf32>
    %cst_38 = arith.constant dense<0.000000e+00> : vector<16x25xf32>
    %50 = tpu.matmul %30, %49, %cst_38 {dimension_numbers = #tpu.dot_dimension_numbers<[1], [0], [0], [1], [0, 0, 1, 1], [], []>} : vector<16x50xf32>, vector<50x25xf32>, vector<16x25xf32> -> vector<16x25xf32>
    %c0_39 = arith.constant 0 : index
    %c0_40 = arith.constant 0 : index
    %c0_41 = arith.constant 0 : index
    %c0_42 = arith.constant 0 : index
    %51 = vector.load %arg10[%c0_39, %c0_40, %c0_41, %c0_42] : memref<1x2x1x25xf32, #tpu.memory_space<vmem>>, vector<1x1x1x25xf32>
    %52 = vector.shape_cast %51 : vector<1x1x1x25xf32> to vector<1x25xf32>
    %53 = vector.broadcast %52 : vector<1x25xf32> to vector<16x25xf32>
    %54 = arith.addf %50, %53 : vector<16x25xf32>
    %55 = vector.shape_cast %54 : vector<16x25xf32> to vector<2x8x25xf32>
    "tpu.trace_start"() <{level = 10 : i32, message = "bqd,bkd->bqk"}> : () -> ()
    %cst_43 = arith.constant dense<0.000000e+00> : vector<2x8x8xf32>
    %56 = tpu.matmul %39, %47, %cst_43 {dimension_numbers = #tpu.dot_dimension_numbers<[2], [2], [1], [1], [0, 0, 0, 1, 1, 1], [0], [0]>} : vector<2x8x25xf32>, vector<2x8x25xf32>, vector<2x8x8xf32> -> vector<2x8x8xf32>
    "tpu.trace_stop"() : () -> ()
    %cst_44 = arith.constant 2.000000e-01 : f32
    %57 = vector.broadcast %cst_44 : f32 to vector<2x8x8xf32>
    %58 = arith.mulf %56, %57 : vector<2x8x8xf32>
    %59 = arith.addf %58, %4 : vector<2x8x8xf32>
    %cst_45 = arith.constant dense<0xFF800000> : vector<2x8xf32>
    %60 = vector.multi_reduction <maximumf>, %59, %cst_45 [2] : vector<2x8x8xf32> to vector<2x8xf32>
    %61 = vector.shape_cast %60 : vector<2x8xf32> to vector<2x8x1xf32>
    %62 = vector.broadcast %61 : vector<2x8x1xf32> to vector<2x8x8xf32>
    %63 = arith.subf %59, %62 : vector<2x8x8xf32>
    %64 = math.exp %63 : vector<2x8x8xf32>
    %cst_46 = arith.constant dense<0.000000e+00> : vector<2x8xf32>
    %65 = vector.multi_reduction <add>, %64, %cst_46 [2] : vector<2x8x8xf32> to vector<2x8xf32>
    %66 = vector.shape_cast %65 : vector<2x8xf32> to vector<2x8x1xf32>
    %67 = tpu.reciprocal %66 {approx = true} : vector<2x8x1xf32> -> vector<2x8x1xf32>
    %68 = vector.broadcast %67 : vector<2x8x1xf32> to vector<2x8x8xf32>
    %69 = arith.mulf %64, %68 : vector<2x8x8xf32>
    "tpu.trace_start"() <{level = 10 : i32, message = "bqk,bkd->bqd"}> : () -> ()
    %cst_47 = arith.constant dense<0.000000e+00> : vector<2x8x25xf32>
    %70 = tpu.matmul %69, %55, %cst_47 {dimension_numbers = #tpu.dot_dimension_numbers<[2], [1], [1], [2], [0, 0, 0, 1, 1, 2], [0], [0]>} : vector<2x8x8xf32>, vector<2x8x25xf32>, vector<2x8x25xf32> -> vector<2x8x25xf32>
    "tpu.trace_stop"() : () -> ()
    %71 = vector.shape_cast %70 : vector<2x8x25xf32> to vector<16x25xf32>
    %c0_48 = arith.constant 0 : index
    %c0_49 = arith.constant 0 : index
    %c0_50 = arith.constant 0 : index
    %c0_51 = arith.constant 0 : index
    %72 = vector.load %arg11[%c0_48, %c0_49, %c0_50, %c0_51] : memref<1x2x25x50xf32, #tpu.memory_space<vmem>>, vector<1x1x25x50xf32>
    %73 = vector.shape_cast %72 : vector<1x1x25x50xf32> to vector<25x50xf32>
    %cst_52 = arith.constant dense<0.000000e+00> : vector<16x50xf32>
    %74 = tpu.matmul %71, %73, %cst_52 {dimension_numbers = #tpu.dot_dimension_numbers<[1], [0], [0], [1], [0, 0, 1, 1], [], []>} : vector<16x25xf32>, vector<25x50xf32>, vector<16x50xf32> -> vector<16x50xf32>
    %75 = arith.addf %31, %74 : vector<16x50xf32>
    %c0_53 = arith.constant 0 : index
    %c1 = arith.constant 1 : index
    %c0_54 = arith.constant 0 : index
    %c0_55 = arith.constant 0 : index
    %76 = vector.load %arg5[%c0_53, %c1, %c0_54, %c0_55] : memref<1x2x50x25xf32, #tpu.memory_space<vmem>>, vector<1x1x50x25xf32>
    %77 = vector.shape_cast %76 : vector<1x1x50x25xf32> to vector<50x25xf32>
    %cst_56 = arith.constant dense<0.000000e+00> : vector<16x25xf32>
    %78 = tpu.matmul %30, %77, %cst_56 {dimension_numbers = #tpu.dot_dimension_numbers<[1], [0], [0], [1], [0, 0, 1, 1], [], []>} : vector<16x50xf32>, vector<50x25xf32>, vector<16x25xf32> -> vector<16x25xf32>
    %c0_57 = arith.constant 0 : index
    %c1_58 = arith.constant 1 : index
    %c0_59 = arith.constant 0 : index
    %c0_60 = arith.constant 0 : index
    %79 = vector.load %arg6[%c0_57, %c1_58, %c0_59, %c0_60] : memref<1x2x1x25xf32, #tpu.memory_space<vmem>>, vector<1x1x1x25xf32>
    %80 = vector.shape_cast %79 : vector<1x1x1x25xf32> to vector<1x25xf32>
    %81 = vector.broadcast %80 : vector<1x25xf32> to vector<16x25xf32>
    %82 = arith.addf %78, %81 : vector<16x25xf32>
    %83 = vector.shape_cast %82 : vector<16x25xf32> to vector<2x8x25xf32>
    %c0_61 = arith.constant 0 : index
    %c1_62 = arith.constant 1 : index
    %c0_63 = arith.constant 0 : index
    %c0_64 = arith.constant 0 : index
    %84 = vector.load %arg7[%c0_61, %c1_62, %c0_63, %c0_64] : memref<1x2x50x25xf32, #tpu.memory_space<vmem>>, vector<1x1x50x25xf32>
    %85 = vector.shape_cast %84 : vector<1x1x50x25xf32> to vector<50x25xf32>
    %cst_65 = arith.constant dense<0.000000e+00> : vector<16x25xf32>
    %86 = tpu.matmul %30, %85, %cst_65 {dimension_numbers = #tpu.dot_dimension_numbers<[1], [0], [0], [1], [0, 0, 1, 1], [], []>} : vector<16x50xf32>, vector<50x25xf32>, vector<16x25xf32> -> vector<16x25xf32>
    %c0_66 = arith.constant 0 : index
    %c1_67 = arith.constant 1 : index
    %c0_68 = arith.constant 0 : index
    %c0_69 = arith.constant 0 : index
    %87 = vector.load %arg8[%c0_66, %c1_67, %c0_68, %c0_69] : memref<1x2x1x25xf32, #tpu.memory_space<vmem>>, vector<1x1x1x25xf32>
    %88 = vector.shape_cast %87 : vector<1x1x1x25xf32> to vector<1x25xf32>
    %89 = vector.broadcast %88 : vector<1x25xf32> to vector<16x25xf32>
    %90 = arith.addf %86, %89 : vector<16x25xf32>
    %91 = vector.shape_cast %90 : vector<16x25xf32> to vector<2x8x25xf32>
    %c0_70 = arith.constant 0 : index
    %c1_71 = arith.constant 1 : index
    %c0_72 = arith.constant 0 : index
    %c0_73 = arith.constant 0 : index
    %92 = vector.load %arg9[%c0_70, %c1_71, %c0_72, %c0_73] : memref<1x2x50x25xf32, #tpu.memory_space<vmem>>, vector<1x1x50x25xf32>
    %93 = vector.shape_cast %92 : vector<1x1x50x25xf32> to vector<50x25xf32>
    %cst_74 = arith.constant dense<0.000000e+00> : vector<16x25xf32>
    %94 = tpu.matmul %30, %93, %cst_74 {dimension_numbers = #tpu.dot_dimension_numbers<[1], [0], [0], [1], [0, 0, 1, 1], [], []>} : vector<16x50xf32>, vector<50x25xf32>, vector<16x25xf32> -> vector<16x25xf32>
    %c0_75 = arith.constant 0 : index
    %c1_76 = arith.constant 1 : index
    %c0_77 = arith.constant 0 : index
    %c0_78 = arith.constant 0 : index
    %95 = vector.load %arg10[%c0_75, %c1_76, %c0_77, %c0_78] : memref<1x2x1x25xf32, #tpu.memory_space<vmem>>, vector<1x1x1x25xf32>
    %96 = vector.shape_cast %95 : vector<1x1x1x25xf32> to vector<1x25xf32>
    %97 = vector.broadcast %96 : vector<1x25xf32> to vector<16x25xf32>
    %98 = arith.addf %94, %97 : vector<16x25xf32>
    %99 = vector.shape_cast %98 : vector<16x25xf32> to vector<2x8x25xf32>
    "tpu.trace_start"() <{level = 10 : i32, message = "bqd,bkd->bqk"}> : () -> ()
    %cst_79 = arith.constant dense<0.000000e+00> : vector<2x8x8xf32>
    %100 = tpu.matmul %83, %91, %cst_79 {dimension_numbers = #tpu.dot_dimension_numbers<[2], [2], [1], [1], [0, 0, 0, 1, 1, 1], [0], [0]>} : vector<2x8x25xf32>, vector<2x8x25xf32>, vector<2x8x8xf32> -> vector<2x8x8xf32>
    "tpu.trace_stop"() : () -> ()
    %cst_80 = arith.constant 2.000000e-01 : f32
    %101 = vector.broadcast %cst_80 : f32 to vector<2x8x8xf32>
    %102 = arith.mulf %100, %101 : vector<2x8x8xf32>
    %103 = arith.addf %102, %4 : vector<2x8x8xf32>
    %cst_81 = arith.constant dense<0xFF800000> : vector<2x8xf32>
    %104 = vector.multi_reduction <maximumf>, %103, %cst_81 [2] : vector<2x8x8xf32> to vector<2x8xf32>
    %105 = vector.shape_cast %104 : vector<2x8xf32> to vector<2x8x1xf32>
    %106 = vector.broadcast %105 : vector<2x8x1xf32> to vector<2x8x8xf32>
    %107 = arith.subf %103, %106 : vector<2x8x8xf32>
    %108 = math.exp %107 : vector<2x8x8xf32>
    %cst_82 = arith.constant dense<0.000000e+00> : vector<2x8xf32>
    %109 = vector.multi_reduction <add>, %108, %cst_82 [2] : vector<2x8x8xf32> to vector<2x8xf32>
    %110 = vector.shape_cast %109 : vector<2x8xf32> to vector<2x8x1xf32>
    %111 = tpu.reciprocal %110 {approx = true} : vector<2x8x1xf32> -> vector<2x8x1xf32>
    %112 = vector.broadcast %111 : vector<2x8x1xf32> to vector<2x8x8xf32>
    %113 = arith.mulf %108, %112 : vector<2x8x8xf32>
    "tpu.trace_start"() <{level = 10 : i32, message = "bqk,bkd->bqd"}> : () -> ()
    %cst_83 = arith.constant dense<0.000000e+00> : vector<2x8x25xf32>
    %114 = tpu.matmul %113, %99, %cst_83 {dimension_numbers = #tpu.dot_dimension_numbers<[2], [1], [1], [2], [0, 0, 0, 1, 1, 2], [0], [0]>} : vector<2x8x8xf32>, vector<2x8x25xf32>, vector<2x8x25xf32> -> vector<2x8x25xf32>
    "tpu.trace_stop"() : () -> ()
    %115 = vector.shape_cast %114 : vector<2x8x25xf32> to vector<16x25xf32>
    %c0_84 = arith.constant 0 : index
    %c1_85 = arith.constant 1 : index
    %c0_86 = arith.constant 0 : index
    %c0_87 = arith.constant 0 : index
    %116 = vector.load %arg11[%c0_84, %c1_85, %c0_86, %c0_87] : memref<1x2x25x50xf32, #tpu.memory_space<vmem>>, vector<1x1x25x50xf32>
    %117 = vector.shape_cast %116 : vector<1x1x25x50xf32> to vector<25x50xf32>
    %cst_88 = arith.constant dense<0.000000e+00> : vector<16x50xf32>
    %118 = tpu.matmul %115, %117, %cst_88 {dimension_numbers = #tpu.dot_dimension_numbers<[1], [0], [0], [1], [0, 0, 1, 1], [], []>} : vector<16x25xf32>, vector<25x50xf32>, vector<16x50xf32> -> vector<16x50xf32>
    %119 = arith.addf %75, %118 : vector<16x50xf32>
    %120 = arith.addf %3, %119 : vector<16x50xf32>
    %c0_89 = arith.constant 0 : index
    %c0_90 = arith.constant 0 : index
    %c0_91 = arith.constant 0 : index
    %121 = vector.load %arg12[%c0_89, %c0_90, %c0_91] : memref<1x1x50xf32, #tpu.memory_space<vmem>>, vector<1x1x50xf32>
    %122 = vector.shape_cast %121 : vector<1x1x50xf32> to vector<1x50xf32>
    %123 = vector.broadcast %122 : vector<1x50xf32> to vector<16x50xf32>
    %124 = arith.addf %120, %123 : vector<16x50xf32>
    %c0_92 = arith.constant 0 : index
    %c0_93 = arith.constant 0 : index
    %c0_94 = arith.constant 0 : index
    %125 = vector.load %arg13[%c0_92, %c0_93, %c0_94] : memref<1x1x50xf32, #tpu.memory_space<vmem>>, vector<1x1x50xf32>
    %126 = vector.shape_cast %125 : vector<1x1x50xf32> to vector<1x50xf32>
    %c0_95 = arith.constant 0 : index
    %c0_96 = arith.constant 0 : index
    %c0_97 = arith.constant 0 : index
    %127 = vector.load %arg14[%c0_95, %c0_96, %c0_97] : memref<1x1x50xf32, #tpu.memory_space<vmem>>, vector<1x1x50xf32>
    %128 = vector.shape_cast %127 : vector<1x1x50xf32> to vector<1x50xf32>
    %cst_98 = arith.constant dense<0.000000e+00> : vector<16xf32>
    %129 = vector.multi_reduction <add>, %124, %cst_98 [1] : vector<16x50xf32> to vector<16xf32>
    %130 = vector.shape_cast %129 : vector<16xf32> to vector<16x1xf32>
    %cst_99 = arith.constant 5.000000e+01 : f32
    %131 = vector.broadcast %cst_99 : f32 to vector<16x1xf32>
    %132 = arith.divf %130, %131 : vector<16x1xf32>
    %133 = vector.broadcast %132 : vector<16x1xf32> to vector<16x50xf32>
    %134 = arith.subf %124, %133 : vector<16x50xf32>
    %135 = arith.mulf %134, %134 : vector<16x50xf32>
    %cst_100 = arith.constant dense<0.000000e+00> : vector<16xf32>
    %136 = vector.multi_reduction <add>, %135, %cst_100 [1] : vector<16x50xf32> to vector<16xf32>
    %137 = vector.shape_cast %136 : vector<16xf32> to vector<16x1xf32>
    %cst_101 = arith.constant 4.900000e+01 : f32
    %138 = vector.broadcast %cst_101 : f32 to vector<16x1xf32>
    %139 = arith.divf %137, %138 : vector<16x1xf32>
    %140 = math.sqrt %139 : vector<16x1xf32>
    %141 = vector.broadcast %132 : vector<16x1xf32> to vector<16x50xf32>
    %142 = arith.subf %124, %141 : vector<16x50xf32>
    %143 = vector.broadcast %126 : vector<1x50xf32> to vector<16x50xf32>
    %144 = arith.mulf %143, %142 : vector<16x50xf32>
    %cst_102 = arith.constant 9.99999997E-7 : f32
    %145 = vector.broadcast %cst_102 : f32 to vector<16x1xf32>
    %146 = arith.addf %140, %145 : vector<16x1xf32>
    %147 = vector.broadcast %146 : vector<16x1xf32> to vector<16x50xf32>
    %148 = arith.divf %144, %147 : vector<16x50xf32>
    %149 = vector.broadcast %128 : vector<1x50xf32> to vector<16x50xf32>
    %150 = arith.addf %148, %149 : vector<16x50xf32>
    %c0_103 = arith.constant 0 : index
    %c0_104 = arith.constant 0 : index
    %c0_105 = arith.constant 0 : index
    %151 = vector.load %arg15[%c0_103, %c0_104, %c0_105] : memref<1x50x2048xf32, #tpu.memory_space<vmem>>, vector<1x50x2048xf32>
    %152 = vector.shape_cast %151 : vector<1x50x2048xf32> to vector<50x2048xf32>
    %cst_106 = arith.constant dense<0.000000e+00> : vector<16x2048xf32>
    %153 = tpu.matmul %150, %152, %cst_106 {dimension_numbers = #tpu.dot_dimension_numbers<[1], [0], [0], [1], [0, 0, 1, 1], [], []>} : vector<16x50xf32>, vector<50x2048xf32>, vector<16x2048xf32> -> vector<16x2048xf32>
    %c0_107 = arith.constant 0 : index
    %c0_108 = arith.constant 0 : index
    %c0_109 = arith.constant 0 : index
    %154 = vector.load %arg16[%c0_107, %c0_108, %c0_109] : memref<1x1x2048xf32, #tpu.memory_space<vmem>>, vector<1x1x2048xf32>
    %155 = vector.shape_cast %154 : vector<1x1x2048xf32> to vector<1x2048xf32>
    %156 = vector.broadcast %155 : vector<1x2048xf32> to vector<16x2048xf32>
    %157 = arith.addf %153, %156 : vector<16x2048xf32>
    %cst_110 = arith.constant 0.000000e+00 : f32
    %158 = vector.broadcast %cst_110 : f32 to vector<16x2048xf32>
    %159 = arith.maximumf %157, %158 : vector<16x2048xf32>
    %c0_111 = arith.constant 0 : index
    %c0_112 = arith.constant 0 : index
    %c0_113 = arith.constant 0 : index
    %160 = vector.load %arg17[%c0_111, %c0_112, %c0_113] : memref<1x2048x50xf32, #tpu.memory_space<vmem>>, vector<1x2048x50xf32>
    %161 = vector.shape_cast %160 : vector<1x2048x50xf32> to vector<2048x50xf32>
    %cst_114 = arith.constant dense<0.000000e+00> : vector<16x50xf32>
    %162 = tpu.matmul %159, %161, %cst_114 {dimension_numbers = #tpu.dot_dimension_numbers<[1], [0], [0], [1], [0, 0, 1, 1], [], []>} : vector<16x2048xf32>, vector<2048x50xf32>, vector<16x50xf32> -> vector<16x50xf32>
    %163 = arith.addf %124, %162 : vector<16x50xf32>
    %c0_115 = arith.constant 0 : index
    %c0_116 = arith.constant 0 : index
    %c0_117 = arith.constant 0 : index
    %164 = vector.load %arg18[%c0_115, %c0_116, %c0_117] : memref<1x1x50xf32, #tpu.memory_space<vmem>>, vector<1x1x50xf32>
    %165 = vector.shape_cast %164 : vector<1x1x50xf32> to vector<1x50xf32>
    %166 = vector.broadcast %165 : vector<1x50xf32> to vector<16x50xf32>
    %167 = arith.addf %163, %166 : vector<16x50xf32>
    %c0_118 = arith.constant 0 : index
    %c0_119 = arith.constant 0 : index
    %168 = vector.load %arg22[%c0_118, %c0_119] : memref<16x50xf32, #tpu.memory_space<vmem>>, vector<16x50xf32>
    tpu.vector_store %arg22[%c0_118, %c0_119], %167 {strides = array<i32>} : memref<16x50xf32, #tpu.memory_space<vmem>>, vector<16x50xf32>,
    %c5_i32 = arith.constant 5 : i32
    %169 = arith.cmpi eq, %arg0, %c5_i32 : i32
    %170 = arith.extui %169 : i1 to i32
    %c0_i32_120 = arith.constant 0 : i32
    %171 = arith.cmpi ne, %170, %c0_i32_120 : i32
    scf.if %171 {
      %c0_121 = arith.constant 0 : index
      %c0_122 = arith.constant 0 : index
      %172 = vector.load %arg19[%c0_121, %c0_122] : memref<1x50xf32, #tpu.memory_space<vmem>>, vector<1x50xf32>
      %c0_123 = arith.constant 0 : index
      %c0_124 = arith.constant 0 : index
      %173 = vector.load %arg20[%c0_123, %c0_124] : memref<1x50xf32, #tpu.memory_space<vmem>>, vector<1x50xf32>
      %cst_125 = arith.constant dense<0.000000e+00> : vector<16xf32>
      %174 = vector.multi_reduction <add>, %167, %cst_125 [1] : vector<16x50xf32> to vector<16xf32>
      %175 = vector.shape_cast %174 : vector<16xf32> to vector<16x1xf32>
      %cst_126 = arith.constant 5.000000e+01 : f32
      %176 = vector.broadcast %cst_126 : f32 to vector<16x1xf32>
      %177 = arith.divf %175, %176 : vector<16x1xf32>
      %178 = vector.broadcast %177 : vector<16x1xf32> to vector<16x50xf32>
      %179 = arith.subf %167, %178 : vector<16x50xf32>
      %180 = arith.mulf %179, %179 : vector<16x50xf32>
      %cst_127 = arith.constant dense<0.000000e+00> : vector<16xf32>
      %181 = vector.multi_reduction <add>, %180, %cst_127 [1] : vector<16x50xf32> to vector<16xf32>
      %182 = vector.shape_cast %181 : vector<16xf32> to vector<16x1xf32>
      %cst_128 = arith.constant 4.900000e+01 : f32
      %183 = vector.broadcast %cst_128 : f32 to vector<16x1xf32>
      %184 = arith.divf %182, %183 : vector<16x1xf32>
      %185 = math.sqrt %184 : vector<16x1xf32>
      %186 = vector.broadcast %177 : vector<16x1xf32> to vector<16x50xf32>
      %187 = arith.subf %167, %186 : vector<16x50xf32>
      %188 = vector.broadcast %172 : vector<1x50xf32> to vector<16x50xf32>
      %189 = arith.mulf %188, %187 : vector<16x50xf32>
      %cst_129 = arith.constant 9.99999997E-7 : f32
      %190 = vector.broadcast %cst_129 : f32 to vector<16x1xf32>
      %191 = arith.addf %185, %190 : vector<16x1xf32>
      %192 = vector.broadcast %191 : vector<16x1xf32> to vector<16x50xf32>
      %193 = arith.divf %189, %192 : vector<16x50xf32>
      %194 = vector.broadcast %173 : vector<1x50xf32> to vector<16x50xf32>
      %195 = arith.addf %193, %194 : vector<16x50xf32>
      %196 = vector.shape_cast %195 : vector<16x50xf32> to vector<2x8x50xf32>
      %cst_130 = arith.constant dense<0.000000e+00> : vector<8x50xf32>
      %197 = vector.multi_reduction <add>, %196, %cst_130 [0] : vector<2x8x50xf32> to vector<8x50xf32>
      %c0_131 = arith.constant 0 : index
      %c0_132 = arith.constant 0 : index
      %198 = vector.load %arg21[%c0_131, %c0_132] : memref<8x50xf32, #tpu.memory_space<vmem>>, vector<8x50xf32>
      tpu.vector_store %arg21[%c0_131, %c0_132], %197 {strides = array<i32>} : memref<8x50xf32, #tpu.memory_space<vmem>>, vector<8x50xf32>,
    } else {
    }
    return
  }
  func.func @transform_0(%arg0: i32) -> (i32, i32, i32) {
    %c0_i32 = arith.constant 0 : i32
    %c0_i32_0 = arith.constant 0 : i32
    %c0_i32_1 = arith.constant 0 : i32
    %c0_i32_2 = arith.constant 0 : i32
    return %c0_i32, %c0_i32_0, %c0_i32_1 : i32, i32, i32
  }
  func.func @transform_1(%arg0: i32) -> (i32, i32, i32) {
    %c0_i32 = arith.constant 0 : i32
    %c0_i32_0 = arith.constant 0 : i32
    %c0_i32_1 = arith.constant 0 : i32
    %c0_i32_2 = arith.constant 0 : i32
    return %c0_i32, %c0_i32_0, %c0_i32_1 : i32, i32, i32
  }
  func.func @transform_2(%arg0: i32) -> (i32, i32, i32) {
    %c0_i32 = arith.constant 0 : i32
    %c0_i32_0 = arith.constant 0 : i32
    %c0_i32_1 = arith.constant 0 : i32
    return %arg0, %c0_i32, %c0_i32_0 : i32, i32, i32
  }
  func.func @transform_3(%arg0: i32) -> (i32, i32, i32) {
    %c0_i32 = arith.constant 0 : i32
    %c0_i32_0 = arith.constant 0 : i32
    %c0_i32_1 = arith.constant 0 : i32
    return %arg0, %c0_i32, %c0_i32_0 : i32, i32, i32
  }
  func.func @transform_4(%arg0: i32) -> (i32, i32, i32, i32) {
    %c0_i32 = arith.constant 0 : i32
    %c0_i32_0 = arith.constant 0 : i32
    %c0_i32_1 = arith.constant 0 : i32
    %c0_i32_2 = arith.constant 0 : i32
    return %arg0, %c0_i32, %c0_i32_0, %c0_i32_1 : i32, i32, i32, i32
  }
  func.func @transform_5(%arg0: i32) -> (i32, i32, i32, i32) {
    %c0_i32 = arith.constant 0 : i32
    %c0_i32_0 = arith.constant 0 : i32
    %c0_i32_1 = arith.constant 0 : i32
    %c0_i32_2 = arith.constant 0 : i32
    return %arg0, %c0_i32, %c0_i32_0, %c0_i32_1 : i32, i32, i32, i32
  }
  func.func @transform_6(%arg0: i32) -> (i32, i32, i32, i32) {
    %c0_i32 = arith.constant 0 : i32
    %c0_i32_0 = arith.constant 0 : i32
    %c0_i32_1 = arith.constant 0 : i32
    %c0_i32_2 = arith.constant 0 : i32
    return %arg0, %c0_i32, %c0_i32_0, %c0_i32_1 : i32, i32, i32, i32
  }
  func.func @transform_7(%arg0: i32) -> (i32, i32, i32, i32) {
    %c0_i32 = arith.constant 0 : i32
    %c0_i32_0 = arith.constant 0 : i32
    %c0_i32_1 = arith.constant 0 : i32
    %c0_i32_2 = arith.constant 0 : i32
    return %arg0, %c0_i32, %c0_i32_0, %c0_i32_1 : i32, i32, i32, i32
  }
  func.func @transform_8(%arg0: i32) -> (i32, i32, i32, i32) {
    %c0_i32 = arith.constant 0 : i32
    %c0_i32_0 = arith.constant 0 : i32
    %c0_i32_1 = arith.constant 0 : i32
    %c0_i32_2 = arith.constant 0 : i32
    return %arg0, %c0_i32, %c0_i32_0, %c0_i32_1 : i32, i32, i32, i32
  }
  func.func @transform_9(%arg0: i32) -> (i32, i32, i32, i32) {
    %c0_i32 = arith.constant 0 : i32
    %c0_i32_0 = arith.constant 0 : i32
    %c0_i32_1 = arith.constant 0 : i32
    %c0_i32_2 = arith.constant 0 : i32
    return %arg0, %c0_i32, %c0_i32_0, %c0_i32_1 : i32, i32, i32, i32
  }
  func.func @transform_10(%arg0: i32) -> (i32, i32, i32, i32) {
    %c0_i32 = arith.constant 0 : i32
    %c0_i32_0 = arith.constant 0 : i32
    %c0_i32_1 = arith.constant 0 : i32
    %c0_i32_2 = arith.constant 0 : i32
    return %arg0, %c0_i32, %c0_i32_0, %c0_i32_1 : i32, i32, i32, i32
  }
  func.func @transform_11(%arg0: i32) -> (i32, i32, i32) {
    %c0_i32 = arith.constant 0 : i32
    %c0_i32_0 = arith.constant 0 : i32
    %c0_i32_1 = arith.constant 0 : i32
    return %arg0, %c0_i32, %c0_i32_0 : i32, i32, i32
  }
  func.func @transform_12(%arg0: i32) -> (i32, i32, i32) {
    %c0_i32 = arith.constant 0 : i32
    %c0_i32_0 = arith.constant 0 : i32
    %c0_i32_1 = arith.constant 0 : i32
    return %arg0, %c0_i32, %c0_i32_0 : i32, i32, i32
  }
  func.func @transform_13(%arg0: i32) -> (i32, i32, i32) {
    %c0_i32 = arith.constant 0 : i32
    %c0_i32_0 = arith.constant 0 : i32
    %c0_i32_1 = arith.constant 0 : i32
    return %arg0, %c0_i32, %c0_i32_0 : i32, i32, i32
  }
  func.func @transform_14(%arg0: i32) -> (i32, i32, i32) {
    %c0_i32 = arith.constant 0 : i32
    %c0_i32_0 = arith.constant 0 : i32
    %c0_i32_1 = arith.constant 0 : i32
    return %arg0, %c0_i32, %c0_i32_0 : i32, i32, i32
  }
  func.func @transform_15(%arg0: i32) -> (i32, i32, i32) {
    %c0_i32 = arith.constant 0 : i32
    %c0_i32_0 = arith.constant 0 : i32
    %c0_i32_1 = arith.constant 0 : i32
    return %arg0, %c0_i32, %c0_i32_0 : i32, i32, i32
  }
  func.func @transform_16(%arg0: i32) -> (i32, i32, i32) {
    %c0_i32 = arith.constant 0 : i32
    %c0_i32_0 = arith.constant 0 : i32
    %c0_i32_1 = arith.constant 0 : i32
    return %arg0, %c0_i32, %c0_i32_0 : i32, i32, i32
  }
  func.func @transform_17(%arg0: i32) -> (i32, i32, i32) {
    %c0_i32 = arith.constant 0 : i32
    %c0_i32_0 = arith.constant 0 : i32
    %c0_i32_1 = arith.constant 0 : i32
    return %arg0, %c0_i32, %c0_i32_0 : i32, i32, i32
  }
  func.func @transform_18(%arg0: i32) -> (i32, i32) {
    %c0_i32 = arith.constant 0 : i32
    %c0_i32_0 = arith.constant 0 : i32
    %c0_i32_1 = arith.constant 0 : i32
    return %c0_i32, %c0_i32_0 : i32, i32
  }
  func.func @transform_19(%arg0: i32) -> (i32, i32) {
    %c0_i32 = arith.constant 0 : i32
    %c0_i32_0 = arith.constant 0 : i32
    %c0_i32_1 = arith.constant 0 : i32
    return %c0_i32, %c0_i32_0 : i32, i32
  }
  func.func @transform_20(%arg0: i32) -> (i32, i32) {
    %c0_i32 = arith.constant 0 : i32
    %c0_i32_0 = arith.constant 0 : i32
    %c0_i32_1 = arith.constant 0 : i32
    return %c0_i32, %c0_i32_0 : i32, i32
  }
}

</mosaic_0001>

<llo_original>
// kernel: tpu_custom_call.1
$region0: #{tpu_custom_call.1}
  #allocation0 [shape = 'u32[]', space=smem, size = 0x4, offset = 0x4, fixed_abs, tag = 'smem constant byte address 0x4 - core index']
  #allocation1 [shape = 'u32[72,128]{1,0:T(1,128)}', space=vmem, size = 0x9000, scoped, tag = 'internal scratch']
  #allocation2 [shape = 'f32[16,50]{1,0:T(8,128)}', space=vmem, size = 0x2000, scoped, tag = 'scratch operand']
  %s0 = inlined_call_operand.vmem [shape: f32[2,8,50], index: 0, kind: input, shape index: {}]
  %s1 = inlined_call_operand.vmem [shape: f32[2,8,8], index: 1, kind: input, shape index: {}]
  %s2 = inlined_call_operand.vmem [shape: f32[6,1,50], index: 2, kind: input, shape index: {}]
  %s3 = inlined_call_operand.vmem [shape: f32[6,1,50], index: 3, kind: input, shape index: {}]
  %s4 = inlined_call_operand.vmem [shape: f32[6,2,50,25], index: 4, kind: input, shape index: {}]
  %s5 = inlined_call_operand.vmem [shape: f32[6,2,1,25], index: 5, kind: input, shape index: {}]
  %s6 = inlined_call_operand.vmem [shape: f32[6,2,50,25], index: 6, kind: input, shape index: {}]
  %s7 = inlined_call_operand.vmem [shape: f32[6,2,1,25], index: 7, kind: input, shape index: {}]
  %s8 = inlined_call_operand.vmem [shape: f32[6,2,50,25], index: 8, kind: input, shape index: {}]
  %s9 = inlined_call_operand.vmem [shape: f32[6,2,1,25], index: 9, kind: input, shape index: {}]
  %s10 = inlined_call_operand.vmem [shape: f32[6,2,25,50], index: 10, kind: input, shape index: {}]
  %s11 = inlined_call_operand.vmem [shape: f32[6,1,50], index: 11, kind: input, shape index: {}]
  %s12 = inlined_call_operand.vmem [shape: f32[6,1,50], index: 12, kind: input, shape index: {}]
  %s13 = inlined_call_operand.vmem [shape: f32[6,1,50], index: 13, kind: input, shape index: {}]
  %s14 = inlined_call_operand.vmem [shape: f32[6,50,2048], index: 14, kind: input, shape index: {}]
  %s15 = inlined_call_operand.vmem [shape: f32[6,1,2048], index: 15, kind: input, shape index: {}]
  %s16 = inlined_call_operand.vmem [shape: f32[6,2048,50], index: 16, kind: input, shape index: {}]
  %s17 = inlined_call_operand.vmem [shape: f32[6,1,50], index: 17, kind: input, shape index: {}]
  %s18 = inlined_call_operand.vmem [shape: f32[1,50], index: 18, kind: input, shape index: {}]
  %s19 = inlined_call_operand.vmem [shape: f32[1,50], index: 19, kind: input, shape index: {}]
  %s20 = inlined_call_operand.hbm [shape: f32[8,50], index: 20, kind: output, shape index: {}]
  %s21 = sld [smem:[#allocation0]]
  $region121: #{tpu_custom_call.1} parent=0
    _
  %s23 = ssub.s32 1, %s21
  %s24 = scalar_select 0, %s23, %s21
  $region1: #{tpu_custom_call.1} parent=0
    #allocation3 [shape = 'u8[4096]{0}', space=vmem, size = 0x1000, scoped, tag = 'output window, operand 0, single buffered']
    #allocation4 [shape = 's32[2]{0}', space=sflag, size = 0x8, scoped, tag = 'scoped memory for tpu_custom_call.1']
    %25 = vsyncpa [#allocation4], 0
    loop: start=0, step=1, limit=8
    $region2: #{tpu_custom_call.1} parent=1 // loop_pre_header
      _
    $region3: #{tpu_custom_call.1} parent=1 // loop_header
      %s27 = sphi 0, %s31
      %p28 = scmp.ge.s32.totalorder %s27, 8
      %s35 = sphi 0, %s35
      %s37 = sphi 0, %s35
      %s38 = sphi 0, %s37
      %s52 = sphi 0, %s38
      %s56 = sphi 0, %s56
      %s58 = sphi 0, %s56
      %s59 = sphi 0, %s58
      %s73 = sphi 0, %s59
      %s79 = sphi 0, %s81
      %s82 = sphi 0, %s79
      %s83 = sphi 0, %s82
      %s99 = sphi 0, %s83
      %s105 = sphi 0, %s107
      %s108 = sphi 0, %s105
      %s109 = sphi 0, %s108
      %s125 = sphi 0, %s109
      %s131 = sphi 0, %s133
      %s134 = sphi 0, %s131
      %s135 = sphi 0, %s134
      %s151 = sphi 0, %s135
      %s157 = sphi 0, %s159
      %s160 = sphi 0, %s157
      %s161 = sphi 0, %s160
      %s177 = sphi 0, %s161
      %s183 = sphi 0, %s185
      %s186 = sphi 0, %s183
      %s187 = sphi 0, %s186
      %s203 = sphi 0, %s187
      %s209 = sphi 0, %s211
      %s212 = sphi 0, %s209
      %s213 = sphi 0, %s212
      %s229 = sphi 0, %s213
      %s235 = sphi 0, %s237
      %s238 = sphi 0, %s235
      %s239 = sphi 0, %s238
      %s255 = sphi 0, %s239
      %s261 = sphi 0, %s263
      %s264 = sphi 0, %s261
      %s265 = sphi 0, %s264
      %s281 = sphi 0, %s265
      %s287 = sphi 0, %s289
      %s290 = sphi 0, %s287
      %s291 = sphi 0, %s290
      %s307 = sphi 0, %s291
      %s313 = sphi 0, %s315
      %s316 = sphi 0, %s313
      %s317 = sphi 0, %s316
      %s333 = sphi 0, %s317
      %s339 = sphi 0, %s341
      %s342 = sphi 0, %s339
      %s343 = sphi 0, %s342
      %s359 = sphi 0, %s343
      %s365 = sphi 0, %s367
      %s368 = sphi 0, %s365
      %s369 = sphi 0, %s368
      %s385 = sphi 0, %s369
      %s391 = sphi 0, %s393
      %s394 = sphi 0, %s391
      %s395 = sphi 0, %s394
      %s411 = sphi 0, %s395
      %s417 = sphi 0, %s419
      %s420 = sphi 0, %s417
      %s421 = sphi 0, %s420
      %s437 = sphi 0, %s421
      %s443 = sphi 0, %s445
      %s446 = sphi 0, %s443
      %s447 = sphi 0, %s446
      %s463 = sphi 0, %s447
      %s469 = sphi 0, %s471
      %s472 = sphi 0, %s469
      %s473 = sphi 0, %s472
      %s489 = sphi 0, %s473
      %s493 = sphi 0, %s493
      %s495 = sphi 0, %s493
      %s496 = sphi 0, %s495
      %s510 = sphi 0, %s496
      %s514 = sphi 0, %s514
      %s516 = sphi 0, %s514
      %s517 = sphi 0, %s516
      %s531 = sphi 0, %s517
      %s535 = sphi 0, %s535
      %s537 = sphi 0, %s535
      %s538 = sphi 0, %s537
      %s552 = sphi 0, %s538
    $region4: #{tpu_custom_call.1} parent=1 // loop_header_branch
      %30 = sbr.rel (%p28) target = $region8
    $region5: #{tpu_custom_call.1} parent=1 // loop_body
      %s32 = ssub.s32 %s27, 1
      %s33 = ssub.s32 %s27, 2
      %s34 = sadd.s32 %s27, 1
      %s36 = sadd.s32 %s35, 1
      %p39 = scmp.eq.s32.totalorder %s27, 5
      %p40 = scmp.ne.s32.totalorder %s35, %s37
      %p41 = scmp.eq.s32.totalorder %s27, 0
      %p42 = por %p40, %p41
      %p43 = scmp.ne.s32.totalorder %s35, %s37
      %p44 = scmp.eq.s32.totalorder %s32, 5
      %p45 = por %p43, %p44
      %p46 = scmp.ne.s32.totalorder %s37, %s38
      %p47 = scmp.eq.s32.totalorder %s32, 0
      %p48 = por %p46, %p47
      %p49 = scmp.ne.s32.totalorder %s37, %s38
      %p50 = scmp.eq.s32.totalorder %s33, 5
      %p51 = por %p49, %p50
      %p53 = scmp.ne.s32.totalorder %s38, %s52
      %p54 = scmp.eq.s32.totalorder %s33, 0
      %p55 = por %p53, %p54
      %s57 = sadd.s32 %s56, 1
      %p60 = scmp.eq.s32.totalorder %s27, 5
      %p61 = scmp.ne.s32.totalorder %s56, %s58
      %p62 = scmp.eq.s32.totalorder %s27, 0
      %p63 = por %p61, %p62
      %p64 = scmp.ne.s32.totalorder %s56, %s58
      %p65 = scmp.eq.s32.totalorder %s32, 5
      %p66 = por %p64, %p65
      %p67 = scmp.ne.s32.totalorder %s58, %s59
      %p68 = scmp.eq.s32.totalorder %s32, 0
      %p69 = por %p67, %p68
      %p70 = scmp.ne.s32.totalorder %s58, %s59
      %p71 = scmp.eq.s32.totalorder %s33, 5
      %p72 = por %p70, %p71
      %p74 = scmp.ne.s32.totalorder %s59, %s73
      %p75 = scmp.eq.s32.totalorder %s33, 0
      %p76 = por %p74, %p75
      %s77 = ssub.s32 %s27, %s34
      %p78 = scmp.eq.s32.totalorder %s77, 0
      %s80 = sadd.s32 %s79, 1
      %s81 = scalar_select %p78, %s79, %s80
      %p84 = pneg %p78
      %p85 = scmp.eq.s32.totalorder %s27, 5
      %p86 = por %p84, %p85
      %p87 = scmp.ne.s32.totalorder %s79, %s82
      %p88 = scmp.eq.s32.totalorder %s27, 0
      %p89 = por %p87, %p88
      %p90 = scmp.ne.s32.totalorder %s79, %s82
      %p91 = scmp.eq.s32.totalorder %s32, 5
      %p92 = por %p90, %p91
      %p93 = scmp.ne.s32.totalorder %s82, %s83
      %p94 = scmp.eq.s32.totalorder %s32, 0
      %p95 = por %p93, %p94
      %p96 = scmp.ne.s32.totalorder %s82, %s83
      %p97 = scmp.eq.s32.totalorder %s33, 5
      %p98 = por %p96, %p97
      %p100 = scmp.ne.s32.totalorder %s83, %s99
      %p101 = scmp.eq.s32.totalorder %s33, 0
      %p102 = por %p100, %p101
      %s103 = ssub.s32 %s27, %s34
      %p104 = scmp.eq.s32.totalorder %s103, 0
      %s106 = sadd.s32 %s105, 1
      %s107 = scalar_select %p104, %s105, %s106
      %p110 = pneg %p104
      %p111 = scmp.eq.s32.totalorder %s27, 5
      %p112 = por %p110, %p111
      %p113 = scmp.ne.s32.totalorder %s105, %s108
      %p114 = scmp.eq.s32.totalorder %s27, 0
      %p115 = por %p113, %p114
      %p116 = scmp.ne.s32.totalorder %s105, %s108
      %p117 = scmp.eq.s32.totalorder %s32, 5
      %p118 = por %p116, %p117
      %p119 = scmp.ne.s32.totalorder %s108, %s109
      %p120 = scmp.eq.s32.totalorder %s32, 0
      %p121 = por %p119, %p120
      %p122 = scmp.ne.s32.totalorder %s108, %s109
      %p123 = scmp.eq.s32.totalorder %s33, 5
      %p124 = por %p122, %p123
      %p126 = scmp.ne.s32.totalorder %s109, %s125
      %p127 = scmp.eq.s32.totalorder %s33, 0
      %p128 = por %p126, %p127
      %s129 = ssub.s32 %s27, %s34
      %p130 = scmp.eq.s32.totalorder %s129, 0
      %s132 = sadd.s32 %s131, 1
      %s133 = scalar_select %p130, %s131, %s132
      %p136 = pneg %p130
      %p137 = scmp.eq.s32.totalorder %s27, 5
      %p138 = por %p136, %p137
      %p139 = scmp.ne.s32.totalorder %s131, %s134
      %p140 = scmp.eq.s32.totalorder %s27, 0
      %p141 = por %p139, %p140
      %p142 = scmp.ne.s32.totalorder %s131, %s134
      %p143 = scmp.eq.s32.totalorder %s32, 5
      %p144 = por %p142, %p143
      %p145 = scmp.ne.s32.totalorder %s134, %s135
      %p146 = scmp.eq.s32.totalorder %s32, 0
      %p147 = por %p145, %p146
      %p148 = scmp.ne.s32.totalorder %s134, %s135
      %p149 = scmp.eq.s32.totalorder %s33, 5
      %p150 = por %p148, %p149
      %p152 = scmp.ne.s32.totalorder %s135, %s151
      %p153 = scmp.eq.s32.totalorder %s33, 0
      %p154 = por %p152, %p153
      %s155 = ssub.s32 %s27, %s34
      %p156 = scmp.eq.s32.totalorder %s155, 0
      %s158 = sadd.s32 %s157, 1
      %s159 = scalar_select %p156, %s157, %s158
      %p162 = pneg %p156
      %p163 = scmp.eq.s32.totalorder %s27, 5
      %p164 = por %p162, %p163
      %p165 = scmp.ne.s32.totalorder %s157, %s160
      %p166 = scmp.eq.s32.totalorder %s27, 0
      %p167 = por %p165, %p166
      %p168 = scmp.ne.s32.totalorder %s157, %s160
      %p169 = scmp.eq.s32.totalorder %s32, 5
      %p170 = por %p168, %p169
      %p171 = scmp.ne.s32.totalorder %s160, %s161
      %p172 = scmp.eq.s32.totalorder %s32, 0
      %p173 = por %p171, %p172
      %p174 = scmp.ne.s32.totalorder %s160, %s161
      %p175 = scmp.eq.s32.totalorder %s33, 5
      %p176 = por %p174, %p175
      %p178 = scmp.ne.s32.totalorder %s161, %s177
      %p179 = scmp.eq.s32.totalorder %s33, 0
      %p180 = por %p178, %p179
      %s181 = ssub.s32 %s27, %s34
      %p182 = scmp.eq.s32.totalorder %s181, 0
      %s184 = sadd.s32 %s183, 1
      %s185 = scalar_select %p182, %s183, %s184
      %p188 = pneg %p182
      %p189 = scmp.eq.s32.totalorder %s27, 5
      %p190 = por %p188, %p189
      %p191 = scmp.ne.s32.totalorder %s183, %s186
      %p192 = scmp.eq.s32.totalorder %s27, 0
      %p193 = por %p191, %p192
      %p194 = scmp.ne.s32.totalorder %s183, %s186
      %p195 = scmp.eq.s32.totalorder %s32, 5
      %p196 = por %p194, %p195
      %p197 = scmp.ne.s32.totalorder %s186, %s187
      %p198 = scmp.eq.s32.totalorder %s32, 0
      %p199 = por %p197, %p198
      %p200 = scmp.ne.s32.totalorder %s186, %s187
      %p201 = scmp.eq.s32.totalorder %s33, 5
      %p202 = por %p200, %p201
      %p204 = scmp.ne.s32.totalorder %s187, %s203
      %p205 = scmp.eq.s32.totalorder %s33, 0
      %p206 = por %p204, %p205
      %s207 = ssub.s32 %s27, %s34
      %p208 = scmp.eq.s32.totalorder %s207, 0
      %s210 = sadd.s32 %s209, 1
      %s211 = scalar_select %p208, %s209, %s210
      %p214 = pneg %p208
      %p215 = scmp.eq.s32.totalorder %s27, 5
      %p216 = por %p214, %p215
      %p217 = scmp.ne.s32.totalorder %s209, %s212
      %p218 = scmp.eq.s32.totalorder %s27, 0
      %p219 = por %p217, %p218
      %p220 = scmp.ne.s32.totalorder %s209, %s212
      %p221 = scmp.eq.s32.totalorder %s32, 5
      %p222 = por %p220, %p221
      %p223 = scmp.ne.s32.totalorder %s212, %s213
      %p224 = scmp.eq.s32.totalorder %s32, 0
      %p225 = por %p223, %p224
      %p226 = scmp.ne.s32.totalorder %s212, %s213
      %p227 = scmp.eq.s32.totalorder %s33, 5
      %p228 = por %p226, %p227
      %p230 = scmp.ne.s32.totalorder %s213, %s229
      %p231 = scmp.eq.s32.totalorder %s33, 0
      %p232 = por %p230, %p231
      %s233 = ssub.s32 %s27, %s34
      %p234 = scmp.eq.s32.totalorder %s233, 0
      %s236 = sadd.s32 %s235, 1
      %s237 = scalar_select %p234, %s235, %s236
      %p240 = pneg %p234
      %p241 = scmp.eq.s32.totalorder %s27, 5
      %p242 = por %p240, %p241
      %p243 = scmp.ne.s32.totalorder %s235, %s238
      %p244 = scmp.eq.s32.totalorder %s27, 0
      %p245 = por %p243, %p244
      %p246 = scmp.ne.s32.totalorder %s235, %s238
      %p247 = scmp.eq.s32.totalorder %s32, 5
      %p248 = por %p246, %p247
      %p249 = scmp.ne.s32.totalorder %s238, %s239
      %p250 = scmp.eq.s32.totalorder %s32, 0
      %p251 = por %p249, %p250
      %p252 = scmp.ne.s32.totalorder %s238, %s239
      %p253 = scmp.eq.s32.totalorder %s33, 5
      %p254 = por %p252, %p253
      %p256 = scmp.ne.s32.totalorder %s239, %s255
      %p257 = scmp.eq.s32.totalorder %s33, 0
      %p258 = por %p256, %p257
      %s259 = ssub.s32 %s27, %s34
      %p260 = scmp.eq.s32.totalorder %s259, 0
      %s262 = sadd.s32 %s261, 1
      %s263 = scalar_select %p260, %s261, %s262
      %p266 = pneg %p260
      %p267 = scmp.eq.s32.totalorder %s27, 5
      %p268 = por %p266, %p267
      %p269 = scmp.ne.s32.totalorder %s261, %s264
      %p270 = scmp.eq.s32.totalorder %s27, 0
      %p271 = por %p269, %p270
      %p272 = scmp.ne.s32.totalorder %s261, %s264
      %p273 = scmp.eq.s32.totalorder %s32, 5
      %p274 = por %p272, %p273
      %p275 = scmp.ne.s32.totalorder %s264, %s265
      %p276 = scmp.eq.s32.totalorder %s32, 0
      %p277 = por %p275, %p276
      %p278 = scmp.ne.s32.totalorder %s264, %s265
      %p279 = scmp.eq.s32.totalorder %s33, 5
      %p280 = por %p278, %p279
      %p282 = scmp.ne.s32.totalorder %s265, %s281
      %p283 = scmp.eq.s32.totalorder %s33, 0
      %p284 = por %p282, %p283
      %s285 = ssub.s32 %s27, %s34
      %p286 = scmp.eq.s32.totalorder %s285, 0
      %s288 = sadd.s32 %s287, 1
      %s289 = scalar_select %p286, %s287, %s288
      %p292 = pneg %p286
      %p293 = scmp.eq.s32.totalorder %s27, 5
      %p294 = por %p292, %p293
      %p295 = scmp.ne.s32.totalorder %s287, %s290
      %p296 = scmp.eq.s32.totalorder %s27, 0
      %p297 = por %p295, %p296
      %p298 = scmp.ne.s32.totalorder %s287, %s290
      %p299 = scmp.eq.s32.totalorder %s32, 5
      %p300 = por %p298, %p299
      %p301 = scmp.ne.s32.totalorder %s290, %s291
      %p302 = scmp.eq.s32.totalorder %s32, 0
      %p303 = por %p301, %p302
      %p304 = scmp.ne.s32.totalorder %s290, %s291
      %p305 = scmp.eq.s32.totalorder %s33, 5
      %p306 = por %p304, %p305
      %p308 = scmp.ne.s32.totalorder %s291, %s307
      %p309 = scmp.eq.s32.totalorder %s33, 0
      %p310 = por %p308, %p309
      %s311 = ssub.s32 %s27, %s34
      %p312 = scmp.eq.s32.totalorder %s311, 0
      %s314 = sadd.s32 %s313, 1
      %s315 = scalar_select %p312, %s313, %s314
      %p318 = pneg %p312
      %p319 = scmp.eq.s32.totalorder %s27, 5
      %p320 = por %p318, %p319
      %p321 = scmp.ne.s32.totalorder %s313, %s316
      %p322 = scmp.eq.s32.totalorder %s27, 0
      %p323 = por %p321, %p322
      %p324 = scmp.ne.s32.totalorder %s313, %s316
      %p325 = scmp.eq.s32.totalorder %s32, 5
      %p326 = por %p324, %p325
      %p327 = scmp.ne.s32.totalorder %s316, %s317
      %p328 = scmp.eq.s32.totalorder %s32, 0
      %p329 = por %p327, %p328
      %p330 = scmp.ne.s32.totalorder %s316, %s317
      %p331 = scmp.eq.s32.totalorder %s33, 5
      %p332 = por %p330, %p331
      %p334 = scmp.ne.s32.totalorder %s317, %s333
      %p335 = scmp.eq.s32.totalorder %s33, 0
      %p336 = por %p334, %p335
      %s337 = ssub.s32 %s27, %s34
      %p338 = scmp.eq.s32.totalorder %s337, 0
      %s340 = sadd.s32 %s339, 1
      %s341 = scalar_select %p338, %s339, %s340
      %p344 = pneg %p338
      %p345 = scmp.eq.s32.totalorder %s27, 5
      %p346 = por %p344, %p345
      %p347 = scmp.ne.s32.totalorder %s339, %s342
      %p348 = scmp.eq.s32.totalorder %s27, 0
      %p349 = por %p347, %p348
      %p350 = scmp.ne.s32.totalorder %s339, %s342
      %p351 = scmp.eq.s32.totalorder %s32, 5
      %p352 = por %p350, %p351
      %p353 = scmp.ne.s32.totalorder %s342, %s343
      %p354 = scmp.eq.s32.totalorder %s32, 0
      %p355 = por %p353, %p354
      %p356 = scmp.ne.s32.totalorder %s342, %s343
      %p357 = scmp.eq.s32.totalorder %s33, 5
      %p358 = por %p356, %p357
      %p360 = scmp.ne.s32.totalorder %s343, %s359
      %p361 = scmp.eq.s32.totalorder %s33, 0
      %p362 = por %p360, %p361
      %s363 = ssub.s32 %s27, %s34
      %p364 = scmp.eq.s32.totalorder %s363, 0
      %s366 = sadd.s32 %s365, 1
      %s367 = scalar_select %p364, %s365, %s366
      %p370 = pneg %p364
      %p371 = scmp.eq.s32.totalorder %s27, 5
      %p372 = por %p370, %p371
      %p373 = scmp.ne.s32.totalorder %s365, %s368
      %p374 = scmp.eq.s32.totalorder %s27, 0
      %p375 = por %p373, %p374
      %p376 = scmp.ne.s32.totalorder %s365, %s368
      %p377 = scmp.eq.s32.totalorder %s32, 5
      %p378 = por %p376, %p377
      %p379 = scmp.ne.s32.totalorder %s368, %s369
      %p380 = scmp.eq.s32.totalorder %s32, 0
      %p381 = por %p379, %p380
      %p382 = scmp.ne.s32.totalorder %s368, %s369
      %p383 = scmp.eq.s32.totalorder %s33, 5
      %p384 = por %p382, %p383
      %p386 = scmp.ne.s32.totalorder %s369, %s385
      %p387 = scmp.eq.s32.totalorder %s33, 0
      %p388 = por %p386, %p387
      %s389 = ssub.s32 %s27, %s34
      %p390 = scmp.eq.s32.totalorder %s389, 0
      %s392 = sadd.s32 %s391, 1
      %s393 = scalar_select %p390, %s391, %s392
      %p396 = pneg %p390
      %p397 = scmp.eq.s32.totalorder %s27, 5
      %p398 = por %p396, %p397
      %p399 = scmp.ne.s32.totalorder %s391, %s394
      %p400 = scmp.eq.s32.totalorder %s27, 0
      %p401 = por %p399, %p400
      %p402 = scmp.ne.s32.totalorder %s391, %s394
      %p403 = scmp.eq.s32.totalorder %s32, 5
      %p404 = por %p402, %p403
      %p405 = scmp.ne.s32.totalorder %s394, %s395
      %p406 = scmp.eq.s32.totalorder %s32, 0
      %p407 = por %p405, %p406
      %p408 = scmp.ne.s32.totalorder %s394, %s395
      %p409 = scmp.eq.s32.totalorder %s33, 5
      %p410 = por %p408, %p409
      %p412 = scmp.ne.s32.totalorder %s395, %s411
      %p413 = scmp.eq.s32.totalorder %s33, 0
      %p414 = por %p412, %p413
      %s415 = ssub.s32 %s27, %s34
      %p416 = scmp.eq.s32.totalorder %s415, 0
      %s418 = sadd.s32 %s417, 1
      %s419 = scalar_select %p416, %s417, %s418
      %p422 = pneg %p416
      %p423 = scmp.eq.s32.totalorder %s27, 5
      %p424 = por %p422, %p423
      %p425 = scmp.ne.s32.totalorder %s417, %s420
      %p426 = scmp.eq.s32.totalorder %s27, 0
      %p427 = por %p425, %p426
      %p428 = scmp.ne.s32.totalorder %s417, %s420
      %p429 = scmp.eq.s32.totalorder %s32, 5
      %p430 = por %p428, %p429
      %p431 = scmp.ne.s32.totalorder %s420, %s421
      %p432 = scmp.eq.s32.totalorder %s32, 0
      %p433 = por %p431, %p432
      %p434 = scmp.ne.s32.totalorder %s420, %s421
      %p435 = scmp.eq.s32.totalorder %s33, 5
      %p436 = por %p434, %p435
      %p438 = scmp.ne.s32.totalorder %s421, %s437
      %p439 = scmp.eq.s32.totalorder %s33, 0
      %p440 = por %p438, %p439
      %s441 = ssub.s32 %s27, %s34
      %p442 = scmp.eq.s32.totalorder %s441, 0
      %s444 = sadd.s32 %s443, 1
      %s445 = scalar_select %p442, %s443, %s444
      %p448 = pneg %p442
      %p449 = scmp.eq.s32.totalorder %s27, 5
      %p450 = por %p448, %p449
      %p451 = scmp.ne.s32.totalorder %s443, %s446
      %p452 = scmp.eq.s32.totalorder %s27, 0
      %p453 = por %p451, %p452
      %p454 = scmp.ne.s32.totalorder %s443, %s446
      %p455 = scmp.eq.s32.totalorder %s32, 5
      %p456 = por %p454, %p455
      %p457 = scmp.ne.s32.totalorder %s446, %s447
      %p458 = scmp.eq.s32.totalorder %s32, 0
      %p459 = por %p457, %p458
      %p460 = scmp.ne.s32.totalorder %s446, %s447
      %p461 = scmp.eq.s32.totalorder %s33, 5
      %p462 = por %p460, %p461
      %p464 = scmp.ne.s32.totalorder %s447, %s463
      %p465 = scmp.eq.s32.totalorder %s33, 0
      %p466 = por %p464, %p465
      %s467 = ssub.s32 %s27, %s34
      %p468 = scmp.eq.s32.totalorder %s467, 0
      %s470 = sadd.s32 %s469, 1
      %s471 = scalar_select %p468, %s469, %s470
      %p474 = pneg %p468
      %p475 = scmp.eq.s32.totalorder %s27, 5
      %p476 = por %p474, %p475
      %p477 = scmp.ne.s32.totalorder %s469, %s472
      %p478 = scmp.eq.s32.totalorder %s27, 0
      %p479 = por %p477, %p478
      %p480 = scmp.ne.s32.totalorder %s469, %s472
      %p481 = scmp.eq.s32.totalorder %s32, 5
      %p482 = por %p480, %p481
      %p483 = scmp.ne.s32.totalorder %s472, %s473
      %p484 = scmp.eq.s32.totalorder %s32, 0
      %p485 = por %p483, %p484
      %p486 = scmp.ne.s32.totalorder %s472, %s473
      %p487 = scmp.eq.s32.totalorder %s33, 5
      %p488 = por %p486, %p487
      %p490 = scmp.ne.s32.totalorder %s473, %s489
      %p491 = scmp.eq.s32.totalorder %s33, 0
      %p492 = por %p490, %p491
      %s494 = sadd.s32 %s493, 1
      %p497 = scmp.eq.s32.totalorder %s27, 5
      %p498 = scmp.ne.s32.totalorder %s493, %s495
      %p499 = scmp.eq.s32.totalorder %s27, 0
      %p500 = por %p498, %p499
      %p501 = scmp.ne.s32.totalorder %s493, %s495
      %p502 = scmp.eq.s32.totalorder %s32, 5
      %p503 = por %p501, %p502
      %p504 = scmp.ne.s32.totalorder %s495, %s496
      %p505 = scmp.eq.s32.totalorder %s32, 0
      %p506 = por %p504, %p505
      %p507 = scmp.ne.s32.totalorder %s495, %s496
      %p508 = scmp.eq.s32.totalorder %s33, 5
      %p509 = por %p507, %p508
      %p511 = scmp.ne.s32.totalorder %s496, %s510
      %p512 = scmp.eq.s32.totalorder %s33, 0
      %p513 = por %p511, %p512
      %s515 = sadd.s32 %s514, 1
      %p518 = scmp.eq.s32.totalorder %s27, 5
      %p519 = scmp.ne.s32.totalorder %s514, %s516
      %p520 = scmp.eq.s32.totalorder %s27, 0
      %p521 = por %p519, %p520
      %p522 = scmp.ne.s32.totalorder %s514, %s516
      %p523 = scmp.eq.s32.totalorder %s32, 5
      %p524 = por %p522, %p523
      %p525 = scmp.ne.s32.totalorder %s516, %s517
      %p526 = scmp.eq.s32.totalorder %s32, 0
      %p527 = por %p525, %p526
      %p528 = scmp.ne.s32.totalorder %s516, %s517
      %p529 = scmp.eq.s32.totalorder %s33, 5
      %p530 = por %p528, %p529
      %p532 = scmp.ne.s32.totalorder %s517, %s531
      %p533 = scmp.eq.s32.totalorder %s33, 0
      %p534 = por %p532, %p533
      %s536 = sadd.s32 %s535, 1
      %p539 = scmp.eq.s32.totalorder %s27, 5
      %p540 = scmp.ne.s32.totalorder %s535, %s537
      %p541 = scmp.eq.s32.totalorder %s27, 0
      %p542 = por %p540, %p541
      %p543 = scmp.ne.s32.totalorder %s535, %s537
      %p544 = scmp.eq.s32.totalorder %s32, 5
      %p545 = por %p543, %p544
      %p546 = scmp.ne.s32.totalorder %s537, %s538
      %p547 = scmp.eq.s32.totalorder %s32, 0
      %p548 = por %p546, %p547
      %p549 = scmp.ne.s32.totalorder %s537, %s538
      %p550 = scmp.eq.s32.totalorder %s33, 5
      %p551 = por %p549, %p550
      %p553 = scmp.ne.s32.totalorder %s538, %s552
      %p554 = scmp.eq.s32.totalorder %s33, 0
      %p555 = por %p553, %p554
      %p556 = scmp.le.s32.totalorder 1, %s27
      %p557 = scmp.lt.s32.totalorder %s27, 7
      %p558 = pnand %p556, %p557
      %p559 = pneg %p558
      // Predicated region
      $region9: #{tpu_custom_call.1} parent=5 // pred_check
        _
      $region10: #{tpu_custom_call.1} parent=5 // pred_check_branch
        %561 = sbr.rel (%p558) target = $region12
      $region11: #{tpu_custom_call.1} parent=5 // pred_region
        %s562 = ssub.s32 %s27, 1
        // Predicated region
        $region13: #{tpu_custom_call.1} parent=11 // pred_check
          %p563 = pneg %p48
        $region14: #{tpu_custom_call.1} parent=11 // pred_check_branch
          %565 = sbr.rel (%p563) target = $region16
        $region15: #{tpu_custom_call.1} parent=11 // pred_region
          _
        $region16: #{tpu_custom_call.1} parent=11 // pred_fallthru
          _
        // Predicated region
        $region17: #{tpu_custom_call.1} parent=11 // pred_check
          %p566 = pneg %p69
        $region18: #{tpu_custom_call.1} parent=11 // pred_check_branch
          %568 = sbr.rel (%p566) target = $region20
        $region19: #{tpu_custom_call.1} parent=11 // pred_region
          _
        $region20: #{tpu_custom_call.1} parent=11 // pred_fallthru
          _
        // Predicated region
        $region21: #{tpu_custom_call.1} parent=11 // pred_check
          %p569 = pneg %p506
        $region22: #{tpu_custom_call.1} parent=11 // pred_check_branch
          %571 = sbr.rel (%p569) target = $region24
        $region23: #{tpu_custom_call.1} parent=11 // pred_region
          _
        $region24: #{tpu_custom_call.1} parent=11 // pred_fallthru
          _
        // Predicated region
        $region25: #{tpu_custom_call.1} parent=11 // pred_check
          %p572 = pneg %p527
        $region26: #{tpu_custom_call.1} parent=11 // pred_check_branch
          %574 = sbr.rel (%p572) target = $region28
        $region27: #{tpu_custom_call.1} parent=11 // pred_region
          _
        $region28: #{tpu_custom_call.1} parent=11 // pred_fallthru
          _
      $region12: #{tpu_custom_call.1} parent=5 // pred_fallthru
        _
      %p575 = scmp.lt.s32.totalorder %s27, 6
      // Predicated region
      $region29: #{tpu_custom_call.1} parent=5 // pred_check
        %p576 = pneg %p575
      $region30: #{tpu_custom_call.1} parent=5 // pred_check_branch
        %578 = sbr.rel (%p576) target = $region32
      $region31: #{tpu_custom_call.1} parent=5 // pred_region
        // Predicated region
        $region33: #{tpu_custom_call.1} parent=31 // pred_check
          %p579 = pneg %p89
        $region34: #{tpu_custom_call.1} parent=31 // pred_check_branch
          %581 = sbr.rel (%p579) target = $region36
        $region35: #{tpu_custom_call.1} parent=31 // pred_region
          %p582 = scmp.lt.s32.totalorder %s27, 5
          %s583 = scalar_select %p582, %s27, 5
          %s584 = scalar_lea.vmem %s2, %s583
        $region36: #{tpu_custom_call.1} parent=31 // pred_fallthru
          _
        // Predicated region
        $region37: #{tpu_custom_call.1} parent=31 // pred_check
          %p585 = pneg %p115
        $region38: #{tpu_custom_call.1} parent=31 // pred_check_branch
          %587 = sbr.rel (%p585) target = $region40
        $region39: #{tpu_custom_call.1} parent=31 // pred_region
          %p588 = scmp.lt.s32.totalorder %s27, 5
          %s589 = scalar_select %p588, %s27, 5
          %s590 = scalar_lea.vmem %s3, %s589
        $region40: #{tpu_custom_call.1} parent=31 // pred_fallthru
          _
        // Predicated region
        $region41: #{tpu_custom_call.1} parent=31 // pred_check
          %p591 = pneg %p141
        $region42: #{tpu_custom_call.1} parent=31 // pred_check_branch
          %593 = sbr.rel (%p591) target = $region44
        $region43: #{tpu_custom_call.1} parent=31 // pred_region
          %p594 = scmp.lt.s32.totalorder %s27, 5
          %s595 = scalar_select %p594, %s27, 5
          %s596 = smul.addr %s595, 14
          %s597 = smul.addr %s596, 8
          %s598 = scalar_lea.vmem %s4, %s597
        $region44: #{tpu_custom_call.1} parent=31 // pred_fallthru
          _
        // Predicated region
        $region45: #{tpu_custom_call.1} parent=31 // pred_check
          %p599 = pneg %p167
        $region46: #{tpu_custom_call.1} parent=31 // pred_check_branch
          %601 = sbr.rel (%p599) target = $region48
        $region47: #{tpu_custom_call.1} parent=31 // pred_region
          %p602 = scmp.lt.s32.totalorder %s27, 5
          %s603 = scalar_select %p602, %s27, 5
          %s604 = smul.addr %s603, 2
          %s605 = scalar_lea.vmem %s5, %s604
        $region48: #{tpu_custom_call.1} parent=31 // pred_fallthru
          _
        // Predicated region
        $region49: #{tpu_custom_call.1} parent=31 // pred_check
          %p606 = pneg %p193
        $region50: #{tpu_custom_call.1} parent=31 // pred_check_branch
          %608 = sbr.rel (%p606) target = $region52
        $region51: #{tpu_custom_call.1} parent=31 // pred_region
          %p609 = scmp.lt.s32.totalorder %s27, 5
          %s610 = scalar_select %p609, %s27, 5
          %s611 = smul.addr %s610, 14
          %s612 = smul.addr %s611, 8
          %s613 = scalar_lea.vmem %s6, %s612
        $region52: #{tpu_custom_call.1} parent=31 // pred_fallthru
          _
        // Predicated region
        $region53: #{tpu_custom_call.1} parent=31 // pred_check
          %p614 = pneg %p219
        $region54: #{tpu_custom_call.1} parent=31 // pred_check_branch
          %616 = sbr.rel (%p614) target = $region56
        $region55: #{tpu_custom_call.1} parent=31 // pred_region
          %p617 = scmp.lt.s32.totalorder %s27, 5
          %s618 = scalar_select %p617, %s27, 5
          %s619 = smul.addr %s618, 2
          %s620 = scalar_lea.vmem %s7, %s619
        $region56: #{tpu_custom_call.1} parent=31 // pred_fallthru
          _
        // Predicated region
        $region57: #{tpu_custom_call.1} parent=31 // pred_check
          %p621 = pneg %p245
        $region58: #{tpu_custom_call.1} parent=31 // pred_check_branch
          %623 = sbr.rel (%p621) target = $region60
        $region59: #{tpu_custom_call.1} parent=31 // pred_region
          %p624 = scmp.lt.s32.totalorder %s27, 5
          %s625 = scalar_select %p624, %s27, 5
          %s626 = smul.addr %s625, 14
          %s627 = smul.addr %s626, 8
          %s628 = scalar_lea.vmem %s8, %s627
        $region60: #{tpu_custom_call.1} parent=31 // pred_fallthru
          _
        // Predicated region
        $region61: #{tpu_custom_call.1} parent=31 // pred_check
          %p629 = pneg %p271
        $region62: #{tpu_custom_call.1} parent=31 // pred_check_branch
          %631 = sbr.rel (%p629) target = $region64
        $region63: #{tpu_custom_call.1} parent=31 // pred_region
          %p632 = scmp.lt.s32.totalorder %s27, 5
          %s633 = scalar_select %p632, %s27, 5
          %s634 = smul.addr %s633, 2
          %s635 = scalar_lea.vmem %s9, %s634
        $region64: #{tpu_custom_call.1} parent=31 // pred_fallthru
          _
        // Predicated region
        $region65: #{tpu_custom_call.1} parent=31 // pred_check
          %p636 = pneg %p297
        $region66: #{tpu_custom_call.1} parent=31 // pred_check_branch
          %638 = sbr.rel (%p636) target = $region68
        $region67: #{tpu_custom_call.1} parent=31 // pred_region
          %p639 = scmp.lt.s32.totalorder %s27, 5
          %s640 = scalar_select %p639, %s27, 5
          %s641 = smul.addr %s640, 8
          %s642 = smul.addr %s641, 8
          %s643 = scalar_lea.vmem %s10, %s642
        $region68: #{tpu_custom_call.1} parent=31 // pred_fallthru
          _
        // Predicated region
        $region69: #{tpu_custom_call.1} parent=31 // pred_check
          %p644 = pneg %p323
        $region70: #{tpu_custom_call.1} parent=31 // pred_check_branch
          %646 = sbr.rel (%p644) target = $region72
        $region71: #{tpu_custom_call.1} parent=31 // pred_region
          %p647 = scmp.lt.s32.totalorder %s27, 5
          %s648 = scalar_select %p647, %s27, 5
          %s649 = scalar_lea.vmem %s11, %s648
        $region72: #{tpu_custom_call.1} parent=31 // pred_fallthru
          _
        // Predicated region
        $region73: #{tpu_custom_call.1} parent=31 // pred_check
          %p650 = pneg %p349
        $region74: #{tpu_custom_call.1} parent=31 // pred_check_branch
          %652 = sbr.rel (%p650) target = $region76
        $region75: #{tpu_custom_call.1} parent=31 // pred_region
          %p653 = scmp.lt.s32.totalorder %s27, 5
          %s654 = scalar_select %p653, %s27, 5
          %s655 = scalar_lea.vmem %s12, %s654
        $region76: #{tpu_custom_call.1} parent=31 // pred_fallthru
          _
        // Predicated region
        $region77: #{tpu_custom_call.1} parent=31 // pred_check
          %p656 = pneg %p375
        $region78: #{tpu_custom_call.1} parent=31 // pred_check_branch
          %658 = sbr.rel (%p656) target = $region80
        $region79: #{tpu_custom_call.1} parent=31 // pred_region
          %p659 = scmp.lt.s32.totalorder %s27, 5
          %s660 = scalar_select %p659, %s27, 5
          %s661 = scalar_lea.vmem %s13, %s660
        $region80: #{tpu_custom_call.1} parent=31 // pred_fallthru
          _
        // Predicated region
        $region81: #{tpu_custom_call.1} parent=31 // pred_check
          %p662 = pneg %p401
        $region82: #{tpu_custom_call.1} parent=31 // pred_check_branch
          %664 = sbr.rel (%p662) target = $region84
        $region83: #{tpu_custom_call.1} parent=31 // pred_region
          %p665 = scmp.lt.s32.totalorder %s27, 5
          %s666 = scalar_select %p665, %s27, 5
          %s667 = smul.addr %s666, 112
          %s668 = smul.addr %s667, 8
          %s669 = scalar_lea.vmem %s14, %s668
        $region84: #{tpu_custom_call.1} parent=31 // pred_fallthru
          _
        // Predicated region
        $region85: #{tpu_custom_call.1} parent=31 // pred_check
          %p670 = pneg %p427
        $region86: #{tpu_custom_call.1} parent=31 // pred_check_branch
          %672 = sbr.rel (%p670) target = $region88
        $region87: #{tpu_custom_call.1} parent=31 // pred_region
          %p673 = scmp.lt.s32.totalorder %s27, 5
          %s674 = scalar_select %p673, %s27, 5
          %s675 = smul.addr %s674, 16
          %s676 = scalar_lea.vmem %s15, %s675
        $region88: #{tpu_custom_call.1} parent=31 // pred_fallthru
          _
        // Predicated region
        $region89: #{tpu_custom_call.1} parent=31 // pred_check
          %p677 = pneg %p453
        $region90: #{tpu_custom_call.1} parent=31 // pred_check_branch
          %679 = sbr.rel (%p677) target = $region92
        $region91: #{tpu_custom_call.1} parent=31 // pred_region
          %p680 = scmp.lt.s32.totalorder %s27, 5
          %s681 = scalar_select %p680, %s27, 5
          %s682 = smul.addr %s681, 256
          %s683 = smul.addr %s682, 8
          %s684 = scalar_lea.vmem %s16, %s683
        $region92: #{tpu_custom_call.1} parent=31 // pred_fallthru
          _
        // Predicated region
        $region93: #{tpu_custom_call.1} parent=31 // pred_check
          %p685 = pneg %p479
        $region94: #{tpu_custom_call.1} parent=31 // pred_check_branch
          %687 = sbr.rel (%p685) target = $region96
        $region95: #{tpu_custom_call.1} parent=31 // pred_region
          %p688 = scmp.lt.s32.totalorder %s27, 5
          %s689 = scalar_select %p688, %s27, 5
          %s690 = scalar_lea.vmem %s17, %s689
        $region96: #{tpu_custom_call.1} parent=31 // pred_fallthru
          _
      $region32: #{tpu_custom_call.1} parent=5 // pred_fallthru
        _
      %p691 = scmp.le.s32.totalorder 1, %s27
      %p692 = scmp.lt.s32.totalorder %s27, 7
      %p693 = pnand %p691, %p692
      %p694 = pneg %p693
      // Predicated region
      $region97: #{tpu_custom_call.1} parent=5 // pred_check
        _
      $region98: #{tpu_custom_call.1} parent=5 // pred_check_branch
        %696 = sbr.rel (%p693) target = $region100
      $region99: #{tpu_custom_call.1} parent=5 // pred_region
        %s697 = ssub.s32 %s27, 1
        %p698 = pneg %p48
        %p699 = pneg %p45
        %p700 = pneg %p69
        %p701 = pneg %p66
        %p702 = scmp.lt.s32.totalorder %s32, 5
        %s703 = scalar_select %p702, %s32, 5
        %s704 = scalar_lea.vmem %s2, %s703
        %p705 = pneg %p95
        %p706 = pneg %p92
        %p707 = scmp.lt.s32.totalorder %s32, 5
        %s708 = scalar_select %p707, %s32, 5
        %s709 = scalar_lea.vmem %s3, %s708
        %p710 = pneg %p121
        %p711 = pneg %p118
        %p712 = scmp.lt.s32.totalorder %s32, 5
        %s713 = scalar_select %p712, %s32, 5
        %s714 = smul.addr %s713, 14
        %s715 = smul.addr %s714, 8
        %s716 = scalar_lea.vmem %s4, %s715
        %p717 = pneg %p147
        %p718 = pneg %p144
        %p719 = scmp.lt.s32.totalorder %s32, 5
        %s720 = scalar_select %p719, %s32, 5
        %s721 = smul.addr %s720, 2
        %s722 = scalar_lea.vmem %s5, %s721
        %p723 = pneg %p173
        %p724 = pneg %p170
        %p725 = scmp.lt.s32.totalorder %s32, 5
        %s726 = scalar_select %p725, %s32, 5
        %s727 = smul.addr %s726, 14
        %s728 = smul.addr %s727, 8
        %s729 = scalar_lea.vmem %s6, %s728
        %p730 = pneg %p199
        %p731 = pneg %p196
        %p732 = scmp.lt.s32.totalorder %s32, 5
        %s733 = scalar_select %p732, %s32, 5
        %s734 = smul.addr %s733, 2
        %s735 = scalar_lea.vmem %s7, %s734
        %p736 = pneg %p225
        %p737 = pneg %p222
        %p738 = scmp.lt.s32.totalorder %s32, 5
        %s739 = scalar_select %p738, %s32, 5
        %s740 = smul.addr %s739, 14
        %s741 = smul.addr %s740, 8
        %s742 = scalar_lea.vmem %s8, %s741
        %p743 = pneg %p251
        %p744 = pneg %p248
        %p745 = scmp.lt.s32.totalorder %s32, 5
        %s746 = scalar_select %p745, %s32, 5
        %s747 = smul.addr %s746, 2
        %s748 = scalar_lea.vmem %s9, %s747
        %p749 = pneg %p277
        %p750 = pneg %p274
        %p751 = scmp.lt.s32.totalorder %s32, 5
        %s752 = scalar_select %p751, %s32, 5
        %s753 = smul.addr %s752, 8
        %s754 = smul.addr %s753, 8
        %s755 = scalar_lea.vmem %s10, %s754
        %p756 = pneg %p303
        %p757 = pneg %p300
        %p758 = scmp.lt.s32.totalorder %s32, 5
        %s759 = scalar_select %p758, %s32, 5
        %s760 = scalar_lea.vmem %s11, %s759
        %p761 = pneg %p329
        %p762 = pneg %p326
        %p763 = scmp.lt.s32.totalorder %s32, 5
        %s764 = scalar_select %p763, %s32, 5
        %s765 = scalar_lea.vmem %s12, %s764
        %p766 = pneg %p355
        %p767 = pneg %p352
        %p768 = scmp.lt.s32.totalorder %s32, 5
        %s769 = scalar_select %p768, %s32, 5
        %s770 = scalar_lea.vmem %s13, %s769
        %p771 = pneg %p381
        %p772 = pneg %p378
        %p773 = scmp.lt.s32.totalorder %s32, 5
        %s774 = scalar_select %p773, %s32, 5
        %s775 = smul.addr %s774, 112
        %s776 = smul.addr %s775, 8
        %s777 = scalar_lea.vmem %s14, %s776
        %p778 = pneg %p407
        %p779 = pneg %p404
        %p780 = scmp.lt.s32.totalorder %s32, 5
        %s781 = scalar_select %p780, %s32, 5
        %s782 = smul.addr %s781, 16
        %s783 = scalar_lea.vmem %s15, %s782
        %p784 = pneg %p433
        %p785 = pneg %p430
        %p786 = scmp.lt.s32.totalorder %s32, 5
        %s787 = scalar_select %p786, %s32, 5
        %s788 = smul.addr %s787, 256
        %s789 = smul.addr %s788, 8
        %s790 = scalar_lea.vmem %s16, %s789
        %p791 = pneg %p459
        %p792 = pneg %p456
        %p793 = scmp.lt.s32.totalorder %s32, 5
        %s794 = scalar_select %p793, %s32, 5
        %s795 = scalar_lea.vmem %s17, %s794
        %p796 = pneg %p485
        %p797 = pneg %p482
        %p798 = pneg %p506
        %p799 = pneg %p503
        %p800 = pneg %p527
        %p801 = pneg %p524
        %p802 = pneg %p548
        %p803 = pneg %p545
        %p804 = scmp.lt.s32.totalorder %s32, 5
        %s805 = scalar_select %p804, %s32, 5
        %s806 = scalar_lea.vmem %s2, %s805
        %p807 = scmp.lt.s32.totalorder %s32, 5
        %s808 = scalar_select %p807, %s32, 5
        %s809 = scalar_lea.vmem %s3, %s808
        %p810 = scmp.lt.s32.totalorder %s32, 5
        %s811 = scalar_select %p810, %s32, 5
        %s812 = smul.addr %s811, 14
        %s813 = smul.addr %s812, 8
        %s814 = scalar_lea.vmem %s4, %s813
        %p815 = scmp.lt.s32.totalorder %s32, 5
        %s816 = scalar_select %p815, %s32, 5
        %s817 = smul.addr %s816, 2
        %s818 = scalar_lea.vmem %s5, %s817
        %p819 = scmp.lt.s32.totalorder %s32, 5
        %s820 = scalar_select %p819, %s32, 5
        %s821 = smul.addr %s820, 14
        %s822 = smul.addr %s821, 8
        %s823 = scalar_lea.vmem %s6, %s822
        %p824 = scmp.lt.s32.totalorder %s32, 5
        %s825 = scalar_select %p824, %s32, 5
        %s826 = smul.addr %s825, 2
        %s827 = scalar_lea.vmem %s7, %s826
        %p828 = scmp.lt.s32.totalorder %s32, 5
        %s829 = scalar_select %p828, %s32, 5
        %s830 = smul.addr %s829, 14
        %s831 = smul.addr %s830, 8
        %s832 = scalar_lea.vmem %s8, %s831
        %p833 = scmp.lt.s32.totalorder %s32, 5
        %s834 = scalar_select %p833, %s32, 5
        %s835 = smul.addr %s834, 2
        %s836 = scalar_lea.vmem %s9, %s835
        %p837 = scmp.lt.s32.totalorder %s32, 5
        %s838 = scalar_select %p837, %s32, 5
        %s839 = smul.addr %s838, 8
        %s840 = smul.addr %s839, 8
        %s841 = scalar_lea.vmem %s10, %s840
        %p842 = scmp.lt.s32.totalorder %s32, 5
        %s843 = scalar_select %p842, %s32, 5
        %s844 = scalar_lea.vmem %s11, %s843
        %p845 = scmp.lt.s32.totalorder %s32, 5
        %s846 = scalar_select %p845, %s32, 5
        %s847 = scalar_lea.vmem %s12, %s846
        %p848 = scmp.lt.s32.totalorder %s32, 5
        %s849 = scalar_select %p848, %s32, 5
        %s850 = scalar_lea.vmem %s13, %s849
        %p851 = scmp.lt.s32.totalorder %s32, 5
        %s852 = scalar_select %p851, %s32, 5
        %s853 = smul.addr %s852, 112
        %s854 = smul.addr %s853, 8
        %s855 = scalar_lea.vmem %s14, %s854
        %p856 = scmp.lt.s32.totalorder %s32, 5
        %s857 = scalar_select %p856, %s32, 5
        %s858 = smul.addr %s857, 16
        %s859 = scalar_lea.vmem %s15, %s858
        %p860 = scmp.lt.s32.totalorder %s32, 5
        %s861 = scalar_select %p860, %s32, 5
        %s862 = smul.addr %s861, 256
        %s863 = smul.addr %s862, 8
        %s864 = scalar_lea.vmem %s16, %s863
        %p865 = scmp.lt.s32.totalorder %s32, 5
        %s866 = scalar_select %p865, %s32, 5
        %s867 = scalar_lea.vmem %s17, %s866
        %p868 = scmp.eq.s32.totalorder %s32, 0
        // Predicated region
        $region101: #{tpu_custom_call.1} parent=99 // pred_check
          %p869 = pneg %p868
        $region102: #{tpu_custom_call.1} parent=99 // pred_check_branch
          %871 = sbr.rel (%p869) target = $region104
        $region103: #{tpu_custom_call.1} parent=99 // pred_region
          %v872 = vld [vmem:[%s0] sm:$0xff]
          %v873 = vld [vmem:[%s0 + $0x8] sm:$0xff]
          %vm874 = vcmask 408576
          %875 = vst.msk [vmem:[#allocation2] sm:$0xff] %vm874, %v872
          %876 = vst.msk [vmem:[#allocation2 + $0x8] sm:$0xff] %vm874, %v873
        $region104: #{tpu_custom_call.1} parent=99 // pred_fallthru
          _
        %v877 = vld [vmem:[#allocation2] sm:$0xff]
        %v878 = vld [vmem:[#allocation2 + $0x8] sm:$0xff]
        %v879 = vld [vmem:[%s1] sm:$0xff]
        %v880 = vld [vmem:[%s1 + $0x8] sm:$0xff]
        %v881 = vld [vmem:[%s806] sm:$0x1]
        %v882 = vld [vmem:[%s809] sm:$0x1]
        %vm883 = vcmask 408576
        %v884 = vsel %vm883, %v877, 0.0
        %885 = vadd.xlane.f32.xlu0 %v884
        %v886 = vpop.xlane.xlu0 %885
        %v887 = vsel %vm883, %v878, 0.0
        %888 = vadd.xlane.f32.xlu0 %v887
        %v889 = vpop.xlane.xlu0 %888
        %v890 = vrcp.pop 50.0
        %v891 = vmul.f32 50.0, %v890
        %v892 = vsub.f32 1.0, %v891
        %v893 = vmul.f32 %v890, %v892
        %v894 = vadd.f32 %v890, %v893
        %vm895 = vweird.f32 %v890
        %v896 = vsel %vm895, %v890, %v894
        %v897 = vmul.f32 %v886, %v896
        %v898 = vmul.f32 %v889, %v896
        %v899 = vsub.f32 %v877, %v897
        %v900 = vsub.f32 %v878, %v898
        %v901 = vmul.f32 %v899, %v899
        %v902 = vmul.f32 %v900, %v900
        %v903 = vsel %vm883, %v901, 0.0
        %904 = vadd.xlane.f32.xlu0 %v903
        %v905 = vpop.xlane.xlu0 %904
        %v906 = vsel %vm883, %v902, 0.0
        %907 = vadd.xlane.f32.xlu0 %v906
        %v908 = vpop.xlane.xlu0 %907
        %v909 = vrcp.pop 49.0
        %v910 = vmul.f32 49.0, %v909
        %v911 = vsub.f32 1.0, %v910
        %v912 = vmul.f32 %v909, %v911
        %v913 = vadd.f32 %v909, %v912
        %vm914 = vweird.f32 %v909
        %v915 = vsel %vm914, %v909, %v913
        %v916 = vmul.f32 %v905, %v915
        %v917 = vmul.f32 %v908, %v915
        %v918 = vrsqrt.pop %v916
        %v919 = vmul.f32 %v918, %v916
        %v920 = vmul.f32 %v919, %v918
        %v921 = vmul.f32 0.5, %v920
        %v922 = vsub.f32 1.5, %v921
        %v923 = vmul.f32 %v918, %v922
        %v924 = vmul.f32 %v916, %v923
        %vm925 = vcmp.eq.f32.partialorder %v916, inf
        %v926 = vsel %vm925, %v916, %v924
        %vm927 = vcmp.eq.f32.partialorder %v916, 0.0
        %v928 = vand.u32 %v916, 2147483648
        %v929 = vsel %vm927, %v928, %v926
        %v930 = vrsqrt.pop %v917
        %v931 = vmul.f32 %v930, %v917
        %v932 = vmul.f32 %v931, %v930
        %v933 = vmul.f32 0.5, %v932
        %v934 = vsub.f32 1.5, %v933
        %v935 = vmul.f32 %v930, %v934
        %v936 = vmul.f32 %v917, %v935
        %vm937 = vcmp.eq.f32.partialorder %v917, inf
        %v938 = vsel %vm937, %v917, %v936
        %vm939 = vcmp.eq.f32.partialorder %v917, 0.0
        %v940 = vand.u32 %v917, 2147483648
        %v941 = vsel %vm939, %v940, %v938
        %v943 = vperm.slane %v881, 0
        %v945 = vmul.f32 %v943, %v899
        %v946 = vmul.f32 %v943, %v900
        %v947 = vadd.f32 %v929, 1e-06
        %v948 = vadd.f32 %v941, 1e-06
        %v949 = vrcp.pop %v947
        %v950 = vmul.f32 %v947, %v949
        %v951 = vsub.f32 1.0, %v950
        %v952 = vmul.f32 %v949, %v951
        %v953 = vadd.f32 %v949, %v952
        %vm954 = vweird.f32 %v947
        %vm955 = vweird.f32 %v949
        %vm956 = vmor %vm954, %vm955
        %v957 = vsel %vm956, %v949, %v953
        %v958 = vand.u32 2147483647, %v947
        %vm959 = vcmp.eq.f32.partialorder %v958, 8.507059e+37
        %v960 = vand.u32 %v947, 2147483648
        %v961 = vor.u32 1.1754944e-38, %v960
        %v962 = vsel %vm959, %v961, %v957
        %v963 = vmul.f32 %v945, %v962
        %v964 = vrcp.pop %v948
        %v965 = vmul.f32 %v948, %v964
        %v966 = vsub.f32 1.0, %v965
        %v967 = vmul.f32 %v964, %v966
        %v968 = vadd.f32 %v964, %v967
        %vm969 = vweird.f32 %v948
        %vm970 = vweird.f32 %v964
        %vm971 = vmor %vm969, %vm970
        %v972 = vsel %vm971, %v964, %v968
        %v973 = vand.u32 2147483647, %v948
        %vm974 = vcmp.eq.f32.partialorder %v973, 8.507059e+37
        %v975 = vand.u32 %v948, 2147483648
        %v976 = vor.u32 1.1754944e-38, %v975
        %v977 = vsel %vm974, %v976, %v972
        %v978 = vmul.f32 %v946, %v977
        %v980 = vperm.slane %v882, 0
        %v982 = vadd.f32 %v963, %v980
        %v983 = vadd.f32 %v978, %v980
        %v984 = vld [vmem:[%s814] sm:$0xff]
        %v985 = vld [vmem:[%s814 + $0x8] sm:$0xff]
        %v986 = vld [vmem:[%s814 + $0x10] sm:$0xff]
        %v987 = vld [vmem:[%s814 + $0x18] sm:$0xff]
        %v988 = vld [vmem:[%s814 + $0x20] sm:$0xff]
        %v989 = vld [vmem:[%s814 + $0x28] sm:$0xff]
        %v990 = vld [vmem:[%s814 + $0x30] sm:$0x3]
        %v991 = vld [vmem:[%s818] sm:$0x1]
        %v993 = vperm.slane %v991, 0
        %v996 = vsel %vm883, %v982, 0
        %v999 = vsel %vm883, %v983, 0
        %vm1001 = vcmask 1041408
        %v1003 = vsel %vm1001, %v990, 0
        %1005 = vmatpush.msra.mxu0 0.0
        %1006 = vmatpush.msra.mxu0 0.0
        %1007 = vmatpush.msra.mxu0 0.0
        %1008 = vmatpush.msra.mxu0 0.0
        %1009 = vmatpush.msra.mxu0 0.0
        %1010 = vmatpush.msra.mxu0 0.0
        %1011 = vmatpush.msra.mxu0 0.0
        %1012 = vmatpush.msra.mxu0 0.0
        %1013 = vmatpush.msra.mxu0 0.0
        %1014 = vmatpush.msra.mxu0 %v1003
        %1015 = vmatpush.msra.mxu0 %v989
        %1016 = vmatpush.msra.mxu0 %v988
        %1017 = vmatpush.msra.mxu0 %v987
        %1018 = vmatpush.msra.mxu0 %v986
        %1019 = vmatpush.msra.mxu0 %v985
        %1020 = vmatpush.msra.mxu0 %v984
        %1021 = vmatmul.f32.gmra.mxu0 %v996
        %v1022 = vpop.f32.mrf.mxu0
        %v1023 = vadd.f32 %v993, %v1022
        %1024 = vmatmul.f32.gmra.mxu0 %v999
        %v1025 = vpop.f32.mrf.mxu0
        %v1026 = vadd.f32 %v993, %v1025
        %1027 = vdwg.mxu0
        %v1028 = vld [vmem:[%s823] sm:$0xff]
        %v1029 = vld [vmem:[%s823 + $0x8] sm:$0xff]
        %v1030 = vld [vmem:[%s823 + $0x10] sm:$0xff]
        %v1031 = vld [vmem:[%s823 + $0x18] sm:$0xff]
        %v1032 = vld [vmem:[%s823 + $0x20] sm:$0xff]
        %v1033 = vld [vmem:[%s823 + $0x28] sm:$0xff]
        %v1034 = vld [vmem:[%s823 + $0x30] sm:$0x3]
        %v1035 = vld [vmem:[%s827] sm:$0x1]
        %v1037 = vperm.slane %v1035, 0
        %v1040 = vsel %vm1001, %v1034, 0
        %1042 = vmatpush.msra.mxu0 0.0
        %1043 = vmatpush.msra.mxu0 0.0
        %1044 = vmatpush.msra.mxu0 0.0
        %1045 = vmatpush.msra.mxu0 0.0
        %1046 = vmatpush.msra.mxu0 0.0
        %1047 = vmatpush.msra.mxu0 0.0
        %1048 = vmatpush.msra.mxu0 0.0
        %1049 = vmatpush.msra.mxu0 0.0
        %1050 = vmatpush.msra.mxu0 0.0
        %1051 = vmatpush.msra.mxu0 %v1040
        %1052 = vmatpush.msra.mxu0 %v1033
        %1053 = vmatpush.msra.mxu0 %v1032
        %1054 = vmatpush.msra.mxu0 %v1031
        %1055 = vmatpush.msra.mxu0 %v1030
        %1056 = vmatpush.msra.mxu0 %v1029
        %1057 = vmatpush.msra.mxu0 %v1028
        %1058 = vmatmul.f32.gmra.mxu0 %v996
        %v1059 = vpop.f32.mrf.mxu0
        %v1060 = vadd.f32 %v1037, %v1059
        %1061 = vmatmul.f32.gmra.mxu0 %v999
        %v1062 = vpop.f32.mrf.mxu0
        %v1063 = vadd.f32 %v1037, %v1062
        %1064 = vdwg.mxu0
        %v1065 = vld [vmem:[%s832] sm:$0xff]
        %v1066 = vld [vmem:[%s832 + $0x8] sm:$0xff]
        %v1067 = vld [vmem:[%s832 + $0x10] sm:$0xff]
        %v1068 = vld [vmem:[%s832 + $0x18] sm:$0xff]
        %v1069 = vld [vmem:[%s832 + $0x20] sm:$0xff]
        %v1070 = vld [vmem:[%s832 + $0x28] sm:$0xff]
        %v1071 = vld [vmem:[%s832 + $0x30] sm:$0x3]
        %v1072 = vld [vmem:[%s836] sm:$0x1]
        %v1074 = vperm.slane %v1072, 0
        %v1077 = vsel %vm1001, %v1071, 0
        %1079 = vmatpush.msra.mxu0 0.0
        %1080 = vmatpush.msra.mxu0 0.0
        %1081 = vmatpush.msra.mxu0 0.0
        %1082 = vmatpush.msra.mxu0 0.0
        %1083 = vmatpush.msra.mxu0 0.0
        %1084 = vmatpush.msra.mxu0 0.0
        %1085 = vmatpush.msra.mxu0 0.0
        %1086 = vmatpush.msra.mxu0 0.0
        %1087 = vmatpush.msra.mxu0 0.0
        %1088 = vmatpush.msra.mxu0 %v1077
        %1089 = vmatpush.msra.mxu0 %v1070
        %1090 = vmatpush.msra.mxu0 %v1069
        %1091 = vmatpush.msra.mxu0 %v1068
        %1092 = vmatpush.msra.mxu0 %v1067
        %1093 = vmatpush.msra.mxu0 %v1066
        %1094 = vmatpush.msra.mxu0 %v1065
        %1095 = vmatmul.f32.gmra.mxu0 %v996
        %v1096 = vpop.f32.mrf.mxu0
        %v1097 = vadd.f32 %v1074, %v1096
        %1098 = vmatmul.f32.gmra.mxu0 %v999
        %v1099 = vpop.f32.mrf.mxu0
        %v1100 = vadd.f32 %v1074, %v1099
        %1101 = vdwg.mxu0
        %vm1102 = vcmask 203776
        %v1104 = vsel %vm1102, %v1023, 0
        %v1107 = vsel %vm1102, %v1060, 0
        %1109 = vmatpush.xpose.msra.mxu0 0.0
        %1110 = vmatpush.xpose.msra.mxu0 0.0
        %1111 = vmatpush.xpose.msra.mxu0 0.0
        %1112 = vmatpush.xpose.msra.mxu0 0.0
        %1113 = vmatpush.xpose.msra.mxu0 0.0
        %1114 = vmatpush.xpose.msra.mxu0 0.0
        %1115 = vmatpush.xpose.msra.mxu0 0.0
        %1116 = vmatpush.xpose.msra.mxu0 0.0
        %1117 = vmatpush.xpose.msra.mxu0 0.0
        %1118 = vmatpush.xpose.msra.mxu0 0.0
        %1119 = vmatpush.xpose.msra.mxu0 0.0
        %1120 = vmatpush.xpose.msra.mxu0 0.0
        %1121 = vmatpush.xpose.msra.mxu0 0.0
        %1122 = vmatpush.xpose.msra.mxu0 0.0
        %1123 = vmatpush.xpose.msra.mxu0 0.0
        %1124 = vmatpush.xpose.msra.mxu0 %v1107
        %1125 = vmatmul.f32.gmra.mxu0 %v1104
        %v1126 = vpop.f32.mrf.mxu0
        %v1127 = vadd.f32 0.0, %v1126
        %1128 = vdwg.mxu0
        %v1130 = vsel %vm1102, %v1026, 0
        %v1133 = vsel %vm1102, %v1063, 0
        %1135 = vmatpush.xpose.msra.mxu0 0.0
        %1136 = vmatpush.xpose.msra.mxu0 0.0
        %1137 = vmatpush.xpose.msra.mxu0 0.0
        %1138 = vmatpush.xpose.msra.mxu0 0.0
        %1139 = vmatpush.xpose.msra.mxu0 0.0
        %1140 = vmatpush.xpose.msra.mxu0 0.0
        %1141 = vmatpush.xpose.msra.mxu0 0.0
        %1142 = vmatpush.xpose.msra.mxu0 0.0
        %1143 = vmatpush.xpose.msra.mxu0 0.0
        %1144 = vmatpush.xpose.msra.mxu0 0.0
        %1145 = vmatpush.xpose.msra.mxu0 0.0
        %1146 = vmatpush.xpose.msra.mxu0 0.0
        %1147 = vmatpush.xpose.msra.mxu0 0.0
        %1148 = vmatpush.xpose.msra.mxu0 0.0
        %1149 = vmatpush.xpose.msra.mxu0 0.0
        %1150 = vmatpush.xpose.msra.mxu0 %v1133
        %1151 = vmatmul.f32.gmra.mxu0 %v1130
        %v1152 = vpop.f32.mrf.mxu0
        %v1153 = vadd.f32 0.0, %v1152
        %1154 = vdwg.mxu0
        %v1155 = vmul.f32 %v1127, 0.2
        %v1156 = vmul.f32 %v1153, 0.2
        %v1157 = vadd.f32 %v1155, %v879
        %v1158 = vadd.f32 %v1156, %v880
        %vm1159 = vcmask 64512
        %v1160 = vsel %vm1159, %v1157, -inf
        %1161 = vmax.xlane.f32.xlu0 %v1160
        %v1162 = vpop.xlane.xlu0 %1161
        %v1163 = vsel %vm1159, %v1158, -inf
        %1164 = vmax.xlane.f32.xlu0 %v1163
        %v1165 = vpop.xlane.xlu0 %1164
        %v1166 = vsub.f32 %v1157, %v1162
        %v1167 = vsub.f32 %v1158, %v1165
        %v1168 = vmul.f32 %v1166, 1.442695
        %v1169 = vpow.pop %v1168
        %v1170 = vmul.f32 %v1167, 1.442695
        %v1171 = vpow.pop %v1170
        %v1172 = vsel %vm1159, %v1169, 0.0
        %1173 = vadd.xlane.f32.xlu0 %v1172
        %v1174 = vpop.xlane.xlu0 %1173
        %v1175 = vsel %vm1159, %v1171, 0.0
        %1176 = vadd.xlane.f32.xlu0 %v1175
        %v1177 = vpop.xlane.xlu0 %1176
        %v1178 = vrcp.pop %v1174
        %v1179 = vrcp.pop %v1177
        %v1180 = vmul.f32 %v1169, %v1178
        %v1181 = vmul.f32 %v1171, %v1179
        %v1183 = vsel %vm1159, %v1180, 0
        %1185 = vmatpush.msra.mxu0 0.0
        %1186 = vmatpush.msra.mxu0 0.0
        %1187 = vmatpush.msra.mxu0 0.0
        %1188 = vmatpush.msra.mxu0 0.0
        %1189 = vmatpush.msra.mxu0 0.0
        %1190 = vmatpush.msra.mxu0 0.0
        %1191 = vmatpush.msra.mxu0 0.0
        %1192 = vmatpush.msra.mxu0 0.0
        %1193 = vmatpush.msra.mxu0 0.0
        %1194 = vmatpush.msra.mxu0 0.0
        %1195 = vmatpush.msra.mxu0 0.0
        %1196 = vmatpush.msra.mxu0 0.0
        %1197 = vmatpush.msra.mxu0 0.0
        %1198 = vmatpush.msra.mxu0 0.0
        %1199 = vmatpush.msra.mxu0 0.0
        %1200 = vmatpush.msra.mxu0 %v1097
        %1201 = vmatmul.f32.gmra.mxu0 %v1183
        %v1202 = vpop.f32.mrf.mxu0
        %v1203 = vadd.f32 0.0, %v1202
        %1204 = vdwg.mxu0
        %v1206 = vsel %vm1159, %v1181, 0
        %1208 = vmatpush.msra.mxu0 0.0
        %1209 = vmatpush.msra.mxu0 0.0
        %1210 = vmatpush.msra.mxu0 0.0
        %1211 = vmatpush.msra.mxu0 0.0
        %1212 = vmatpush.msra.mxu0 0.0
        %1213 = vmatpush.msra.mxu0 0.0
        %1214 = vmatpush.msra.mxu0 0.0
        %1215 = vmatpush.msra.mxu0 0.0
        %1216 = vmatpush.msra.mxu0 0.0
        %1217 = vmatpush.msra.mxu0 0.0
        %1218 = vmatpush.msra.mxu0 0.0
        %1219 = vmatpush.msra.mxu0 0.0
        %1220 = vmatpush.msra.mxu0 0.0
        %1221 = vmatpush.msra.mxu0 0.0
        %1222 = vmatpush.msra.mxu0 0.0
        %1223 = vmatpush.msra.mxu0 %v1100
        %1224 = vmatmul.f32.gmra.mxu0 %v1206
        %v1225 = vpop.f32.mrf.mxu0
        %v1226 = vadd.f32 0.0, %v1225
        %1227 = vdwg.mxu0
        %v1228 = vld [vmem:[%s841] sm:$0xff]
        %v1229 = vld [vmem:[%s841 + $0x8] sm:$0xff]
        %v1230 = vld [vmem:[%s841 + $0x10] sm:$0xff]
        %v1231 = vld [vmem:[%s841 + $0x18] sm:$0x1]
        %s1232 = scalar_lea.vmem %s814, 56
        %v1233 = vld [vmem:[%s1232] sm:$0xff]
        %v1234 = vld [vmem:[%s1232 + $0x8] sm:$0xff]
        %v1235 = vld [vmem:[%s1232 + $0x10] sm:$0xff]
        %v1236 = vld [vmem:[%s1232 + $0x18] sm:$0xff]
        %v1237 = vld [vmem:[%s1232 + $0x20] sm:$0xff]
        %v1238 = vld [vmem:[%s1232 + $0x28] sm:$0xff]
        %v1239 = vld [vmem:[%s1232 + $0x30] sm:$0x3]
        %s1240 = scalar_lea.vmem %s818, 1
        %v1241 = vld [vmem:[%s1240] sm:$0x1]
        %v1243 = vperm.slane %v1241, 0
        %v1246 = vsel %vm1001, %v1239, 0
        %1248 = vmatpush.msra.mxu0 0.0
        %1249 = vmatpush.msra.mxu0 0.0
        %1250 = vmatpush.msra.mxu0 0.0
        %1251 = vmatpush.msra.mxu0 0.0
        %1252 = vmatpush.msra.mxu0 0.0
        %1253 = vmatpush.msra.mxu0 0.0
        %1254 = vmatpush.msra.mxu0 0.0
        %1255 = vmatpush.msra.mxu0 0.0
        %1256 = vmatpush.msra.mxu0 0.0
        %1257 = vmatpush.msra.mxu0 %v1246
        %1258 = vmatpush.msra.mxu0 %v1238
        %1259 = vmatpush.msra.mxu0 %v1237
        %1260 = vmatpush.msra.mxu0 %v1236
        %1261 = vmatpush.msra.mxu0 %v1235
        %1262 = vmatpush.msra.mxu0 %v1234
        %1263 = vmatpush.msra.mxu0 %v1233
        %1264 = vmatmul.f32.gmra.mxu0 %v996
        %v1265 = vpop.f32.mrf.mxu0
        %v1266 = vadd.f32 %v1243, %v1265
        %1267 = vmatmul.f32.gmra.mxu0 %v999
        %v1268 = vpop.f32.mrf.mxu0
        %v1269 = vadd.f32 %v1243, %v1268
        %1270 = vdwg.mxu0
        %s1271 = scalar_lea.vmem %s823, 56
        %v1272 = vld [vmem:[%s1271] sm:$0xff]
        %v1273 = vld [vmem:[%s1271 + $0x8] sm:$0xff]
        %v1274 = vld [vmem:[%s1271 + $0x10] sm:$0xff]
        %v1275 = vld [vmem:[%s1271 + $0x18] sm:$0xff]
        %v1276 = vld [vmem:[%s1271 + $0x20] sm:$0xff]
        %v1277 = vld [vmem:[%s1271 + $0x28] sm:$0xff]
        %v1278 = vld [vmem:[%s1271 + $0x30] sm:$0x3]
        %s1279 = scalar_lea.vmem %s827, 1
        %v1280 = vld [vmem:[%s1279] sm:$0x1]
        %v1282 = vperm.slane %v1280, 0
        %v1285 = vsel %vm1001, %v1278, 0
        %1287 = vmatpush.msra.mxu0 0.0
        %1288 = vmatpush.msra.mxu0 0.0
        %1289 = vmatpush.msra.mxu0 0.0
        %1290 = vmatpush.msra.mxu0 0.0
        %1291 = vmatpush.msra.mxu0 0.0
        %1292 = vmatpush.msra.mxu0 0.0
        %1293 = vmatpush.msra.mxu0 0.0
        %1294 = vmatpush.msra.mxu0 0.0
        %1295 = vmatpush.msra.mxu0 0.0
        %1296 = vmatpush.msra.mxu0 %v1285
        %1297 = vmatpush.msra.mxu0 %v1277
        %1298 = vmatpush.msra.mxu0 %v1276
        %1299 = vmatpush.msra.mxu0 %v1275
        %1300 = vmatpush.msra.mxu0 %v1274
        %1301 = vmatpush.msra.mxu0 %v1273
        %1302 = vmatpush.msra.mxu0 %v1272
        %1303 = vmatmul.f32.gmra.mxu0 %v996
        %v1304 = vpop.f32.mrf.mxu0
        %v1305 = vadd.f32 %v1282, %v1304
        %1306 = vmatmul.f32.gmra.mxu0 %v999
        %v1307 = vpop.f32.mrf.mxu0
        %v1308 = vadd.f32 %v1282, %v1307
        %1309 = vdwg.mxu0
        %s1310 = scalar_lea.vmem %s832, 56
        %v1311 = vld [vmem:[%s1310] sm:$0xff]
        %v1312 = vld [vmem:[%s1310 + $0x8] sm:$0xff]
        %v1313 = vld [vmem:[%s1310 + $0x10] sm:$0xff]
        %v1314 = vld [vmem:[%s1310 + $0x18] sm:$0xff]
        %v1315 = vld [vmem:[%s1310 + $0x20] sm:$0xff]
        %v1316 = vld [vmem:[%s1310 + $0x28] sm:$0xff]
        %v1317 = vld [vmem:[%s1310 + $0x30] sm:$0x3]
        %s1318 = scalar_lea.vmem %s836, 1
        %v1319 = vld [vmem:[%s1318] sm:$0x1]
        %v1321 = vperm.slane %v1319, 0
        %v1324 = vsel %vm1001, %v1317, 0
        %1326 = vmatpush.msra.mxu0 0.0
        %1327 = vmatpush.msra.mxu0 0.0
        %1328 = vmatpush.msra.mxu0 0.0
        %1329 = vmatpush.msra.mxu0 0.0
        %1330 = vmatpush.msra.mxu0 0.0
        %1331 = vmatpush.msra.mxu0 0.0
        %1332 = vmatpush.msra.mxu0 0.0
        %1333 = vmatpush.msra.mxu0 0.0
        %1334 = vmatpush.msra.mxu0 0.0
        %1335 = vmatpush.msra.mxu0 %v1324
        %1336 = vmatpush.msra.mxu0 %v1316
        %1337 = vmatpush.msra.mxu0 %v1315
        %1338 = vmatpush.msra.mxu0 %v1314
        %1339 = vmatpush.msra.mxu0 %v1313
        %1340 = vmatpush.msra.mxu0 %v1312
        %1341 = vmatpush.msra.mxu0 %v1311
        %1342 = vmatmul.f32.gmra.mxu0 %v996
        %v1343 = vpop.f32.mrf.mxu0
        %v1344 = vadd.f32 %v1321, %v1343
        %1345 = vmatmul.f32.gmra.mxu0 %v999
        %v1346 = vpop.f32.mrf.mxu0
        %v1347 = vadd.f32 %v1321, %v1346
        %1348 = vdwg.mxu0
        %v1350 = vsel %vm1102, %v1266, 0
        %v1353 = vsel %vm1102, %v1305, 0
        %1355 = vmatpush.xpose.msra.mxu0 0.0
        %1356 = vmatpush.xpose.msra.mxu0 0.0
        %1357 = vmatpush.xpose.msra.mxu0 0.0
        %1358 = vmatpush.xpose.msra.mxu0 0.0
        %1359 = vmatpush.xpose.msra.mxu0 0.0
        %1360 = vmatpush.xpose.msra.mxu0 0.0
        %1361 = vmatpush.xpose.msra.mxu0 0.0
        %1362 = vmatpush.xpose.msra.mxu0 0.0
        %1363 = vmatpush.xpose.msra.mxu0 0.0
        %1364 = vmatpush.xpose.msra.mxu0 0.0
        %1365 = vmatpush.xpose.msra.mxu0 0.0
        %1366 = vmatpush.xpose.msra.mxu0 0.0
        %1367 = vmatpush.xpose.msra.mxu0 0.0
        %1368 = vmatpush.xpose.msra.mxu0 0.0
        %1369 = vmatpush.xpose.msra.mxu0 0.0
        %1370 = vmatpush.xpose.msra.mxu0 %v1353
        %1371 = vmatmul.f32.gmra.mxu0 %v1350
        %v1372 = vpop.f32.mrf.mxu0
        %v1373 = vadd.f32 0.0, %v1372
        %1374 = vdwg.mxu0
        %v1376 = vsel %vm1102, %v1269, 0
        %v1379 = vsel %vm1102, %v1308, 0
        %1381 = vmatpush.xpose.msra.mxu0 0.0
        %1382 = vmatpush.xpose.msra.mxu0 0.0
        %1383 = vmatpush.xpose.msra.mxu0 0.0
        %1384 = vmatpush.xpose.msra.mxu0 0.0
        %1385 = vmatpush.xpose.msra.mxu0 0.0
        %1386 = vmatpush.xpose.msra.mxu0 0.0
        %1387 = vmatpush.xpose.msra.mxu0 0.0
        %1388 = vmatpush.xpose.msra.mxu0 0.0
        %1389 = vmatpush.xpose.msra.mxu0 0.0
        %1390 = vmatpush.xpose.msra.mxu0 0.0
        %1391 = vmatpush.xpose.msra.mxu0 0.0
        %1392 = vmatpush.xpose.msra.mxu0 0.0
        %1393 = vmatpush.xpose.msra.mxu0 0.0
        %1394 = vmatpush.xpose.msra.mxu0 0.0
        %1395 = vmatpush.xpose.msra.mxu0 0.0
        %1396 = vmatpush.xpose.msra.mxu0 %v1379
        %1397 = vmatmul.f32.gmra.mxu0 %v1376
        %v1398 = vpop.f32.mrf.mxu0
        %v1399 = vadd.f32 0.0, %v1398
        %1400 = vdwg.mxu0
        %v1401 = vmul.f32 %v1373, 0.2
        %v1402 = vmul.f32 %v1399, 0.2
        %v1403 = vadd.f32 %v1401, %v879
        %v1404 = vadd.f32 %v1402, %v880
        %v1405 = vsel %vm1159, %v1403, -inf
        %1406 = vmax.xlane.f32.xlu0 %v1405
        %v1407 = vpop.xlane.xlu0 %1406
        %v1408 = vsel %vm1159, %v1404, -inf
        %1409 = vmax.xlane.f32.xlu0 %v1408
        %v1410 = vpop.xlane.xlu0 %1409
        %v1411 = vsub.f32 %v1403, %v1407
        %v1412 = vsub.f32 %v1404, %v1410
        %v1413 = vmul.f32 %v1411, 1.442695
        %v1414 = vpow.pop %v1413
        %v1415 = vmul.f32 %v1412, 1.442695
        %v1416 = vpow.pop %v1415
        %v1417 = vsel %vm1159, %v1414, 0.0
        %1418 = vadd.xlane.f32.xlu0 %v1417
        %v1419 = vpop.xlane.xlu0 %1418
        %v1420 = vsel %vm1159, %v1416, 0.0
        %1421 = vadd.xlane.f32.xlu0 %v1420
        %v1422 = vpop.xlane.xlu0 %1421
        %v1423 = vrcp.pop %v1419
        %v1424 = vrcp.pop %v1422
        %v1425 = vmul.f32 %v1414, %v1423
        %v1426 = vmul.f32 %v1416, %v1424
        %v1428 = vsel %vm1159, %v1425, 0
        %1430 = vmatpush.msra.mxu0 0.0
        %1431 = vmatpush.msra.mxu0 0.0
        %1432 = vmatpush.msra.mxu0 0.0
        %1433 = vmatpush.msra.mxu0 0.0
        %1434 = vmatpush.msra.mxu0 0.0
        %1435 = vmatpush.msra.mxu0 0.0
        %1436 = vmatpush.msra.mxu0 0.0
        %1437 = vmatpush.msra.mxu0 0.0
        %1438 = vmatpush.msra.mxu0 0.0
        %1439 = vmatpush.msra.mxu0 0.0
        %1440 = vmatpush.msra.mxu0 0.0
        %1441 = vmatpush.msra.mxu0 0.0
        %1442 = vmatpush.msra.mxu0 0.0
        %1443 = vmatpush.msra.mxu0 0.0
        %1444 = vmatpush.msra.mxu0 0.0
        %1445 = vmatpush.msra.mxu0 %v1344
        %1446 = vmatmul.f32.gmra.mxu0 %v1428
        %v1447 = vpop.f32.mrf.mxu0
        %v1448 = vadd.f32 0.0, %v1447
        %1449 = vdwg.mxu0
        %v1451 = vsel %vm1159, %v1426, 0
        %1453 = vmatpush.msra.mxu0 0.0
        %1454 = vmatpush.msra.mxu0 0.0
        %1455 = vmatpush.msra.mxu0 0.0
        %1456 = vmatpush.msra.mxu0 0.0
        %1457 = vmatpush.msra.mxu0 0.0
        %1458 = vmatpush.msra.mxu0 0.0
        %1459 = vmatpush.msra.mxu0 0.0
        %1460 = vmatpush.msra.mxu0 0.0
        %1461 = vmatpush.msra.mxu0 0.0
        %1462 = vmatpush.msra.mxu0 0.0
        %1463 = vmatpush.msra.mxu0 0.0
        %1464 = vmatpush.msra.mxu0 0.0
        %1465 = vmatpush.msra.mxu0 0.0
        %1466 = vmatpush.msra.mxu0 0.0
        %1467 = vmatpush.msra.mxu0 0.0
        %1468 = vmatpush.msra.mxu0 %v1347
        %1469 = vmatmul.f32.gmra.mxu0 %v1451
        %v1470 = vpop.f32.mrf.mxu0
        %v1471 = vadd.f32 0.0, %v1470
        %1472 = vdwg.mxu0
        %s1473 = scalar_lea.vmem %s841, 32
        %v1474 = vld [vmem:[%s1473] sm:$0xff]
        %v1475 = vld [vmem:[%s1473 + $0x8] sm:$0xff]
        %v1476 = vld [vmem:[%s1473 + $0x10] sm:$0xff]
        %v1477 = vld [vmem:[%s1473 + $0x18] sm:$0x1]
        %v1479 = vsel %vm1102, %v1448, 0
        %v1482 = vsel %vm1102, %v1471, 0
        %vm1484 = vcmask 1040384
        %v1486 = vsel %vm1484, %v1477, 0
        %1488 = vmatpush.msra.mxu0 0.0
        %1489 = vmatpush.msra.mxu0 0.0
        %1490 = vmatpush.msra.mxu0 0.0
        %1491 = vmatpush.msra.mxu0 0.0
        %1492 = vmatpush.msra.mxu0 0.0
        %1493 = vmatpush.msra.mxu0 0.0
        %1494 = vmatpush.msra.mxu0 0.0
        %1495 = vmatpush.msra.mxu0 0.0
        %1496 = vmatpush.msra.mxu0 0.0
        %1497 = vmatpush.msra.mxu0 0.0
        %1498 = vmatpush.msra.mxu0 0.0
        %1499 = vmatpush.msra.mxu0 0.0
        %1500 = vmatpush.msra.mxu0 %v1486
        %1501 = vmatpush.msra.mxu0 %v1476
        %1502 = vmatpush.msra.mxu0 %v1475
        %1503 = vmatpush.msra.mxu0 %v1474
        %1504 = vmatmul.f32.gmra.mxu0 %v1479
        %v1505 = vpop.f32.mrf.mxu0
        %v1506 = vadd.f32 0.0, %v1505
        %1507 = vmatmul.f32.gmra.mxu0 %v1482
        %v1508 = vpop.f32.mrf.mxu0
        %v1509 = vadd.f32 0.0, %v1508
        %1510 = vdwg.mxu0
        %v1512 = vsel %vm1102, %v1203, 0
        %v1515 = vsel %vm1102, %v1226, 0
        %v1518 = vsel %vm1484, %v1231, 0
        %1520 = vmatpush.msra.mxu0 0.0
        %1521 = vmatpush.msra.mxu0 0.0
        %1522 = vmatpush.msra.mxu0 0.0
        %1523 = vmatpush.msra.mxu0 0.0
        %1524 = vmatpush.msra.mxu0 0.0
        %1525 = vmatpush.msra.mxu0 0.0
        %1526 = vmatpush.msra.mxu0 0.0
        %1527 = vmatpush.msra.mxu0 0.0
        %1528 = vmatpush.msra.mxu0 0.0
        %1529 = vmatpush.msra.mxu0 0.0
        %1530 = vmatpush.msra.mxu0 0.0
        %1531 = vmatpush.msra.mxu0 0.0
        %1532 = vmatpush.msra.mxu0 %v1518
        %1533 = vmatpush.msra.mxu0 %v1230
        %1534 = vmatpush.msra.mxu0 %v1229
        %1535 = vmatpush.msra.mxu0 %v1228
        %1536 = vmatmul.f32.gmra.mxu0 %v1512
        %v1537 = vpop.f32.mrf.mxu0
        %v1538 = vadd.f32 %v1506, %v1537
        %1539 = vmatmul.f32.gmra.mxu0 %v1515
        %v1540 = vpop.f32.mrf.mxu0
        %v1541 = vadd.f32 %v1509, %v1540
        %1542 = vdwg.mxu0
        %v1543 = vadd.f32 %v877, %v1538
        %v1544 = vadd.f32 %v878, %v1541
        %v1545 = vld [vmem:[%s844] sm:$0x1]
        %v1547 = vperm.slane %v1545, 0
        %v1549 = vadd.f32 %v1543, %v1547
        %v1550 = vadd.f32 %v1544, %v1547
        %v1551 = vld [vmem:[%s847] sm:$0x1]
        %v1552 = vld [vmem:[%s850] sm:$0x1]
        %v1553 = vsel %vm883, %v1549, 0.0
        %1554 = vadd.xlane.f32.xlu0 %v1553
        %v1555 = vpop.xlane.xlu0 %1554
        %v1556 = vsel %vm883, %v1550, 0.0
        %1557 = vadd.xlane.f32.xlu0 %v1556
        %v1558 = vpop.xlane.xlu0 %1557
        %v1559 = vmul.f32 %v1555, %v896
        %v1560 = vmul.f32 %v1558, %v896
        %v1561 = vsub.f32 %v1549, %v1559
        %v1562 = vsub.f32 %v1550, %v1560
        %v1563 = vmul.f32 %v1561, %v1561
        %v1564 = vmul.f32 %v1562, %v1562
        %v1565 = vsel %vm883, %v1563, 0.0
        %1566 = vadd.xlane.f32.xlu0 %v1565
        %v1567 = vpop.xlane.xlu0 %1566
        %v1568 = vsel %vm883, %v1564, 0.0
        %1569 = vadd.xlane.f32.xlu0 %v1568
        %v1570 = vpop.xlane.xlu0 %1569
        %v1571 = vmul.f32 %v1567, %v915
        %v1572 = vmul.f32 %v1570, %v915
        %v1573 = vrsqrt.pop %v1571
        %v1574 = vmul.f32 %v1573, %v1571
        %v1575 = vmul.f32 %v1574, %v1573
        %v1576 = vmul.f32 0.5, %v1575
        %v1577 = vsub.f32 1.5, %v1576
        %v1578 = vmul.f32 %v1573, %v1577
        %v1579 = vmul.f32 %v1571, %v1578
        %vm1580 = vcmp.eq.f32.partialorder %v1571, inf
        %v1581 = vsel %vm1580, %v1571, %v1579
        %vm1582 = vcmp.eq.f32.partialorder %v1571, 0.0
        %v1583 = vand.u32 %v1571, 2147483648
        %v1584 = vsel %vm1582, %v1583, %v1581
        %v1585 = vrsqrt.pop %v1572
        %v1586 = vmul.f32 %v1585, %v1572
        %v1587 = vmul.f32 %v1586, %v1585
        %v1588 = vmul.f32 0.5, %v1587
        %v1589 = vsub.f32 1.5, %v1588
        %v1590 = vmul.f32 %v1585, %v1589
        %v1591 = vmul.f32 %v1572, %v1590
        %vm1592 = vcmp.eq.f32.partialorder %v1572, inf
        %v1593 = vsel %vm1592, %v1572, %v1591
        %vm1594 = vcmp.eq.f32.partialorder %v1572, 0.0
        %v1595 = vand.u32 %v1572, 2147483648
        %v1596 = vsel %vm1594, %v1595, %v1593
        %v1598 = vperm.slane %v1551, 0
        %v1600 = vmul.f32 %v1598, %v1561
        %v1601 = vmul.f32 %v1598, %v1562
        %v1602 = vadd.f32 %v1584, 1e-06
        %v1603 = vadd.f32 %v1596, 1e-06
        %v1604 = vrcp.pop %v1602
        %v1605 = vmul.f32 %v1602, %v1604
        %v1606 = vsub.f32 1.0, %v1605
        %v1607 = vmul.f32 %v1604, %v1606
        %v1608 = vadd.f32 %v1604, %v1607
        %vm1609 = vweird.f32 %v1602
        %vm1610 = vweird.f32 %v1604
        %vm1611 = vmor %vm1609, %vm1610
        %v1612 = vsel %vm1611, %v1604, %v1608
        %v1613 = vand.u32 2147483647, %v1602
        %vm1614 = vcmp.eq.f32.partialorder %v1613, 8.507059e+37
        %v1615 = vand.u32 %v1602, 2147483648
        %v1616 = vor.u32 1.1754944e-38, %v1615
        %v1617 = vsel %vm1614, %v1616, %v1612
        %v1618 = vmul.f32 %v1600, %v1617
        %v1619 = vrcp.pop %v1603
        %v1620 = vmul.f32 %v1603, %v1619
        %v1621 = vsub.f32 1.0, %v1620
        %v1622 = vmul.f32 %v1619, %v1621
        %v1623 = vadd.f32 %v1619, %v1622
        %vm1624 = vweird.f32 %v1603
        %vm1625 = vweird.f32 %v1619
        %vm1626 = vmor %vm1624, %vm1625
        %v1627 = vsel %vm1626, %v1619, %v1623
        %v1628 = vand.u32 2147483647, %v1603
        %vm1629 = vcmp.eq.f32.partialorder %v1628, 8.507059e+37
        %v1630 = vand.u32 %v1603, 2147483648
        %v1631 = vor.u32 1.1754944e-38, %v1630
        %v1632 = vsel %vm1629, %v1631, %v1627
        %v1633 = vmul.f32 %v1601, %v1632
        %v1635 = vperm.slane %v1552, 0
        %v1637 = vadd.f32 %v1618, %v1635
        %v1638 = vadd.f32 %v1633, %v1635
        %v1639 = vld [vmem:[%s855] sm:$0xff]
        %v1640 = vld [vmem:[%s855 + $0x8] sm:$0xff]
        %v1641 = vld [vmem:[%s855 + $0x10] sm:$0xff]
        %v1642 = vld [vmem:[%s855 + $0x18] sm:$0xff]
        %v1643 = vld [vmem:[%s855 + $0x20] sm:$0xff]
        %v1644 = vld [vmem:[%s855 + $0x28] sm:$0xff]
        %v1645 = vld [vmem:[%s855 + $0x30] sm:$0xff]
        %v1646 = vld [vmem:[%s855 + $0x38] sm:$0xff]
        %v1647 = vld [vmem:[%s855 + $0x40] sm:$0xff]
        %v1648 = vld [vmem:[%s855 + $0x48] sm:$0xff]
        %v1649 = vld [vmem:[%s855 + $0x50] sm:$0xff]
        %v1650 = vld [vmem:[%s855 + $0x58] sm:$0xff]
        %v1651 = vld [vmem:[%s855 + $0x60] sm:$0xff]
        %v1652 = vld [vmem:[%s855 + $0x68] sm:$0xff]
        %v1653 = vld [vmem:[%s855 + $0x70] sm:$0xff]
        %v1654 = vld [vmem:[%s855 + $0x78] sm:$0xff]
        %v1655 = vld [vmem:[%s855 + $0x80] sm:$0xff]
        %v1656 = vld [vmem:[%s855 + $0x88] sm:$0xff]
        %v1657 = vld [vmem:[%s855 + $0x90] sm:$0xff]
        %v1658 = vld [vmem:[%s855 + $0x98] sm:$0xff]
        %v1659 = vld [vmem:[%s855 + $0xa0] sm:$0xff]
        %v1660 = vld [vmem:[%s855 + $0xa8] sm:$0xff]
        %v1661 = vld [vmem:[%s855 + $0xb0] sm:$0xff]
        %v1662 = vld [vmem:[%s855 + $0xb8] sm:$0xff]
        %v1663 = vld [vmem:[%s855 + $0xc0] sm:$0xff]
        %v1664 = vld [vmem:[%s855 + $0xc8] sm:$0xff]
        %v1665 = vld [vmem:[%s855 + $0xd0] sm:$0xff]
        %v1666 = vld [vmem:[%s855 + $0xd8] sm:$0xff]
        %v1667 = vld [vmem:[%s855 + $0xe0] sm:$0xff]
        %v1668 = vld [vmem:[%s855 + $0xe8] sm:$0xff]
        %v1669 = vld [vmem:[%s855 + $0xf0] sm:$0xff]
        %v1670 = vld [vmem:[%s855 + $0xf8] sm:$0xff]
        %v1671 = vld [vmem:[%s855 + $0x100] sm:$0xff]
        %v1672 = vld [vmem:[%s855 + $0x108] sm:$0xff]
        %v1673 = vld [vmem:[%s855 + $0x110] sm:$0xff]
        %v1674 = vld [vmem:[%s855 + $0x118] sm:$0xff]
        %v1675 = vld [vmem:[%s855 + $0x120] sm:$0xff]
        %v1676 = vld [vmem:[%s855 + $0x128] sm:$0xff]
        %v1677 = vld [vmem:[%s855 + $0x130] sm:$0xff]
        %v1678 = vld [vmem:[%s855 + $0x138] sm:$0xff]
        %v1679 = vld [vmem:[%s855 + $0x140] sm:$0xff]
        %v1680 = vld [vmem:[%s855 + $0x148] sm:$0xff]
        %v1681 = vld [vmem:[%s855 + $0x150] sm:$0xff]
        %v1682 = vld [vmem:[%s855 + $0x158] sm:$0xff]
        %v1683 = vld [vmem:[%s855 + $0x160] sm:$0xff]
        %v1684 = vld [vmem:[%s855 + $0x168] sm:$0xff]
        %v1685 = vld [vmem:[%s855 + $0x170] sm:$0xff]
        %v1686 = vld [vmem:[%s855 + $0x178] sm:$0xff]
        %v1687 = vld [vmem:[%s855 + $0x180] sm:$0xff]
        %v1688 = vld [vmem:[%s855 + $0x188] sm:$0xff]
        %v1689 = vld [vmem:[%s855 + $0x190] sm:$0xff]
        %v1690 = vld [vmem:[%s855 + $0x198] sm:$0xff]
        %v1691 = vld [vmem:[%s855 + $0x1a0] sm:$0xff]
        %v1692 = vld [vmem:[%s855 + $0x1a8] sm:$0xff]
        %v1693 = vld [vmem:[%s855 + $0x1b0] sm:$0xff]
        %v1694 = vld [vmem:[%s855 + $0x1b8] sm:$0xff]
        %v1695 = vld [vmem:[%s855 + $0x1c0] sm:$0xff]
        %v1696 = vld [vmem:[%s855 + $0x1c8] sm:$0xff]
        %v1697 = vld [vmem:[%s855 + $0x1d0] sm:$0xff]
        %v1698 = vld [vmem:[%s855 + $0x1d8] sm:$0xff]
        %v1699 = vld [vmem:[%s855 + $0x1e0] sm:$0xff]
        %v1700 = vld [vmem:[%s855 + $0x1e8] sm:$0xff]
        %v1701 = vld [vmem:[%s855 + $0x1f0] sm:$0xff]
        %v1702 = vld [vmem:[%s855 + $0x1f8] sm:$0xff]
        %v1703 = vld [vmem:[%s855 + $0x200] sm:$0xff]
        %v1704 = vld [vmem:[%s855 + $0x208] sm:$0xff]
        %v1705 = vld [vmem:[%s855 + $0x210] sm:$0xff]
        %v1706 = vld [vmem:[%s855 + $0x218] sm:$0xff]
        %v1707 = vld [vmem:[%s855 + $0x220] sm:$0xff]
        %v1708 = vld [vmem:[%s855 + $0x228] sm:$0xff]
        %v1709 = vld [vmem:[%s855 + $0x230] sm:$0xff]
        %v1710 = vld [vmem:[%s855 + $0x238] sm:$0xff]
        %v1711 = vld [vmem:[%s855 + $0x240] sm:$0xff]
        %v1712 = vld [vmem:[%s855 + $0x248] sm:$0xff]
        %v1713 = vld [vmem:[%s855 + $0x250] sm:$0xff]
        %v1714 = vld [vmem:[%s855 + $0x258] sm:$0xff]
        %v1715 = vld [vmem:[%s855 + $0x260] sm:$0xff]
        %v1716 = vld [vmem:[%s855 + $0x268] sm:$0xff]
        %v1717 = vld [vmem:[%s855 + $0x270] sm:$0xff]
        %v1718 = vld [vmem:[%s855 + $0x278] sm:$0xff]
        %v1719 = vld [vmem:[%s855 + $0x280] sm:$0xff]
        %v1720 = vld [vmem:[%s855 + $0x288] sm:$0xff]
        %v1721 = vld [vmem:[%s855 + $0x290] sm:$0xff]
        %v1722 = vld [vmem:[%s855 + $0x298] sm:$0xff]
        %v1723 = vld [vmem:[%s855 + $0x2a0] sm:$0xff]
        %v1724 = vld [vmem:[%s855 + $0x2a8] sm:$0xff]
        %v1725 = vld [vmem:[%s855 + $0x2b0] sm:$0xff]
        %v1726 = vld [vmem:[%s855 + $0x2b8] sm:$0xff]
        %v1727 = vld [vmem:[%s855 + $0x2c0] sm:$0xff]
        %v1728 = vld [vmem:[%s855 + $0x2c8] sm:$0xff]
        %v1729 = vld [vmem:[%s855 + $0x2d0] sm:$0xff]
        %v1730 = vld [vmem:[%s855 + $0x2d8] sm:$0xff]
        %v1731 = vld [vmem:[%s855 + $0x2e0] sm:$0xff]
        %v1732 = vld [vmem:[%s855 + $0x2e8] sm:$0xff]
        %v1733 = vld [vmem:[%s855 + $0x2f0] sm:$0xff]
        %v1734 = vld [vmem:[%s855 + $0x2f8] sm:$0xff]
        %v1735 = vld [vmem:[%s855 + $0x300] sm:$0x3]
        %v1736 = vld [vmem:[%s855 + $0x308] sm:$0x3]
        %v1737 = vld [vmem:[%s855 + $0x310] sm:$0x3]
        %v1738 = vld [vmem:[%s855 + $0x318] sm:$0x3]
        %v1739 = vld [vmem:[%s855 + $0x320] sm:$0x3]
        %v1740 = vld [vmem:[%s855 + $0x328] sm:$0x3]
        %v1741 = vld [vmem:[%s855 + $0x330] sm:$0x3]
        %v1742 = vld [vmem:[%s855 + $0x338] sm:$0x3]
        %v1743 = vld [vmem:[%s855 + $0x340] sm:$0x3]
        %v1744 = vld [vmem:[%s855 + $0x348] sm:$0x3]
        %v1745 = vld [vmem:[%s855 + $0x350] sm:$0x3]
        %v1746 = vld [vmem:[%s855 + $0x358] sm:$0x3]
        %v1747 = vld [vmem:[%s855 + $0x360] sm:$0x3]
        %v1748 = vld [vmem:[%s855 + $0x368] sm:$0x3]
        %v1749 = vld [vmem:[%s855 + $0x370] sm:$0x3]
        %v1750 = vld [vmem:[%s855 + $0x378] sm:$0x3]
        %v1751 = vld [vmem:[%s859] sm:$0xff]
        %v1752 = vld [vmem:[%s859 + $0x8] sm:$0xff]
        %v1755 = vperm.slane %v1751, 0
        %v1756 = vperm.slane %v1751, 1
        %v1757 = vperm.slane %v1751, 2
        %v1758 = vperm.slane %v1751, 3
        %v1759 = vperm.slane %v1751, 4
        %v1760 = vperm.slane %v1751, 5
        %v1761 = vperm.slane %v1751, 6
        %v1762 = vperm.slane %v1751, 7
        %v1763 = vperm.slane %v1752, 0
        %v1764 = vperm.slane %v1752, 1
        %v1765 = vperm.slane %v1752, 2
        %v1766 = vperm.slane %v1752, 3
        %v1767 = vperm.slane %v1752, 4
        %v1768 = vperm.slane %v1752, 5
        %v1769 = vperm.slane %v1752, 6
        %v1770 = vperm.slane %v1752, 7
        %v1788 = vsel %vm883, %v1637, 0
        %v1791 = vsel %vm883, %v1638, 0
        %v1794 = vsel %vm1001, %v1735, 0
        %v1797 = vsel %vm1001, %v1736, 0
        %v1800 = vsel %vm1001, %v1737, 0
        %v1803 = vsel %vm1001, %v1738, 0
        %v1806 = vsel %vm1001, %v1739, 0
        %v1809 = vsel %vm1001, %v1740, 0
        %v1812 = vsel %vm1001, %v1741, 0
        %v1815 = vsel %vm1001, %v1742, 0
        %v1818 = vsel %vm1001, %v1743, 0
        %v1821 = vsel %vm1001, %v1744, 0
        %v1824 = vsel %vm1001, %v1745, 0
        %v1827 = vsel %vm1001, %v1746, 0
        %v1830 = vsel %vm1001, %v1747, 0
        %v1833 = vsel %vm1001, %v1748, 0
        %v1836 = vsel %vm1001, %v1749, 0
        %v1839 = vsel %vm1001, %v1750, 0
        %1841 = vmatpush.msra.mxu0 0.0
        %1842 = vmatpush.msra.mxu0 0.0
        %1843 = vmatpush.msra.mxu0 0.0
        %1844 = vmatpush.msra.mxu0 0.0
        %1845 = vmatpush.msra.mxu0 0.0
        %1846 = vmatpush.msra.mxu0 0.0
        %1847 = vmatpush.msra.mxu0 0.0
        %1848 = vmatpush.msra.mxu0 0.0
        %1849 = vmatpush.msra.mxu0 0.0
        %1850 = vmatpush.msra.mxu0 %v1794
        %1851 = vmatpush.msra.mxu0 %v1719
        %1852 = vmatpush.msra.mxu0 %v1703
        %1853 = vmatpush.msra.mxu0 %v1687
        %1854 = vmatpush.msra.mxu0 %v1671
        %1855 = vmatpush.msra.mxu0 %v1655
        %1856 = vmatpush.msra.mxu0 %v1639
        %1857 = vmatmul.f32.gmra.mxu0 %v1788
        %v1858 = vpop.f32.mrf.mxu0
        %v1859 = vadd.f32 %v1755, %v1858
        %1860 = vmatmul.f32.gmra.mxu0 %v1791
        %v1861 = vpop.f32.mrf.mxu0
        %v1862 = vadd.f32 %v1755, %v1861
        %1863 = vdwg.mxu0
        %1864 = vmatpush.msra.mxu0 0.0
        %1865 = vmatpush.msra.mxu0 0.0
        %1866 = vmatpush.msra.mxu0 0.0
        %1867 = vmatpush.msra.mxu0 0.0
        %1868 = vmatpush.msra.mxu0 0.0
        %1869 = vmatpush.msra.mxu0 0.0
        %1870 = vmatpush.msra.mxu0 0.0
        %1871 = vmatpush.msra.mxu0 0.0
        %1872 = vmatpush.msra.mxu0 0.0
        %1873 = vmatpush.msra.mxu0 %v1797
        %1874 = vmatpush.msra.mxu0 %v1720
        %1875 = vmatpush.msra.mxu0 %v1704
        %1876 = vmatpush.msra.mxu0 %v1688
        %1877 = vmatpush.msra.mxu0 %v1672
        %1878 = vmatpush.msra.mxu0 %v1656
        %1879 = vmatpush.msra.mxu0 %v1640
        %1880 = vmatmul.f32.gmra.mxu0 %v1788
        %v1881 = vpop.f32.mrf.mxu0
        %v1882 = vadd.f32 %v1756, %v1881
        %1883 = vmatmul.f32.gmra.mxu0 %v1791
        %v1884 = vpop.f32.mrf.mxu0
        %v1885 = vadd.f32 %v1756, %v1884
        %1886 = vdwg.mxu0
        %1887 = vmatpush.msra.mxu0 0.0
        %1888 = vmatpush.msra.mxu0 0.0
        %1889 = vmatpush.msra.mxu0 0.0
        %1890 = vmatpush.msra.mxu0 0.0
        %1891 = vmatpush.msra.mxu0 0.0
        %1892 = vmatpush.msra.mxu0 0.0
        %1893 = vmatpush.msra.mxu0 0.0
        %1894 = vmatpush.msra.mxu0 0.0
        %1895 = vmatpush.msra.mxu0 0.0
        %1896 = vmatpush.msra.mxu0 %v1800
        %1897 = vmatpush.msra.mxu0 %v1721
        %1898 = vmatpush.msra.mxu0 %v1705
        %1899 = vmatpush.msra.mxu0 %v1689
        %1900 = vmatpush.msra.mxu0 %v1673
        %1901 = vmatpush.msra.mxu0 %v1657
        %1902 = vmatpush.msra.mxu0 %v1641
        %1903 = vmatmul.f32.gmra.mxu0 %v1788
        %v1904 = vpop.f32.mrf.mxu0
        %v1905 = vadd.f32 %v1757, %v1904
        %1906 = vmatmul.f32.gmra.mxu0 %v1791
        %v1907 = vpop.f32.mrf.mxu0
        %v1908 = vadd.f32 %v1757, %v1907
        %1909 = vdwg.mxu0
        %1910 = vmatpush.msra.mxu0 0.0
        %1911 = vmatpush.msra.mxu0 0.0
        %1912 = vmatpush.msra.mxu0 0.0
        %1913 = vmatpush.msra.mxu0 0.0
        %1914 = vmatpush.msra.mxu0 0.0
        %1915 = vmatpush.msra.mxu0 0.0
        %1916 = vmatpush.msra.mxu0 0.0
        %1917 = vmatpush.msra.mxu0 0.0
        %1918 = vmatpush.msra.mxu0 0.0
        %1919 = vmatpush.msra.mxu0 %v1803
        %1920 = vmatpush.msra.mxu0 %v1722
        %1921 = vmatpush.msra.mxu0 %v1706
        %1922 = vmatpush.msra.mxu0 %v1690
        %1923 = vmatpush.msra.mxu0 %v1674
        %1924 = vmatpush.msra.mxu0 %v1658
        %1925 = vmatpush.msra.mxu0 %v1642
        %1926 = vmatmul.f32.gmra.mxu0 %v1788
        %v1927 = vpop.f32.mrf.mxu0
        %v1928 = vadd.f32 %v1758, %v1927
        %1929 = vmatmul.f32.gmra.mxu0 %v1791
        %v1930 = vpop.f32.mrf.mxu0
        %v1931 = vadd.f32 %v1758, %v1930
        %1932 = vdwg.mxu0
        %1933 = vmatpush.msra.mxu0 0.0
        %1934 = vmatpush.msra.mxu0 0.0
        %1935 = vmatpush.msra.mxu0 0.0
        %1936 = vmatpush.msra.mxu0 0.0
        %1937 = vmatpush.msra.mxu0 0.0
        %1938 = vmatpush.msra.mxu0 0.0
        %1939 = vmatpush.msra.mxu0 0.0
        %1940 = vmatpush.msra.mxu0 0.0
        %1941 = vmatpush.msra.mxu0 0.0
        %1942 = vmatpush.msra.mxu0 %v1806
        %1943 = vmatpush.msra.mxu0 %v1723
        %1944 = vmatpush.msra.mxu0 %v1707
        %1945 = vmatpush.msra.mxu0 %v1691
        %1946 = vmatpush.msra.mxu0 %v1675
        %1947 = vmatpush.msra.mxu0 %v1659
        %1948 = vmatpush.msra.mxu0 %v1643
        %1949 = vmatmul.f32.gmra.mxu0 %v1788
        %v1950 = vpop.f32.mrf.mxu0
        %v1951 = vadd.f32 %v1759, %v1950
        %1952 = vmatmul.f32.gmra.mxu0 %v1791
        %v1953 = vpop.f32.mrf.mxu0
        %v1954 = vadd.f32 %v1759, %v1953
        %1955 = vdwg.mxu0
        %1956 = vmatpush.msra.mxu0 0.0
        %1957 = vmatpush.msra.mxu0 0.0
        %1958 = vmatpush.msra.mxu0 0.0
        %1959 = vmatpush.msra.mxu0 0.0
        %1960 = vmatpush.msra.mxu0 0.0
        %1961 = vmatpush.msra.mxu0 0.0
        %1962 = vmatpush.msra.mxu0 0.0
        %1963 = vmatpush.msra.mxu0 0.0
        %1964 = vmatpush.msra.mxu0 0.0
        %1965 = vmatpush.msra.mxu0 %v1809
        %1966 = vmatpush.msra.mxu0 %v1724
        %1967 = vmatpush.msra.mxu0 %v1708
        %1968 = vmatpush.msra.mxu0 %v1692
        %1969 = vmatpush.msra.mxu0 %v1676
        %1970 = vmatpush.msra.mxu0 %v1660
        %1971 = vmatpush.msra.mxu0 %v1644
        %1972 = vmatmul.f32.gmra.mxu0 %v1788
        %v1973 = vpop.f32.mrf.mxu0
        %v1974 = vadd.f32 %v1760, %v1973
        %1975 = vmatmul.f32.gmra.mxu0 %v1791
        %v1976 = vpop.f32.mrf.mxu0
        %v1977 = vadd.f32 %v1760, %v1976
        %1978 = vdwg.mxu0
        %1979 = vmatpush.msra.mxu0 0.0
        %1980 = vmatpush.msra.mxu0 0.0
        %1981 = vmatpush.msra.mxu0 0.0
        %1982 = vmatpush.msra.mxu0 0.0
        %1983 = vmatpush.msra.mxu0 0.0
        %1984 = vmatpush.msra.mxu0 0.0
        %1985 = vmatpush.msra.mxu0 0.0
        %1986 = vmatpush.msra.mxu0 0.0
        %1987 = vmatpush.msra.mxu0 0.0
        %1988 = vmatpush.msra.mxu0 %v1812
        %1989 = vmatpush.msra.mxu0 %v1725
        %1990 = vmatpush.msra.mxu0 %v1709
        %1991 = vmatpush.msra.mxu0 %v1693
        %1992 = vmatpush.msra.mxu0 %v1677
        %1993 = vmatpush.msra.mxu0 %v1661
        %1994 = vmatpush.msra.mxu0 %v1645
        %1995 = vmatmul.f32.gmra.mxu0 %v1788
        %v1996 = vpop.f32.mrf.mxu0
        %v1997 = vadd.f32 %v1761, %v1996
        %1998 = vmatmul.f32.gmra.mxu0 %v1791
        %v1999 = vpop.f32.mrf.mxu0
        %v2000 = vadd.f32 %v1761, %v1999
        %2001 = vdwg.mxu0
        %2002 = vmatpush.msra.mxu0 0.0
        %2003 = vmatpush.msra.mxu0 0.0
        %2004 = vmatpush.msra.mxu0 0.0
        %2005 = vmatpush.msra.mxu0 0.0
        %2006 = vmatpush.msra.mxu0 0.0
        %2007 = vmatpush.msra.mxu0 0.0
        %2008 = vmatpush.msra.mxu0 0.0
        %2009 = vmatpush.msra.mxu0 0.0
        %2010 = vmatpush.msra.mxu0 0.0
        %2011 = vmatpush.msra.mxu0 %v1815
        %2012 = vmatpush.msra.mxu0 %v1726
        %2013 = vmatpush.msra.mxu0 %v1710
        %2014 = vmatpush.msra.mxu0 %v1694
        %2015 = vmatpush.msra.mxu0 %v1678
        %2016 = vmatpush.msra.mxu0 %v1662
        %2017 = vmatpush.msra.mxu0 %v1646
        %2018 = vmatmul.f32.gmra.mxu0 %v1788
        %v2019 = vpop.f32.mrf.mxu0
        %v2020 = vadd.f32 %v1762, %v2019
        %2021 = vmatmul.f32.gmra.mxu0 %v1791
        %v2022 = vpop.f32.mrf.mxu0
        %v2023 = vadd.f32 %v1762, %v2022
        %2024 = vdwg.mxu0
        %2025 = vmatpush.msra.mxu0 0.0
        %2026 = vmatpush.msra.mxu0 0.0
        %2027 = vmatpush.msra.mxu0 0.0
        %2028 = vmatpush.msra.mxu0 0.0
        %2029 = vmatpush.msra.mxu0 0.0
        %2030 = vmatpush.msra.mxu0 0.0
        %2031 = vmatpush.msra.mxu0 0.0
        %2032 = vmatpush.msra.mxu0 0.0
        %2033 = vmatpush.msra.mxu0 0.0
        %2034 = vmatpush.msra.mxu0 %v1818
        %2035 = vmatpush.msra.mxu0 %v1727
        %2036 = vmatpush.msra.mxu0 %v1711
        %2037 = vmatpush.msra.mxu0 %v1695
        %2038 = vmatpush.msra.mxu0 %v1679
        %2039 = vmatpush.msra.mxu0 %v1663
        %2040 = vmatpush.msra.mxu0 %v1647
        %2041 = vmatmul.f32.gmra.mxu0 %v1788
        %v2042 = vpop.f32.mrf.mxu0
        %v2043 = vadd.f32 %v1763, %v2042
        %2044 = vmatmul.f32.gmra.mxu0 %v1791
        %v2045 = vpop.f32.mrf.mxu0
        %v2046 = vadd.f32 %v1763, %v2045
        %2047 = vdwg.mxu0
        %2048 = vmatpush.msra.mxu0 0.0
        %2049 = vmatpush.msra.mxu0 0.0
        %2050 = vmatpush.msra.mxu0 0.0
        %2051 = vmatpush.msra.mxu0 0.0
        %2052 = vmatpush.msra.mxu0 0.0
        %2053 = vmatpush.msra.mxu0 0.0
        %2054 = vmatpush.msra.mxu0 0.0
        %2055 = vmatpush.msra.mxu0 0.0
        %2056 = vmatpush.msra.mxu0 0.0
        %2057 = vmatpush.msra.mxu0 %v1821
        %2058 = vmatpush.msra.mxu0 %v1728
        %2059 = vmatpush.msra.mxu0 %v1712
        %2060 = vmatpush.msra.mxu0 %v1696
        %2061 = vmatpush.msra.mxu0 %v1680
        %2062 = vmatpush.msra.mxu0 %v1664
        %2063 = vmatpush.msra.mxu0 %v1648
        %2064 = vmatmul.f32.gmra.mxu0 %v1788
        %v2065 = vpop.f32.mrf.mxu0
        %v2066 = vadd.f32 %v1764, %v2065
        %2067 = vmatmul.f32.gmra.mxu0 %v1791
        %v2068 = vpop.f32.mrf.mxu0
        %v2069 = vadd.f32 %v1764, %v2068
        %2070 = vdwg.mxu0
        %2071 = vmatpush.msra.mxu0 0.0
        %2072 = vmatpush.msra.mxu0 0.0
        %2073 = vmatpush.msra.mxu0 0.0
        %2074 = vmatpush.msra.mxu0 0.0
        %2075 = vmatpush.msra.mxu0 0.0
        %2076 = vmatpush.msra.mxu0 0.0
        %2077 = vmatpush.msra.mxu0 0.0
        %2078 = vmatpush.msra.mxu0 0.0
        %2079 = vmatpush.msra.mxu0 0.0
        %2080 = vmatpush.msra.mxu0 %v1824
        %2081 = vmatpush.msra.mxu0 %v1729
        %2082 = vmatpush.msra.mxu0 %v1713
        %2083 = vmatpush.msra.mxu0 %v1697
        %2084 = vmatpush.msra.mxu0 %v1681
        %2085 = vmatpush.msra.mxu0 %v1665
        %2086 = vmatpush.msra.mxu0 %v1649
        %2087 = vmatmul.f32.gmra.mxu0 %v1788
        %v2088 = vpop.f32.mrf.mxu0
        %v2089 = vadd.f32 %v1765, %v2088
        %2090 = vmatmul.f32.gmra.mxu0 %v1791
        %v2091 = vpop.f32.mrf.mxu0
        %v2092 = vadd.f32 %v1765, %v2091
        %2093 = vdwg.mxu0
        %2094 = vmatpush.msra.mxu0 0.0
        %2095 = vmatpush.msra.mxu0 0.0
        %2096 = vmatpush.msra.mxu0 0.0
        %2097 = vmatpush.msra.mxu0 0.0
        %2098 = vmatpush.msra.mxu0 0.0
        %2099 = vmatpush.msra.mxu0 0.0
        %2100 = vmatpush.msra.mxu0 0.0
        %2101 = vmatpush.msra.mxu0 0.0
        %2102 = vmatpush.msra.mxu0 0.0
        %2103 = vmatpush.msra.mxu0 %v1827
        %2104 = vmatpush.msra.mxu0 %v1730
        %2105 = vmatpush.msra.mxu0 %v1714
        %2106 = vmatpush.msra.mxu0 %v1698
        %2107 = vmatpush.msra.mxu0 %v1682
        %2108 = vmatpush.msra.mxu0 %v1666
        %2109 = vmatpush.msra.mxu0 %v1650
        %2110 = vmatmul.f32.gmra.mxu0 %v1788
        %v2111 = vpop.f32.mrf.mxu0
        %v2112 = vadd.f32 %v1766, %v2111
        %2113 = vmatmul.f32.gmra.mxu0 %v1791
        %v2114 = vpop.f32.mrf.mxu0
        %v2115 = vadd.f32 %v1766, %v2114
        %2116 = vdwg.mxu0
        %2117 = vmatpush.msra.mxu0 0.0
        %2118 = vmatpush.msra.mxu0 0.0
        %2119 = vmatpush.msra.mxu0 0.0
        %2120 = vmatpush.msra.mxu0 0.0
        %2121 = vmatpush.msra.mxu0 0.0
        %2122 = vmatpush.msra.mxu0 0.0
        %2123 = vmatpush.msra.mxu0 0.0
        %2124 = vmatpush.msra.mxu0 0.0
        %2125 = vmatpush.msra.mxu0 0.0
        %2126 = vmatpush.msra.mxu0 %v1830
        %2127 = vmatpush.msra.mxu0 %v1731
        %2128 = vmatpush.msra.mxu0 %v1715
        %2129 = vmatpush.msra.mxu0 %v1699
        %2130 = vmatpush.msra.mxu0 %v1683
        %2131 = vmatpush.msra.mxu0 %v1667
        %2132 = vmatpush.msra.mxu0 %v1651
        %2133 = vmatmul.f32.gmra.mxu0 %v1788
        %v2134 = vpop.f32.mrf.mxu0
        %v2135 = vadd.f32 %v1767, %v2134
        %2136 = vmatmul.f32.gmra.mxu0 %v1791
        %v2137 = vpop.f32.mrf.mxu0
        %v2138 = vadd.f32 %v1767, %v2137
        %2139 = vdwg.mxu0
        %2140 = vmatpush.msra.mxu0 0.0
        %2141 = vmatpush.msra.mxu0 0.0
        %2142 = vmatpush.msra.mxu0 0.0
        %2143 = vmatpush.msra.mxu0 0.0
        %2144 = vmatpush.msra.mxu0 0.0
        %2145 = vmatpush.msra.mxu0 0.0
        %2146 = vmatpush.msra.mxu0 0.0
        %2147 = vmatpush.msra.mxu0 0.0
        %2148 = vmatpush.msra.mxu0 0.0
        %2149 = vmatpush.msra.mxu0 %v1833
        %2150 = vmatpush.msra.mxu0 %v1732
        %2151 = vmatpush.msra.mxu0 %v1716
        %2152 = vmatpush.msra.mxu0 %v1700
        %2153 = vmatpush.msra.mxu0 %v1684
        %2154 = vmatpush.msra.mxu0 %v1668
        %2155 = vmatpush.msra.mxu0 %v1652
        %2156 = vmatmul.f32.gmra.mxu0 %v1788
        %v2157 = vpop.f32.mrf.mxu0
        %v2158 = vadd.f32 %v1768, %v2157
        %2159 = vmatmul.f32.gmra.mxu0 %v1791
        %v2160 = vpop.f32.mrf.mxu0
        %v2161 = vadd.f32 %v1768, %v2160
        %2162 = vdwg.mxu0
        %2163 = vmatpush.msra.mxu0 0.0
        %2164 = vmatpush.msra.mxu0 0.0
        %2165 = vmatpush.msra.mxu0 0.0
        %2166 = vmatpush.msra.mxu0 0.0
        %2167 = vmatpush.msra.mxu0 0.0
        %2168 = vmatpush.msra.mxu0 0.0
        %2169 = vmatpush.msra.mxu0 0.0
        %2170 = vmatpush.msra.mxu0 0.0
        %2171 = vmatpush.msra.mxu0 0.0
        %2172 = vmatpush.msra.mxu0 %v1836
        %2173 = vmatpush.msra.mxu0 %v1733
        %2174 = vmatpush.msra.mxu0 %v1717
        %2175 = vmatpush.msra.mxu0 %v1701
        %2176 = vmatpush.msra.mxu0 %v1685
        %2177 = vmatpush.msra.mxu0 %v1669
        %2178 = vmatpush.msra.mxu0 %v1653
        %2179 = vmatmul.f32.gmra.mxu0 %v1788
        %v2180 = vpop.f32.mrf.mxu0
        %v2181 = vadd.f32 %v1769, %v2180
        %2182 = vmatmul.f32.gmra.mxu0 %v1791
        %v2183 = vpop.f32.mrf.mxu0
        %v2184 = vadd.f32 %v1769, %v2183
        %2185 = vdwg.mxu0
        %2186 = vmatpush.msra.mxu0 0.0
        %2187 = vmatpush.msra.mxu0 0.0
        %2188 = vmatpush.msra.mxu0 0.0
        %2189 = vmatpush.msra.mxu0 0.0
        %2190 = vmatpush.msra.mxu0 0.0
        %2191 = vmatpush.msra.mxu0 0.0
        %2192 = vmatpush.msra.mxu0 0.0
        %2193 = vmatpush.msra.mxu0 0.0
        %2194 = vmatpush.msra.mxu0 0.0
        %2195 = vmatpush.msra.mxu0 %v1839
        %2196 = vmatpush.msra.mxu0 %v1734
        %2197 = vmatpush.msra.mxu0 %v1718
        %2198 = vmatpush.msra.mxu0 %v1702
        %2199 = vmatpush.msra.mxu0 %v1686
        %2200 = vmatpush.msra.mxu0 %v1670
        %2201 = vmatpush.msra.mxu0 %v1654
        %2202 = vmatmul.f32.gmra.mxu0 %v1788
        %v2203 = vpop.f32.mrf.mxu0
        %v2204 = vadd.f32 %v1770, %v2203
        %2205 = vmatmul.f32.gmra.mxu0 %v1791
        %v2206 = vpop.f32.mrf.mxu0
        %v2207 = vadd.f32 %v1770, %v2206
        %2208 = vdwg.mxu0
        %v2209 = vmax.f32 %v1859, 0.0
        %v2210 = vmax.f32 %v1882, 0.0
        %v2211 = vmax.f32 %v1905, 0.0
        %v2212 = vmax.f32 %v1928, 0.0
        %v2213 = vmax.f32 %v1951, 0.0
        %v2214 = vmax.f32 %v1974, 0.0
        %v2215 = vmax.f32 %v1997, 0.0
        %v2216 = vmax.f32 %v2020, 0.0
        %v2217 = vmax.f32 %v2043, 0.0
        %v2218 = vmax.f32 %v2066, 0.0
        %v2219 = vmax.f32 %v2089, 0.0
        %v2220 = vmax.f32 %v2112, 0.0
        %v2221 = vmax.f32 %v2135, 0.0
        %v2222 = vmax.f32 %v2158, 0.0
        %v2223 = vmax.f32 %v2181, 0.0
        %v2224 = vmax.f32 %v2204, 0.0
        %v2225 = vmax.f32 %v1862, 0.0
        %v2226 = vmax.f32 %v1885, 0.0
        %v2227 = vmax.f32 %v1908, 0.0
        %v2228 = vmax.f32 %v1931, 0.0
        %v2229 = vmax.f32 %v1954, 0.0
        %v2230 = vmax.f32 %v1977, 0.0
        %v2231 = vmax.f32 %v2000, 0.0
        %v2232 = vmax.f32 %v2023, 0.0
        %v2233 = vmax.f32 %v2046, 0.0
        %v2234 = vmax.f32 %v2069, 0.0
        %v2235 = vmax.f32 %v2092, 0.0
        %v2236 = vmax.f32 %v2115, 0.0
        %v2237 = vmax.f32 %v2138, 0.0
        %v2238 = vmax.f32 %v2161, 0.0
        %v2239 = vmax.f32 %v2184, 0.0
        %v2240 = vmax.f32 %v2207, 0.0
        %v2241 = vld [vmem:[%s864] sm:$0xff]
        %v2242 = vld [vmem:[%s864 + $0x8] sm:$0xff]
        %v2243 = vld [vmem:[%s864 + $0x10] sm:$0xff]
        %v2244 = vld [vmem:[%s864 + $0x18] sm:$0xff]
        %v2245 = vld [vmem:[%s864 + $0x20] sm:$0xff]
        %v2246 = vld [vmem:[%s864 + $0x28] sm:$0xff]
        %v2247 = vld [vmem:[%s864 + $0x30] sm:$0xff]
        %v2248 = vld [vmem:[%s864 + $0x38] sm:$0xff]
        %v2249 = vld [vmem:[%s864 + $0x40] sm:$0xff]
        %v2250 = vld [vmem:[%s864 + $0x48] sm:$0xff]
        %v2251 = vld [vmem:[%s864 + $0x50] sm:$0xff]
        %v2252 = vld [vmem:[%s864 + $0x58] sm:$0xff]
        %v2253 = vld [vmem:[%s864 + $0x60] sm:$0xff]
        %v2254 = vld [vmem:[%s864 + $0x68] sm:$0xff]
        %v2255 = vld [vmem:[%s864 + $0x70] sm:$0xff]
        %v2256 = vld [vmem:[%s864 + $0x78] sm:$0xff]
        %v2257 = vld [vmem:[%s864 + $0x80] sm:$0xff]
        %v2258 = vld [vmem:[%s864 + $0x88] sm:$0xff]
        %v2259 = vld [vmem:[%s864 + $0x90] sm:$0xff]
        %v2260 = vld [vmem:[%s864 + $0x98] sm:$0xff]
        %v2261 = vld [vmem:[%s864 + $0xa0] sm:$0xff]
        %v2262 = vld [vmem:[%s864 + $0xa8] sm:$0xff]
        %v2263 = vld [vmem:[%s864 + $0xb0] sm:$0xff]
        %v2264 = vld [vmem:[%s864 + $0xb8] sm:$0xff]
        %v2265 = vld [vmem:[%s864 + $0xc0] sm:$0xff]
        %v2266 = vld [vmem:[%s864 + $0xc8] sm:$0xff]
        %v2267 = vld [vmem:[%s864 + $0xd0] sm:$0xff]
        %v2268 = vld [vmem:[%s864 + $0xd8] sm:$0xff]
        %v2269 = vld [vmem:[%s864 + $0xe0] sm:$0xff]
        %v2270 = vld [vmem:[%s864 + $0xe8] sm:$0xff]
        %v2271 = vld [vmem:[%s864 + $0xf0] sm:$0xff]
        %v2272 = vld [vmem:[%s864 + $0xf8] sm:$0xff]
        %v2273 = vld [vmem:[%s864 + $0x100] sm:$0xff]
        %v2274 = vld [vmem:[%s864 + $0x108] sm:$0xff]
        %v2275 = vld [vmem:[%s864 + $0x110] sm:$0xff]
        %v2276 = vld [vmem:[%s864 + $0x118] sm:$0xff]
        %v2277 = vld [vmem:[%s864 + $0x120] sm:$0xff]
        %v2278 = vld [vmem:[%s864 + $0x128] sm:$0xff]
        %v2279 = vld [vmem:[%s864 + $0x130] sm:$0xff]
        %v2280 = vld [vmem:[%s864 + $0x138] sm:$0xff]
        %v2281 = vld [vmem:[%s864 + $0x140] sm:$0xff]
        %v2282 = vld [vmem:[%s864 + $0x148] sm:$0xff]
        %v2283 = vld [vmem:[%s864 + $0x150] sm:$0xff]
        %v2284 = vld [vmem:[%s864 + $0x158] sm:$0xff]
        %v2285 = vld [vmem:[%s864 + $0x160] sm:$0xff]
        %v2286 = vld [vmem:[%s864 + $0x168] sm:$0xff]
        %v2287 = vld [vmem:[%s864 + $0x170] sm:$0xff]
        %v2288 = vld [vmem:[%s864 + $0x178] sm:$0xff]
        %v2289 = vld [vmem:[%s864 + $0x180] sm:$0xff]
        %v2290 = vld [vmem:[%s864 + $0x188] sm:$0xff]
        %v2291 = vld [vmem:[%s864 + $0x190] sm:$0xff]
        %v2292 = vld [vmem:[%s864 + $0x198] sm:$0xff]
        %v2293 = vld [vmem:[%s864 + $0x1a0] sm:$0xff]
        %v2294 = vld [vmem:[%s864 + $0x1a8] sm:$0xff]
        %v2295 = vld [vmem:[%s864 + $0x1b0] sm:$0xff]
        %v2296 = vld [vmem:[%s864 + $0x1b8] sm:$0xff]
        %v2297 = vld [vmem:[%s864 + $0x1c0] sm:$0xff]
        %v2298 = vld [vmem:[%s864 + $0x1c8] sm:$0xff]
        %v2299 = vld [vmem:[%s864 + $0x1d0] sm:$0xff]
        %v2300 = vld [vmem:[%s864 + $0x1d8] sm:$0xff]
        %v2301 = vld [vmem:[%s864 + $0x1e0] sm:$0xff]
        %v2302 = vld [vmem:[%s864 + $0x1e8] sm:$0xff]
        %v2303 = vld [vmem:[%s864 + $0x1f0] sm:$0xff]
        %v2304 = vld [vmem:[%s864 + $0x1f8] sm:$0xff]
        %v2305 = vld [vmem:[%s864 + $0x200] sm:$0xff]
        %v2306 = vld [vmem:[%s864 + $0x208] sm:$0xff]
        %v2307 = vld [vmem:[%s864 + $0x210] sm:$0xff]
        %v2308 = vld [vmem:[%s864 + $0x218] sm:$0xff]
        %v2309 = vld [vmem:[%s864 + $0x220] sm:$0xff]
        %v2310 = vld [vmem:[%s864 + $0x228] sm:$0xff]
        %v2311 = vld [vmem:[%s864 + $0x230] sm:$0xff]
        %v2312 = vld [vmem:[%s864 + $0x238] sm:$0xff]
        %v2313 = vld [vmem:[%s864 + $0x240] sm:$0xff]
        %v2314 = vld [vmem:[%s864 + $0x248] sm:$0xff]
        %v2315 = vld [vmem:[%s864 + $0x250] sm:$0xff]
        %v2316 = vld [vmem:[%s864 + $0x258] sm:$0xff]
        %v2317 = vld [vmem:[%s864 + $0x260] sm:$0xff]
        %v2318 = vld [vmem:[%s864 + $0x268] sm:$0xff]
        %v2319 = vld [vmem:[%s864 + $0x270] sm:$0xff]
        %v2320 = vld [vmem:[%s864 + $0x278] sm:$0xff]
        %v2321 = vld [vmem:[%s864 + $0x280] sm:$0xff]
        %v2322 = vld [vmem:[%s864 + $0x288] sm:$0xff]
        %v2323 = vld [vmem:[%s864 + $0x290] sm:$0xff]
        %v2324 = vld [vmem:[%s864 + $0x298] sm:$0xff]
        %v2325 = vld [vmem:[%s864 + $0x2a0] sm:$0xff]
        %v2326 = vld [vmem:[%s864 + $0x2a8] sm:$0xff]
        %v2327 = vld [vmem:[%s864 + $0x2b0] sm:$0xff]
        %v2328 = vld [vmem:[%s864 + $0x2b8] sm:$0xff]
        %v2329 = vld [vmem:[%s864 + $0x2c0] sm:$0xff]
        %v2330 = vld [vmem:[%s864 + $0x2c8] sm:$0xff]
        %v2331 = vld [vmem:[%s864 + $0x2d0] sm:$0xff]
        %v2332 = vld [vmem:[%s864 + $0x2d8] sm:$0xff]
        %v2333 = vld [vmem:[%s864 + $0x2e0] sm:$0xff]
        %v2334 = vld [vmem:[%s864 + $0x2e8] sm:$0xff]
        %v2335 = vld [vmem:[%s864 + $0x2f0] sm:$0xff]
        %v2336 = vld [vmem:[%s864 + $0x2f8] sm:$0xff]
        %v2337 = vld [vmem:[%s864 + $0x300] sm:$0xff]
        %v2338 = vld [vmem:[%s864 + $0x308] sm:$0xff]
        %v2339 = vld [vmem:[%s864 + $0x310] sm:$0xff]
        %v2340 = vld [vmem:[%s864 + $0x318] sm:$0xff]
        %v2341 = vld [vmem:[%s864 + $0x320] sm:$0xff]
        %v2342 = vld [vmem:[%s864 + $0x328] sm:$0xff]
        %v2343 = vld [vmem:[%s864 + $0x330] sm:$0xff]
        %v2344 = vld [vmem:[%s864 + $0x338] sm:$0xff]
        %v2345 = vld [vmem:[%s864 + $0x340] sm:$0xff]
        %v2346 = vld [vmem:[%s864 + $0x348] sm:$0xff]
        %v2347 = vld [vmem:[%s864 + $0x350] sm:$0xff]
        %v2348 = vld [vmem:[%s864 + $0x358] sm:$0xff]
        %v2349 = vld [vmem:[%s864 + $0x360] sm:$0xff]
        %v2350 = vld [vmem:[%s864 + $0x368] sm:$0xff]
        %v2351 = vld [vmem:[%s864 + $0x370] sm:$0xff]
        %v2352 = vld [vmem:[%s864 + $0x378] sm:$0xff]
        %v2353 = vld [vmem:[%s864 + $0x380] sm:$0xff]
        %v2354 = vld [vmem:[%s864 + $0x388] sm:$0xff]
        %v2355 = vld [vmem:[%s864 + $0x390] sm:$0xff]
        %v2356 = vld [vmem:[%s864 + $0x398] sm:$0xff]
        %v2357 = vld [vmem:[%s864 + $0x3a0] sm:$0xff]
        %v2358 = vld [vmem:[%s864 + $0x3a8] sm:$0xff]
        %v2359 = vld [vmem:[%s864 + $0x3b0] sm:$0xff]
        %v2360 = vld [vmem:[%s864 + $0x3b8] sm:$0xff]
        %v2361 = vld [vmem:[%s864 + $0x3c0] sm:$0xff]
        %v2362 = vld [vmem:[%s864 + $0x3c8] sm:$0xff]
        %v2363 = vld [vmem:[%s864 + $0x3d0] sm:$0xff]
        %v2364 = vld [vmem:[%s864 + $0x3d8] sm:$0xff]
        %v2365 = vld [vmem:[%s864 + $0x3e0] sm:$0xff]
        %v2366 = vld [vmem:[%s864 + $0x3e8] sm:$0xff]
        %v2367 = vld [vmem:[%s864 + $0x3f0] sm:$0xff]
        %v2368 = vld [vmem:[%s864 + $0x3f8] sm:$0xff]
        %v2369 = vld [vmem:[%s864 + $0x400] sm:$0xff]
        %v2370 = vld [vmem:[%s864 + $0x408] sm:$0xff]
        %v2371 = vld [vmem:[%s864 + $0x410] sm:$0xff]
        %v2372 = vld [vmem:[%s864 + $0x418] sm:$0xff]
        %v2373 = vld [vmem:[%s864 + $0x420] sm:$0xff]
        %v2374 = vld [vmem:[%s864 + $0x428] sm:$0xff]
        %v2375 = vld [vmem:[%s864 + $0x430] sm:$0xff]
        %v2376 = vld [vmem:[%s864 + $0x438] sm:$0xff]
        %v2377 = vld [vmem:[%s864 + $0x440] sm:$0xff]
        %v2378 = vld [vmem:[%s864 + $0x448] sm:$0xff]
        %v2379 = vld [vmem:[%s864 + $0x450] sm:$0xff]
        %v2380 = vld [vmem:[%s864 + $0x458] sm:$0xff]
        %v2381 = vld [vmem:[%s864 + $0x460] sm:$0xff]
        %v2382 = vld [vmem:[%s864 + $0x468] sm:$0xff]
        %v2383 = vld [vmem:[%s864 + $0x470] sm:$0xff]
        %v2384 = vld [vmem:[%s864 + $0x478] sm:$0xff]
        %v2385 = vld [vmem:[%s864 + $0x480] sm:$0xff]
        %v2386 = vld [vmem:[%s864 + $0x488] sm:$0xff]
        %v2387 = vld [vmem:[%s864 + $0x490] sm:$0xff]
        %v2388 = vld [vmem:[%s864 + $0x498] sm:$0xff]
        %v2389 = vld [vmem:[%s864 + $0x4a0] sm:$0xff]
        %v2390 = vld [vmem:[%s864 + $0x4a8] sm:$0xff]
        %v2391 = vld [vmem:[%s864 + $0x4b0] sm:$0xff]
        %v2392 = vld [vmem:[%s864 + $0x4b8] sm:$0xff]
        %v2393 = vld [vmem:[%s864 + $0x4c0] sm:$0xff]
        %v2394 = vld [vmem:[%s864 + $0x4c8] sm:$0xff]
        %v2395 = vld [vmem:[%s864 + $0x4d0] sm:$0xff]
        %v2396 = vld [vmem:[%s864 + $0x4d8] sm:$0xff]
        %v2397 = vld [vmem:[%s864 + $0x4e0] sm:$0xff]
        %v2398 = vld [vmem:[%s864 + $0x4e8] sm:$0xff]
        %v2399 = vld [vmem:[%s864 + $0x4f0] sm:$0xff]
        %v2400 = vld [vmem:[%s864 + $0x4f8] sm:$0xff]
        %v2401 = vld [vmem:[%s864 + $0x500] sm:$0xff]
        %v2402 = vld [vmem:[%s864 + $0x508] sm:$0xff]
        %v2403 = vld [vmem:[%s864 + $0x510] sm:$0xff]
        %v2404 = vld [vmem:[%s864 + $0x518] sm:$0xff]
        %v2405 = vld [vmem:[%s864 + $0x520] sm:$0xff]
        %v2406 = vld [vmem:[%s864 + $0x528] sm:$0xff]
        %v2407 = vld [vmem:[%s864 + $0x530] sm:$0xff]
        %v2408 = vld [vmem:[%s864 + $0x538] sm:$0xff]
        %v2409 = vld [vmem:[%s864 + $0x540] sm:$0xff]
        %v2410 = vld [vmem:[%s864 + $0x548] sm:$0xff]
        %v2411 = vld [vmem:[%s864 + $0x550] sm:$0xff]
        %v2412 = vld [vmem:[%s864 + $0x558] sm:$0xff]
        %v2413 = vld [vmem:[%s864 + $0x560] sm:$0xff]
        %v2414 = vld [vmem:[%s864 + $0x568] sm:$0xff]
        %v2415 = vld [vmem:[%s864 + $0x570] sm:$0xff]
        %v2416 = vld [vmem:[%s864 + $0x578] sm:$0xff]
        %v2417 = vld [vmem:[%s864 + $0x580] sm:$0xff]
        %v2418 = vld [vmem:[%s864 + $0x588] sm:$0xff]
        %v2419 = vld [vmem:[%s864 + $0x590] sm:$0xff]
        %v2420 = vld [vmem:[%s864 + $0x598] sm:$0xff]
        %v2421 = vld [vmem:[%s864 + $0x5a0] sm:$0xff]
        %v2422 = vld [vmem:[%s864 + $0x5a8] sm:$0xff]
        %v2423 = vld [vmem:[%s864 + $0x5b0] sm:$0xff]
        %v2424 = vld [vmem:[%s864 + $0x5b8] sm:$0xff]
        %v2425 = vld [vmem:[%s864 + $0x5c0] sm:$0xff]
        %v2426 = vld [vmem:[%s864 + $0x5c8] sm:$0xff]
        %v2427 = vld [vmem:[%s864 + $0x5d0] sm:$0xff]
        %v2428 = vld [vmem:[%s864 + $0x5d8] sm:$0xff]
        %v2429 = vld [vmem:[%s864 + $0x5e0] sm:$0xff]
        %v2430 = vld [vmem:[%s864 + $0x5e8] sm:$0xff]
        %v2431 = vld [vmem:[%s864 + $0x5f0] sm:$0xff]
        %v2432 = vld [vmem:[%s864 + $0x5f8] sm:$0xff]
        %v2433 = vld [vmem:[%s864 + $0x600] sm:$0xff]
        %v2434 = vld [vmem:[%s864 + $0x608] sm:$0xff]
        %v2435 = vld [vmem:[%s864 + $0x610] sm:$0xff]
        %v2436 = vld [vmem:[%s864 + $0x618] sm:$0xff]
        %v2437 = vld [vmem:[%s864 + $0x620] sm:$0xff]
        %v2438 = vld [vmem:[%s864 + $0x628] sm:$0xff]
        %v2439 = vld [vmem:[%s864 + $0x630] sm:$0xff]
        %v2440 = vld [vmem:[%s864 + $0x638] sm:$0xff]
        %v2441 = vld [vmem:[%s864 + $0x640] sm:$0xff]
        %v2442 = vld [vmem:[%s864 + $0x648] sm:$0xff]
        %v2443 = vld [vmem:[%s864 + $0x650] sm:$0xff]
        %v2444 = vld [vmem:[%s864 + $0x658] sm:$0xff]
        %v2445 = vld [vmem:[%s864 + $0x660] sm:$0xff]
        %v2446 = vld [vmem:[%s864 + $0x668] sm:$0xff]
        %v2447 = vld [vmem:[%s864 + $0x670] sm:$0xff]
        %v2448 = vld [vmem:[%s864 + $0x678] sm:$0xff]
        %v2449 = vld [vmem:[%s864 + $0x680] sm:$0xff]
        %v2450 = vld [vmem:[%s864 + $0x688] sm:$0xff]
        %v2451 = vld [vmem:[%s864 + $0x690] sm:$0xff]
        %v2452 = vld [vmem:[%s864 + $0x698] sm:$0xff]
        %v2453 = vld [vmem:[%s864 + $0x6a0] sm:$0xff]
        %v2454 = vld [vmem:[%s864 + $0x6a8] sm:$0xff]
        %v2455 = vld [vmem:[%s864 + $0x6b0] sm:$0xff]
        %v2456 = vld [vmem:[%s864 + $0x6b8] sm:$0xff]
        %v2457 = vld [vmem:[%s864 + $0x6c0] sm:$0xff]
        %v2458 = vld [vmem:[%s864 + $0x6c8] sm:$0xff]
        %v2459 = vld [vmem:[%s864 + $0x6d0] sm:$0xff]
        %v2460 = vld [vmem:[%s864 + $0x6d8] sm:$0xff]
        %v2461 = vld [vmem:[%s864 + $0x6e0] sm:$0xff]
        %v2462 = vld [vmem:[%s864 + $0x6e8] sm:$0xff]
        %v2463 = vld [vmem:[%s864 + $0x6f0] sm:$0xff]
        %v2464 = vld [vmem:[%s864 + $0x6f8] sm:$0xff]
        %v2465 = vld [vmem:[%s864 + $0x700] sm:$0xff]
        %v2466 = vld [vmem:[%s864 + $0x708] sm:$0xff]
        %v2467 = vld [vmem:[%s864 + $0x710] sm:$0xff]
        %v2468 = vld [vmem:[%s864 + $0x718] sm:$0xff]
        %v2469 = vld [vmem:[%s864 + $0x720] sm:$0xff]
        %v2470 = vld [vmem:[%s864 + $0x728] sm:$0xff]
        %v2471 = vld [vmem:[%s864 + $0x730] sm:$0xff]
        %v2472 = vld [vmem:[%s864 + $0x738] sm:$0xff]
        %v2473 = vld [vmem:[%s864 + $0x740] sm:$0xff]
        %v2474 = vld [vmem:[%s864 + $0x748] sm:$0xff]
        %v2475 = vld [vmem:[%s864 + $0x750] sm:$0xff]
        %v2476 = vld [vmem:[%s864 + $0x758] sm:$0xff]
        %v2477 = vld [vmem:[%s864 + $0x760] sm:$0xff]
        %v2478 = vld [vmem:[%s864 + $0x768] sm:$0xff]
        %v2479 = vld [vmem:[%s864 + $0x770] sm:$0xff]
        %v2480 = vld [vmem:[%s864 + $0x778] sm:$0xff]
        %v2481 = vld [vmem:[%s864 + $0x780] sm:$0xff]
        %v2482 = vld [vmem:[%s864 + $0x788] sm:$0xff]
        %v2483 = vld [vmem:[%s864 + $0x790] sm:$0xff]
        %v2484 = vld [vmem:[%s864 + $0x798] sm:$0xff]
        %v2485 = vld [vmem:[%s864 + $0x7a0] sm:$0xff]
        %v2486 = vld [vmem:[%s864 + $0x7a8] sm:$0xff]
        %v2487 = vld [vmem:[%s864 + $0x7b0] sm:$0xff]
        %v2488 = vld [vmem:[%s864 + $0x7b8] sm:$0xff]
        %v2489 = vld [vmem:[%s864 + $0x7c0] sm:$0xff]
        %v2490 = vld [vmem:[%s864 + $0x7c8] sm:$0xff]
        %v2491 = vld [vmem:[%s864 + $0x7d0] sm:$0xff]
        %v2492 = vld [vmem:[%s864 + $0x7d8] sm:$0xff]
        %v2493 = vld [vmem:[%s864 + $0x7e0] sm:$0xff]
        %v2494 = vld [vmem:[%s864 + $0x7e8] sm:$0xff]
        %v2495 = vld [vmem:[%s864 + $0x7f0] sm:$0xff]
        %v2496 = vld [vmem:[%s864 + $0x7f8] sm:$0xff]
        %2497 = vmatpush.msra.mxu0 %v2256
        %2498 = vmatpush.msra.mxu0 %v2255
        %2499 = vmatpush.msra.mxu0 %v2254
        %2500 = vmatpush.msra.mxu0 %v2253
        %2501 = vmatpush.msra.mxu0 %v2252
        %2502 = vmatpush.msra.mxu0 %v2251
        %2503 = vmatpush.msra.mxu0 %v2250
        %2504 = vmatpush.msra.mxu0 %v2249
        %2505 = vmatpush.msra.mxu0 %v2248
        %2506 = vmatpush.msra.mxu0 %v2247
        %2507 = vmatpush.msra.mxu0 %v2246
        %2508 = vmatpush.msra.mxu0 %v2245
        %2509 = vmatpush.msra.mxu0 %v2244
        %2510 = vmatpush.msra.mxu0 %v2243
        %2511 = vmatpush.msra.mxu0 %v2242
        %2512 = vmatpush.msra.mxu0 %v2241
        %2513 = vmatmul.f32.gmra.mxu0 %v2209
        %v2514 = vpop.f32.mrf.mxu0
        %v2515 = vadd.f32 0.0, %v2514
        %2516 = vmatmul.f32.gmra.mxu0 %v2225
        %v2517 = vpop.f32.mrf.mxu0
        %v2518 = vadd.f32 0.0, %v2517
        %2519 = vdwg.mxu0
        %2520 = vmatpush.msra.mxu0 %v2272
        %2521 = vmatpush.msra.mxu0 %v2271
        %2522 = vmatpush.msra.mxu0 %v2270
        %2523 = vmatpush.msra.mxu0 %v2269
        %2524 = vmatpush.msra.mxu0 %v2268
        %2525 = vmatpush.msra.mxu0 %v2267
        %2526 = vmatpush.msra.mxu0 %v2266
        %2527 = vmatpush.msra.mxu0 %v2265
        %2528 = vmatpush.msra.mxu0 %v2264
        %2529 = vmatpush.msra.mxu0 %v2263
        %2530 = vmatpush.msra.mxu0 %v2262
        %2531 = vmatpush.msra.mxu0 %v2261
        %2532 = vmatpush.msra.mxu0 %v2260
        %2533 = vmatpush.msra.mxu0 %v2259
        %2534 = vmatpush.msra.mxu0 %v2258
        %2535 = vmatpush.msra.mxu0 %v2257
        %2536 = vmatmul.f32.gmra.mxu0 %v2210
        %v2537 = vpop.f32.mrf.mxu0
        %v2538 = vadd.f32 %v2515, %v2537
        %2539 = vmatmul.f32.gmra.mxu0 %v2226
        %v2540 = vpop.f32.mrf.mxu0
        %v2541 = vadd.f32 %v2518, %v2540
        %2542 = vdwg.mxu0
        %2543 = vmatpush.msra.mxu0 %v2288
        %2544 = vmatpush.msra.mxu0 %v2287
        %2545 = vmatpush.msra.mxu0 %v2286
        %2546 = vmatpush.msra.mxu0 %v2285
        %2547 = vmatpush.msra.mxu0 %v2284
        %2548 = vmatpush.msra.mxu0 %v2283
        %2549 = vmatpush.msra.mxu0 %v2282
        %2550 = vmatpush.msra.mxu0 %v2281
        %2551 = vmatpush.msra.mxu0 %v2280
        %2552 = vmatpush.msra.mxu0 %v2279
        %2553 = vmatpush.msra.mxu0 %v2278
        %2554 = vmatpush.msra.mxu0 %v2277
        %2555 = vmatpush.msra.mxu0 %v2276
        %2556 = vmatpush.msra.mxu0 %v2275
        %2557 = vmatpush.msra.mxu0 %v2274
        %2558 = vmatpush.msra.mxu0 %v2273
        %2559 = vmatmul.f32.gmra.mxu0 %v2211
        %v2560 = vpop.f32.mrf.mxu0
        %v2561 = vadd.f32 %v2538, %v2560
        %2562 = vmatmul.f32.gmra.mxu0 %v2227
        %v2563 = vpop.f32.mrf.mxu0
        %v2564 = vadd.f32 %v2541, %v2563
        %2565 = vdwg.mxu0
        %2566 = vmatpush.msra.mxu0 %v2304
        %2567 = vmatpush.msra.mxu0 %v2303
        %2568 = vmatpush.msra.mxu0 %v2302
        %2569 = vmatpush.msra.mxu0 %v2301
        %2570 = vmatpush.msra.mxu0 %v2300
        %2571 = vmatpush.msra.mxu0 %v2299
        %2572 = vmatpush.msra.mxu0 %v2298
        %2573 = vmatpush.msra.mxu0 %v2297
        %2574 = vmatpush.msra.mxu0 %v2296
        %2575 = vmatpush.msra.mxu0 %v2295
        %2576 = vmatpush.msra.mxu0 %v2294
        %2577 = vmatpush.msra.mxu0 %v2293
        %2578 = vmatpush.msra.mxu0 %v2292
        %2579 = vmatpush.msra.mxu0 %v2291
        %2580 = vmatpush.msra.mxu0 %v2290
        %2581 = vmatpush.msra.mxu0 %v2289
        %2582 = vmatmul.f32.gmra.mxu0 %v2212
        %v2583 = vpop.f32.mrf.mxu0
        %v2584 = vadd.f32 %v2561, %v2583
        %2585 = vmatmul.f32.gmra.mxu0 %v2228
        %v2586 = vpop.f32.mrf.mxu0
        %v2587 = vadd.f32 %v2564, %v2586
        %2588 = vdwg.mxu0
        %2589 = vmatpush.msra.mxu0 %v2320
        %2590 = vmatpush.msra.mxu0 %v2319
        %2591 = vmatpush.msra.mxu0 %v2318
        %2592 = vmatpush.msra.mxu0 %v2317
        %2593 = vmatpush.msra.mxu0 %v2316
        %2594 = vmatpush.msra.mxu0 %v2315
        %2595 = vmatpush.msra.mxu0 %v2314
        %2596 = vmatpush.msra.mxu0 %v2313
        %2597 = vmatpush.msra.mxu0 %v2312
        %2598 = vmatpush.msra.mxu0 %v2311
        %2599 = vmatpush.msra.mxu0 %v2310
        %2600 = vmatpush.msra.mxu0 %v2309
        %2601 = vmatpush.msra.mxu0 %v2308
        %2602 = vmatpush.msra.mxu0 %v2307
        %2603 = vmatpush.msra.mxu0 %v2306
        %2604 = vmatpush.msra.mxu0 %v2305
        %2605 = vmatmul.f32.gmra.mxu0 %v2213
        %v2606 = vpop.f32.mrf.mxu0
        %v2607 = vadd.f32 %v2584, %v2606
        %2608 = vmatmul.f32.gmra.mxu0 %v2229
        %v2609 = vpop.f32.mrf.mxu0
        %v2610 = vadd.f32 %v2587, %v2609
        %2611 = vdwg.mxu0
        %2612 = vmatpush.msra.mxu0 %v2336
        %2613 = vmatpush.msra.mxu0 %v2335
        %2614 = vmatpush.msra.mxu0 %v2334
        %2615 = vmatpush.msra.mxu0 %v2333
        %2616 = vmatpush.msra.mxu0 %v2332
        %2617 = vmatpush.msra.mxu0 %v2331
        %2618 = vmatpush.msra.mxu0 %v2330
        %2619 = vmatpush.msra.mxu0 %v2329
        %2620 = vmatpush.msra.mxu0 %v2328
        %2621 = vmatpush.msra.mxu0 %v2327
        %2622 = vmatpush.msra.mxu0 %v2326
        %2623 = vmatpush.msra.mxu0 %v2325
        %2624 = vmatpush.msra.mxu0 %v2324
        %2625 = vmatpush.msra.mxu0 %v2323
        %2626 = vmatpush.msra.mxu0 %v2322
        %2627 = vmatpush.msra.mxu0 %v2321
        %2628 = vmatmul.f32.gmra.mxu0 %v2214
        %v2629 = vpop.f32.mrf.mxu0
        %v2630 = vadd.f32 %v2607, %v2629
        %2631 = vmatmul.f32.gmra.mxu0 %v2230
        %v2632 = vpop.f32.mrf.mxu0
        %v2633 = vadd.f32 %v2610, %v2632
        %2634 = vdwg.mxu0
        %2635 = vmatpush.msra.mxu0 %v2352
        %2636 = vmatpush.msra.mxu0 %v2351
        %2637 = vmatpush.msra.mxu0 %v2350
        %2638 = vmatpush.msra.mxu0 %v2349
        %2639 = vmatpush.msra.mxu0 %v2348
        %2640 = vmatpush.msra.mxu0 %v2347
        %2641 = vmatpush.msra.mxu0 %v2346
        %2642 = vmatpush.msra.mxu0 %v2345
        %2643 = vmatpush.msra.mxu0 %v2344
        %2644 = vmatpush.msra.mxu0 %v2343
        %2645 = vmatpush.msra.mxu0 %v2342
        %2646 = vmatpush.msra.mxu0 %v2341
        %2647 = vmatpush.msra.mxu0 %v2340
        %2648 = vmatpush.msra.mxu0 %v2339
        %2649 = vmatpush.msra.mxu0 %v2338
        %2650 = vmatpush.msra.mxu0 %v2337
        %2651 = vmatmul.f32.gmra.mxu0 %v2215
        %v2652 = vpop.f32.mrf.mxu0
        %v2653 = vadd.f32 %v2630, %v2652
        %2654 = vmatmul.f32.gmra.mxu0 %v2231
        %v2655 = vpop.f32.mrf.mxu0
        %v2656 = vadd.f32 %v2633, %v2655
        %2657 = vdwg.mxu0
        %2658 = vmatpush.msra.mxu0 %v2368
        %2659 = vmatpush.msra.mxu0 %v2367
        %2660 = vmatpush.msra.mxu0 %v2366
        %2661 = vmatpush.msra.mxu0 %v2365
        %2662 = vmatpush.msra.mxu0 %v2364
        %2663 = vmatpush.msra.mxu0 %v2363
        %2664 = vmatpush.msra.mxu0 %v2362
        %2665 = vmatpush.msra.mxu0 %v2361
        %2666 = vmatpush.msra.mxu0 %v2360
        %2667 = vmatpush.msra.mxu0 %v2359
        %2668 = vmatpush.msra.mxu0 %v2358
        %2669 = vmatpush.msra.mxu0 %v2357
        %2670 = vmatpush.msra.mxu0 %v2356
        %2671 = vmatpush.msra.mxu0 %v2355
        %2672 = vmatpush.msra.mxu0 %v2354
        %2673 = vmatpush.msra.mxu0 %v2353
        %2674 = vmatmul.f32.gmra.mxu0 %v2216
        %v2675 = vpop.f32.mrf.mxu0
        %v2676 = vadd.f32 %v2653, %v2675
        %2677 = vmatmul.f32.gmra.mxu0 %v2232
        %v2678 = vpop.f32.mrf.mxu0
        %v2679 = vadd.f32 %v2656, %v2678
        %2680 = vdwg.mxu0
        %2681 = vmatpush.msra.mxu0 %v2384
        %2682 = vmatpush.msra.mxu0 %v2383
        %2683 = vmatpush.msra.mxu0 %v2382
        %2684 = vmatpush.msra.mxu0 %v2381
        %2685 = vmatpush.msra.mxu0 %v2380
        %2686 = vmatpush.msra.mxu0 %v2379
        %2687 = vmatpush.msra.mxu0 %v2378
        %2688 = vmatpush.msra.mxu0 %v2377
        %2689 = vmatpush.msra.mxu0 %v2376
        %2690 = vmatpush.msra.mxu0 %v2375
        %2691 = vmatpush.msra.mxu0 %v2374
        %2692 = vmatpush.msra.mxu0 %v2373
        %2693 = vmatpush.msra.mxu0 %v2372
        %2694 = vmatpush.msra.mxu0 %v2371
        %2695 = vmatpush.msra.mxu0 %v2370
        %2696 = vmatpush.msra.mxu0 %v2369
        %2697 = vmatmul.f32.gmra.mxu0 %v2217
        %v2698 = vpop.f32.mrf.mxu0
        %v2699 = vadd.f32 %v2676, %v2698
        %2700 = vmatmul.f32.gmra.mxu0 %v2233
        %v2701 = vpop.f32.mrf.mxu0
        %v2702 = vadd.f32 %v2679, %v2701
        %2703 = vdwg.mxu0
        %2704 = vmatpush.msra.mxu0 %v2400
        %2705 = vmatpush.msra.mxu0 %v2399
        %2706 = vmatpush.msra.mxu0 %v2398
        %2707 = vmatpush.msra.mxu0 %v2397
        %2708 = vmatpush.msra.mxu0 %v2396
        %2709 = vmatpush.msra.mxu0 %v2395
        %2710 = vmatpush.msra.mxu0 %v2394
        %2711 = vmatpush.msra.mxu0 %v2393
        %2712 = vmatpush.msra.mxu0 %v2392
        %2713 = vmatpush.msra.mxu0 %v2391
        %2714 = vmatpush.msra.mxu0 %v2390
        %2715 = vmatpush.msra.mxu0 %v2389
        %2716 = vmatpush.msra.mxu0 %v2388
        %2717 = vmatpush.msra.mxu0 %v2387
        %2718 = vmatpush.msra.mxu0 %v2386
        %2719 = vmatpush.msra.mxu0 %v2385
        %2720 = vmatmul.f32.gmra.mxu0 %v2218
        %v2721 = vpop.f32.mrf.mxu0
        %v2722 = vadd.f32 %v2699, %v2721
        %2723 = vmatmul.f32.gmra.mxu0 %v2234
        %v2724 = vpop.f32.mrf.mxu0
        %v2725 = vadd.f32 %v2702, %v2724
        %2726 = vdwg.mxu0
        %2727 = vmatpush.msra.mxu0 %v2416
        %2728 = vmatpush.msra.mxu0 %v2415
        %2729 = vmatpush.msra.mxu0 %v2414
        %2730 = vmatpush.msra.mxu0 %v2413
        %2731 = vmatpush.msra.mxu0 %v2412
        %2732 = vmatpush.msra.mxu0 %v2411
        %2733 = vmatpush.msra.mxu0 %v2410
        %2734 = vmatpush.msra.mxu0 %v2409
        %2735 = vmatpush.msra.mxu0 %v2408
        %2736 = vmatpush.msra.mxu0 %v2407
        %2737 = vmatpush.msra.mxu0 %v2406
        %2738 = vmatpush.msra.mxu0 %v2405
        %2739 = vmatpush.msra.mxu0 %v2404
        %2740 = vmatpush.msra.mxu0 %v2403
        %2741 = vmatpush.msra.mxu0 %v2402
        %2742 = vmatpush.msra.mxu0 %v2401
        %2743 = vmatmul.f32.gmra.mxu0 %v2219
        %v2744 = vpop.f32.mrf.mxu0
        %v2745 = vadd.f32 %v2722, %v2744
        %2746 = vmatmul.f32.gmra.mxu0 %v2235
        %v2747 = vpop.f32.mrf.mxu0
        %v2748 = vadd.f32 %v2725, %v2747
        %2749 = vdwg.mxu0
        %2750 = vmatpush.msra.mxu0 %v2432
        %2751 = vmatpush.msra.mxu0 %v2431
        %2752 = vmatpush.msra.mxu0 %v2430
        %2753 = vmatpush.msra.mxu0 %v2429
        %2754 = vmatpush.msra.mxu0 %v2428
        %2755 = vmatpush.msra.mxu0 %v2427
        %2756 = vmatpush.msra.mxu0 %v2426
        %2757 = vmatpush.msra.mxu0 %v2425
        %2758 = vmatpush.msra.mxu0 %v2424
        %2759 = vmatpush.msra.mxu0 %v2423
        %2760 = vmatpush.msra.mxu0 %v2422
        %2761 = vmatpush.msra.mxu0 %v2421
        %2762 = vmatpush.msra.mxu0 %v2420
        %2763 = vmatpush.msra.mxu0 %v2419
        %2764 = vmatpush.msra.mxu0 %v2418
        %2765 = vmatpush.msra.mxu0 %v2417
        %2766 = vmatmul.f32.gmra.mxu0 %v2220
        %v2767 = vpop.f32.mrf.mxu0
        %v2768 = vadd.f32 %v2745, %v2767
        %2769 = vmatmul.f32.gmra.mxu0 %v2236
        %v2770 = vpop.f32.mrf.mxu0
        %v2771 = vadd.f32 %v2748, %v2770
        %2772 = vdwg.mxu0
        %2773 = vmatpush.msra.mxu0 %v2448
        %2774 = vmatpush.msra.mxu0 %v2447
        %2775 = vmatpush.msra.mxu0 %v2446
        %2776 = vmatpush.msra.mxu0 %v2445
        %2777 = vmatpush.msra.mxu0 %v2444
        %2778 = vmatpush.msra.mxu0 %v2443
        %2779 = vmatpush.msra.mxu0 %v2442
        %2780 = vmatpush.msra.mxu0 %v2441
        %2781 = vmatpush.msra.mxu0 %v2440
        %2782 = vmatpush.msra.mxu0 %v2439
        %2783 = vmatpush.msra.mxu0 %v2438
        %2784 = vmatpush.msra.mxu0 %v2437
        %2785 = vmatpush.msra.mxu0 %v2436
        %2786 = vmatpush.msra.mxu0 %v2435
        %2787 = vmatpush.msra.mxu0 %v2434
        %2788 = vmatpush.msra.mxu0 %v2433
        %2789 = vmatmul.f32.gmra.mxu0 %v2221
        %v2790 = vpop.f32.mrf.mxu0
        %v2791 = vadd.f32 %v2768, %v2790
        %2792 = vmatmul.f32.gmra.mxu0 %v2237
        %v2793 = vpop.f32.mrf.mxu0
        %v2794 = vadd.f32 %v2771, %v2793
        %2795 = vdwg.mxu0
        %2796 = vmatpush.msra.mxu0 %v2464
        %2797 = vmatpush.msra.mxu0 %v2463
        %2798 = vmatpush.msra.mxu0 %v2462
        %2799 = vmatpush.msra.mxu0 %v2461
        %2800 = vmatpush.msra.mxu0 %v2460
        %2801 = vmatpush.msra.mxu0 %v2459
        %2802 = vmatpush.msra.mxu0 %v2458
        %2803 = vmatpush.msra.mxu0 %v2457
        %2804 = vmatpush.msra.mxu0 %v2456
        %2805 = vmatpush.msra.mxu0 %v2455
        %2806 = vmatpush.msra.mxu0 %v2454
        %2807 = vmatpush.msra.mxu0 %v2453
        %2808 = vmatpush.msra.mxu0 %v2452
        %2809 = vmatpush.msra.mxu0 %v2451
        %2810 = vmatpush.msra.mxu0 %v2450
        %2811 = vmatpush.msra.mxu0 %v2449
        %2812 = vmatmul.f32.gmra.mxu0 %v2222
        %v2813 = vpop.f32.mrf.mxu0
        %v2814 = vadd.f32 %v2791, %v2813
        %2815 = vmatmul.f32.gmra.mxu0 %v2238
        %v2816 = vpop.f32.mrf.mxu0
        %v2817 = vadd.f32 %v2794, %v2816
        %2818 = vdwg.mxu0
        %2819 = vmatpush.msra.mxu0 %v2480
        %2820 = vmatpush.msra.mxu0 %v2479
        %2821 = vmatpush.msra.mxu0 %v2478
        %2822 = vmatpush.msra.mxu0 %v2477
        %2823 = vmatpush.msra.mxu0 %v2476
        %2824 = vmatpush.msra.mxu0 %v2475
        %2825 = vmatpush.msra.mxu0 %v2474
        %2826 = vmatpush.msra.mxu0 %v2473
        %2827 = vmatpush.msra.mxu0 %v2472
        %2828 = vmatpush.msra.mxu0 %v2471
        %2829 = vmatpush.msra.mxu0 %v2470
        %2830 = vmatpush.msra.mxu0 %v2469
        %2831 = vmatpush.msra.mxu0 %v2468
        %2832 = vmatpush.msra.mxu0 %v2467
        %2833 = vmatpush.msra.mxu0 %v2466
        %2834 = vmatpush.msra.mxu0 %v2465
        %2835 = vmatmul.f32.gmra.mxu0 %v2223
        %v2836 = vpop.f32.mrf.mxu0
        %v2837 = vadd.f32 %v2814, %v2836
        %2838 = vmatmul.f32.gmra.mxu0 %v2239
        %v2839 = vpop.f32.mrf.mxu0
        %v2840 = vadd.f32 %v2817, %v2839
        %2841 = vdwg.mxu0
        %2842 = vmatpush.msra.mxu0 %v2496
        %2843 = vmatpush.msra.mxu0 %v2495
        %2844 = vmatpush.msra.mxu0 %v2494
        %2845 = vmatpush.msra.mxu0 %v2493
        %2846 = vmatpush.msra.mxu0 %v2492
        %2847 = vmatpush.msra.mxu0 %v2491
        %2848 = vmatpush.msra.mxu0 %v2490
        %2849 = vmatpush.msra.mxu0 %v2489
        %2850 = vmatpush.msra.mxu0 %v2488
        %2851 = vmatpush.msra.mxu0 %v2487
        %2852 = vmatpush.msra.mxu0 %v2486
        %2853 = vmatpush.msra.mxu0 %v2485
        %2854 = vmatpush.msra.mxu0 %v2484
        %2855 = vmatpush.msra.mxu0 %v2483
        %2856 = vmatpush.msra.mxu0 %v2482
        %2857 = vmatpush.msra.mxu0 %v2481
        %2858 = vmatmul.f32.gmra.mxu0 %v2224
        %v2859 = vpop.f32.mrf.mxu0
        %v2860 = vadd.f32 %v2837, %v2859
        %2861 = vmatmul.f32.gmra.mxu0 %v2240
        %v2862 = vpop.f32.mrf.mxu0
        %v2863 = vadd.f32 %v2840, %v2862
        %2864 = vdwg.mxu0
        %v2865 = vadd.f32 %v1549, %v2860
        %v2866 = vadd.f32 %v1550, %v2863
        %v2867 = vld [vmem:[%s867] sm:$0x1]
        %v2869 = vperm.slane %v2867, 0
        %v2871 = vadd.f32 %v2865, %v2869
        %v2872 = vadd.f32 %v2866, %v2869
        %2873 = vst.msk [vmem:[#allocation2] sm:$0xff] %vm883, %v2871
        %2874 = vst.msk [vmem:[#allocation2 + $0x8] sm:$0xff] %vm883, %v2872
        %p2875 = scmp.eq.s32.totalorder %s32, 5
        // Predicated region
        $region105: #{tpu_custom_call.1} parent=99 // pred_check
          %p2876 = pneg %p2875
        $region106: #{tpu_custom_call.1} parent=99 // pred_check_branch
          %2878 = sbr.rel (%p2876) target = $region108
        $region107: #{tpu_custom_call.1} parent=99 // pred_region
          %v2879 = vld [vmem:[%s18] sm:$0x1]
          %v2880 = vld [vmem:[%s19] sm:$0x1]
          %v2881 = vsel %vm883, %v2871, 0.0
          %2882 = vadd.xlane.f32.xlu0 %v2881
          %v2883 = vpop.xlane.xlu0 %2882
          %v2884 = vsel %vm883, %v2872, 0.0
          %2885 = vadd.xlane.f32.xlu0 %v2884
          %v2886 = vpop.xlane.xlu0 %2885
          %v2887 = vmul.f32 %v2883, %v896
          %v2888 = vmul.f32 %v2886, %v896
          %v2889 = vsub.f32 %v2871, %v2887
          %v2890 = vsub.f32 %v2872, %v2888
          %v2891 = vmul.f32 %v2889, %v2889
          %v2892 = vmul.f32 %v2890, %v2890
          %v2893 = vsel %vm883, %v2891, 0.0
          %2894 = vadd.xlane.f32.xlu0 %v2893
          %v2895 = vpop.xlane.xlu0 %2894
          %v2896 = vsel %vm883, %v2892, 0.0
          %2897 = vadd.xlane.f32.xlu0 %v2896
          %v2898 = vpop.xlane.xlu0 %2897
          %v2899 = vmul.f32 %v2895, %v915
          %v2900 = vmul.f32 %v2898, %v915
          %v2901 = vrsqrt.pop %v2899
          %v2902 = vmul.f32 %v2901, %v2899
          %v2903 = vmul.f32 %v2902, %v2901
          %v2904 = vmul.f32 0.5, %v2903
          %v2905 = vsub.f32 1.5, %v2904
          %v2906 = vmul.f32 %v2901, %v2905
          %v2907 = vmul.f32 %v2899, %v2906
          %vm2908 = vcmp.eq.f32.partialorder %v2899, inf
          %v2909 = vsel %vm2908, %v2899, %v2907
          %vm2910 = vcmp.eq.f32.partialorder %v2899, 0.0
          %v2911 = vand.u32 %v2899, 2147483648
          %v2912 = vsel %vm2910, %v2911, %v2909
          %v2913 = vrsqrt.pop %v2900
          %v2914 = vmul.f32 %v2913, %v2900
          %v2915 = vmul.f32 %v2914, %v2913
          %v2916 = vmul.f32 0.5, %v2915
          %v2917 = vsub.f32 1.5, %v2916
          %v2918 = vmul.f32 %v2913, %v2917
          %v2919 = vmul.f32 %v2900, %v2918
          %vm2920 = vcmp.eq.f32.partialorder %v2900, inf
          %v2921 = vsel %vm2920, %v2900, %v2919
          %vm2922 = vcmp.eq.f32.partialorder %v2900, 0.0
          %v2923 = vand.u32 %v2900, 2147483648
          %v2924 = vsel %vm2922, %v2923, %v2921
          %v2926 = vperm.slane %v2879, 0
          %v2928 = vmul.f32 %v2926, %v2889
          %v2929 = vmul.f32 %v2926, %v2890
          %v2930 = vadd.f32 %v2912, 1e-06
          %v2931 = vadd.f32 %v2924, 1e-06
          %v2932 = vrcp.pop %v2930
          %v2933 = vmul.f32 %v2930, %v2932
          %v2934 = vsub.f32 1.0, %v2933
          %v2935 = vmul.f32 %v2932, %v2934
          %v2936 = vadd.f32 %v2932, %v2935
          %vm2937 = vweird.f32 %v2930
          %vm2938 = vweird.f32 %v2932
          %vm2939 = vmor %vm2937, %vm2938
          %v2940 = vsel %vm2939, %v2932, %v2936
          %v2941 = vand.u32 2147483647, %v2930
          %vm2942 = vcmp.eq.f32.partialorder %v2941, 8.507059e+37
          %v2943 = vand.u32 %v2930, 2147483648
          %v2944 = vor.u32 1.1754944e-38, %v2943
          %v2945 = vsel %vm2942, %v2944, %v2940
          %v2946 = vmul.f32 %v2928, %v2945
          %v2947 = vrcp.pop %v2931
          %v2948 = vmul.f32 %v2931, %v2947
          %v2949 = vsub.f32 1.0, %v2948
          %v2950 = vmul.f32 %v2947, %v2949
          %v2951 = vadd.f32 %v2947, %v2950
          %vm2952 = vweird.f32 %v2931
          %vm2953 = vweird.f32 %v2947
          %vm2954 = vmor %vm2952, %vm2953
          %v2955 = vsel %vm2954, %v2947, %v2951
          %v2956 = vand.u32 2147483647, %v2931
          %vm2957 = vcmp.eq.f32.partialorder %v2956, 8.507059e+37
          %v2958 = vand.u32 %v2931, 2147483648
          %v2959 = vor.u32 1.1754944e-38, %v2958
          %v2960 = vsel %vm2957, %v2959, %v2955
          %v2961 = vmul.f32 %v2929, %v2960
          %v2963 = vperm.slane %v2880, 0
          %v2965 = vadd.f32 %v2946, %v2963
          %v2966 = vadd.f32 %v2961, %v2963
          %v2967 = vsel %vm883, %v2965, 0.0
          %v2968 = vsel %vm883, %v2966, 0.0
          %v2969 = vadd.f32 %v2967, %v2968
          %2970 = vst.msk [vmem:[#allocation3] sm:$0xff] %vm883, %v2969
        $region108: #{tpu_custom_call.1} parent=99 // pred_fallthru
          _
        // Predicated region
        $region109: #{tpu_custom_call.1} parent=99 // pred_check
          %p2971 = pneg %p545
        $region110: #{tpu_custom_call.1} parent=99 // pred_check_branch
          %2973 = sbr.rel (%p2971) target = $region112
        $region111: #{tpu_custom_call.1} parent=99 // pred_region
          %2975 = vsyncadd [#allocation4], 0
          %s2977 = sshll.u32 [#allocation3], 4
          %s2978 = int_to_ptr.vmem [resolvable:$true] %s2977
          %s2979 = sshll.u32 %s20, 4
          %s2980 = int_to_ptr.hbm [resolvable:$true] %s2979
          %2982 = dma.vmem_to_hbm [thread:$0]  %s2978, 128, %s2980, [#allocation4]
        $region112: #{tpu_custom_call.1} parent=99 // pred_fallthru
          _
        // Predicated region
        $region113: #{tpu_custom_call.1} parent=99 // pred_check
          %p2983 = pneg %p545
        $region114: #{tpu_custom_call.1} parent=99 // pred_check_branch
          %2985 = sbr.rel (%p2983) target = $region116
        $region115: #{tpu_custom_call.1} parent=99 // pred_region
          %2987 = dma.done [#allocation4], 128
        $region116: #{tpu_custom_call.1} parent=99 // pred_fallthru
          _
      $region100: #{tpu_custom_call.1} parent=5 // pred_fallthru
        _
      %p2988 = scmp.le.s32.totalorder 2, %s27
      // Predicated region
      $region117: #{tpu_custom_call.1} parent=5 // pred_check
        %p2989 = pneg %p2988
      $region118: #{tpu_custom_call.1} parent=5 // pred_check_branch
        %2991 = sbr.rel (%p2989) target = $region120
      $region119: #{tpu_custom_call.1} parent=5 // pred_region
        %s2992 = ssub.s32 %s27, 2
      $region120: #{tpu_custom_call.1} parent=5 // pred_fallthru
        _
    $region6: #{tpu_custom_call.1} parent=1 // loop_footer
      %s31 = sadd.s32 1, %s27
    $region7: #{tpu_custom_call.1} parent=1 // loop_footer_branch
      %26 = sbr.rel target = $region3
    $region8: #{tpu_custom_call.1} parent=1 // loop_exit
      _
    %2993 = vsyncpa [#allocation4], 1
    %s2994 = scalar_lea.sflag [#allocation4], 1
    %2995 = vsyncpa %s2994, 1

</llo_original>
